<compile_context>
chip_gen: v5e
topology: v5e:2x2
jax: 0.10.0
libtpu: 0.0.40
codegen_flags: <defaults>
</compile_context>

<pallas_src>
import math
import jax
import jax.numpy as jnp
from jax import lax
from jax.experimental import pallas as pl
from jax.experimental.pallas import tpu as pltpu

# ---------------- model hyper-parameters (small, consistent with the module) ----
FEAT_DIM = 32            # dset.feat_dim
EMB_DIM = 32             # args.emb_dim
N_ATTRS = 8              # len(dset.attrs)
N_OBJS = 8               # len(dset.objs)
BATCH = 2
MLP_HID = 768            # MLP(..., layers=[768, 1024]) hidden width
MLP_OUT = 1024           # MLP output width
NUM_HEADS = 4
HEAD_DIM = EMB_DIM // NUM_HEADS
PAIR_N = N_ATTRS + N_OBJS
LN_EPS = 1e-5
CHUNK = 256              # MLP_OUT column chunk (multiple of 128 lanes)
N_CHUNKS = MLP_OUT // CHUNK
APACK_ROWS = 40          # 32 attn_w rows + 1 bias row + 6 LN rows + 1 pad row

assert NUM_HEADS * HEAD_DIM == EMB_DIM       # attn scratch fully covered before read
assert MLP_OUT % CHUNK == 0


# ---------------------------- shared math helper --------------------------------
def _layernorm(x, g, b):
    mu = jnp.mean(x, axis=-1, keepdims=True)
    var = jnp.mean((x - mu) * (x - mu), axis=-1, keepdims=True)
    return (x - mu) * lax.rsqrt(var + LN_EPS) * g + b


# ------------------------------- fused kernel -----------------------------------
def asp_fused_kernel(img_ref, pair_ref, apack_ref, w1_ref, lnb1_ref,
                     w2i_ref, w2a_ref, b2_ref,
                     out_ref,
                     attn_sc, h_img_sc, h_att_sc):
    """grid = (branch b in {attr, obj}, output chunk k).

    Per-branch blocks (indexed by b): w1 [64,768]bf16 (head|comp_proj), lnb1 [6,768],
    w2i/w2a chunk [768,256]bf16, b2 chunk [2,256].  Shared: img, pair_embed, attn pack.
    """
    kchunk = pl.program_id(1)
    E = EMB_DIM
    hd = HEAD_DIM

    # ---- per-branch prologue: attention block + layer-1 hidden activations -----
    @pl.when(kchunk == 0)
    def _prologue():
        ap = apack_ref[...]                           # [40, 160] f32
        aw = ap[0:E, :]                               # [32, 160] = q|k|v|out_proj|linear1
        ab = ap[E:E + 1, :]                           # [1, 160]
        aln = ap[E + 1:E + 7, 0:E]                    # [6, 32]  norm1/2/3 gamma,beta

        x = _layernorm(pair_ref[...], aln[0:1, :], aln[1:2, :])          # norm1(pair)
        qkv = jnp.dot(x, aw[:, 0:3 * E],
                      preferred_element_type=jnp.float32) + ab[:, 0:3 * E]
        q = qkv[:, 0:E]
        kmat = qkv[:, E:2 * E]
        v = qkv[:, 2 * E:3 * E]
        scale = 1.0 / math.sqrt(hd)

        # NUM_HEADS*HEAD_DIM == EMB_DIM (asserted) => every attn_sc column is written
        # before it is read below.
        # TODO(synk): block-diagonal 2-matmul multi-head fusion not applied; the
        #             unrolled 4-head loop sits off the DMA-bound critical path here.
        for h in range(NUM_HEADS):
            sl = slice(h * hd, (h + 1) * hd)
            s = lax.dot_general(q[:, sl] * scale, kmat[:, sl],
                                (((1,), (1,)), ((), ())),
                                preferred_element_type=jnp.float32)      # [16, 16]
            s = s - jnp.max(s, axis=-1, keepdims=True)
            p = jnp.exp(s)
            p = p / jnp.sum(p, axis=-1, keepdims=True)
            attn_sc[:, sl] = jnp.dot(p, v[:, sl],
                                     preferred_element_type=jnp.float32)

        attn = jnp.dot(attn_sc[...], aw[:, 3 * E:4 * E],
                       preferred_element_type=jnp.float32) + ab[:, 3 * E:4 * E]
        y = _layernorm(x + attn, aln[2:3, :], aln[3:4, :])               # norm2
        y2 = jnp.maximum(
            jnp.dot(y, aw[:, 4 * E:5 * E],
                    preferred_element_type=jnp.float32) + ab[:, 4 * E:5 * E], 0.0)
        att = _layernorm(y + y2, aln[4:5, :], aln[5:6, :])               # norm3 [16,32]

        # layer-1 of the branch's two MLPs (Linear -> LayerNorm -> ReLU), cached.
        w1 = w1_ref[0]                                # [64, 768] bf16: head | comp_proj
        lnb = lnb1_ref[0]                             # [6, 768]: b1,g,b (head) | (proj)

        hi = jnp.dot(img_ref[...].astype(jnp.bfloat16), w1[0:FEAT_DIM, :],
                     preferred_element_type=jnp.float32) + lnb[0:1, :]
        hi = jnp.maximum(_layernorm(hi, lnb[1:2, :], lnb[2:3, :]), 0.0)
        h_img_sc[...] = hi.astype(jnp.bfloat16)

        # comp_proj layer-1 on all 16 attention rows (rows are independent; the wrapper
        # selects the attr / obj columns of the branch score) -> no dynamic slicing on b.
        ha = jnp.dot(att.astype(jnp.bfloat16), w1[FEAT_DIM:FEAT_DIM + EMB_DIM, :],
                     preferred_element_type=jnp.float32) + lnb[3:4, :]
        ha = jnp.maximum(_layernorm(ha, lnb[4:5, :], lnb[5:6, :]), 0.0)
        h_att_sc[...] = ha.astype(jnp.bfloat16)

        out_ref[0, :, :] = jnp.zeros(out_ref.shape[1:], out_ref.dtype)

    # ---- layer-2 column chunk + partial score (every chunk step) ----------------
    b2c = b2_ref[0]                                   # [2, CHUNK] f32 (head | proj bias)
    img_c = jnp.maximum(
        jnp.dot(h_img_sc[...], w2i_ref[0],
                preferred_element_type=jnp.float32) + b2c[0:1, :], 0.0)   # [B, CHUNK]
    att_c = jnp.maximum(
        jnp.dot(h_att_sc[...], w2a_ref[0],
                preferred_element_type=jnp.float32) + b2c[1:2, :], 0.0)   # [16, CHUNK]
    out_ref[0, :, :] += lax.dot_general(
        img_c.astype(jnp.bfloat16), att_c.astype(jnp.bfloat16),
        (((1,), (1,)), ((), ())), preferred_element_type=jnp.float32)     # [B, 16]


# ------------------------------- wrappers ----------------------------------------
def _pallas_branch_scores(img, pair_embed, params):
    B = img.shape[0]
    grid_spec = pltpu.PrefetchScalarGridSpec(
        num_scalar_prefetch=0,
        grid=(2, N_CHUNKS),
        in_specs=[
            pl.BlockSpec((B, FEAT_DIM), lambda b, k: (0, 0)),                       # img
            pl.BlockSpec((PAIR_N, EMB_DIM), lambda b, k: (0, 0)),                   # pair_embed
            pl.BlockSpec((APACK_ROWS, 5 * EMB_DIM), lambda b, k: (0, 0)),           # attn pack
            pl.BlockSpec((1, FEAT_DIM + EMB_DIM, MLP_HID), lambda b, k: (b, 0, 0)), # w1
            pl.BlockSpec((1, 6, MLP_HID), lambda b, k: (b, 0, 0)),                  # lnb1
            pl.BlockSpec((1, MLP_HID, CHUNK), lambda b, k: (b, 0, k)),              # head w2 chunk
            pl.BlockSpec((1, MLP_HID, CHUNK), lambda b, k: (b, 0, k)),              # proj w2 chunk
            pl.BlockSpec((1, 2, CHUNK), lambda b, k: (b, 0, k)),                    # b2 chunk
        ],
        out_specs=pl.BlockSpec((1, B, PAIR_N), lambda b, k: (b, 0, 0)),
        scratch_shapes=[
            pltpu.VMEM((PAIR_N, EMB_DIM), jnp.float32),     # attention head outputs
            pltpu.VMEM((B, MLP_HID), jnp.bfloat16),         # head MLP layer-1 activations
            pltpu.VMEM((PAIR_N, MLP_HID), jnp.bfloat16),    # comp_proj layer-1 activations
        ],
    )
    return pl.pallas_call(
        asp_fused_kernel,
        out_shape=jax.ShapeDtypeStruct((2, B, PAIR_N), jnp.float32),
        grid_spec=grid_spec,
        compiler_params=pltpu.CompilerParams(
            dimension_semantics=("parallel", "arbitrary"),
            vmem_limit_bytes=32 * 1024 * 1024),
    )(img, pair_embed, params["attn_pack"], params["w1"], params["lnb1"],
      params["w2_img"], params["w2_att"], params["b2"])


@jax.jit
def _asp_score(img, params):
    # compose(): attr/obj ids are arange -> full embedding tables; concat is glue.
    pair_embed = jnp.concatenate(
        [params["attr_embedder"], params["obj_embedder"]], axis=0)        # [16, E]
    bs = _pallas_branch_scores(img, pair_embed, params)                   # [2, B, 16]
    sa = bs[0, :, 0:N_ATTRS]          # attr branch uses attention rows 0:8
    so = bs[1, :, N_ATTRS:PAIR_N]     # obj branch uses attention rows 8:16
    # score[b, a*N_OBJS + o] = sa[b, a] * so[b, o]   (torch.bmm + view)
    return (sa[:, :, None] * so[:, None, :]).reshape(img.shape[0], N_ATTRS * N_OBJS)


def asp_forward(img, params):
    score = _asp_score(img, params)
    scores = {(a, o): score[:, o + a * N_OBJS]
              for a in range(N_ATTRS) for o in range(N_OBJS)}
    return score, scores


# ----------------------------- parameter setup -----------------------------------
def _mlp_param_set(key, d_in):
    """MLP(d_in, 1024, 2, relu=True, norm=True, layers=[768,1024]) parameters."""
    k1, k2, k3, k4, k5, k6 = jax.random.split(key, 6)
    w1 = (0.05 * jax.random.normal(k1, (d_in, MLP_HID), jnp.float32)).astype(jnp.bfloat16)
    lnb = jnp.stack([
        0.01 * jax.random.normal(k3, (MLP_HID,), jnp.float32),            # linear1 bias
        1.0 + 0.01 * jax.random.normal(k4, (MLP_HID,), jnp.float32),      # LN gamma
        0.01 * jax.random.normal(k5, (MLP_HID,), jnp.float32),            # LN beta
    ], axis=0)
    w2 = (0.05 * jax.random.normal(k2, (MLP_HID, MLP_OUT), jnp.float32)).astype(jnp.bfloat16)
    b2 = 0.01 * jax.random.normal(k6, (1, MLP_OUT), jnp.float32)
    return w1, lnb, w2, b2


def init_asp_params(key):
    ks = jax.random.split(key, 8)
    attr_head = _mlp_param_set(ks[0], FEAT_DIM)
    obj_head = _mlp_param_set(ks[1], FEAT_DIM)
    attr_proj = _mlp_param_set(ks[2], EMB_DIM)
    obj_proj = _mlp_param_set(ks[3], EMB_DIM)

    def pack_branch(head, proj):
        hw1, hln, hw2, hb2 = head
        pw1, pln, pw2, pb2 = proj
        w1 = jnp.concatenate([hw1, pw1], axis=0)          # [64, 768]  bf16
        lnb1 = jnp.concatenate([hln, pln], axis=0)        # [6, 768]   f32
        b2 = jnp.concatenate([hb2, pb2], axis=0)          # [2, 1024]  f32
        return w1, lnb1, hw2, pw2, b2

    b0 = pack_branch(attr_head, attr_proj)                # branch 0 = attr
    b1 = pack_branch(obj_head, obj_proj)                  # branch 1 = obj
    w1 = jnp.stack([b0[0], b1[0]], axis=0)
    lnb1 = jnp.stack([b0[1], b1[1]], axis=0)
    w2_img = jnp.stack([b0[2], b1[2]], axis=0)
    w2_att = jnp.stack([b0[3], b1[3]], axis=0)
    b2 = jnp.stack([b0[4], b1[4]], axis=0)

    # attention block params packed into one [40, 5E] array: w | bias | LN rows | pad
    kq, kk, kv, ko, kl, kb = jax.random.split(ks[4], 6)

    def lin(k):
        return 0.1 * jax.random.normal(k, (EMB_DIM, EMB_DIM), jnp.float32)

    attn_w = jnp.concatenate([lin(kq), lin(kk), lin(kv), lin(ko), lin(kl)], axis=1)
    attn_b = 0.01 * jax.random.normal(kb, (1, 5 * EMB_DIM), jnp.float32)
    kg = jax.random.split(ks[5], 6)
    attn_ln = jnp.stack([
        1.0 + 0.01 * jax.random.normal(kg[0], (EMB_DIM,), jnp.float32),   # norm1 gamma
        0.01 * jax.random.normal(kg[1], (EMB_DIM,), jnp.float32),         # norm1 beta
        1.0 + 0.01 * jax.random.normal(kg[2], (EMB_DIM,), jnp.float32),   # norm2 gamma
        0.01 * jax.random.normal(kg[3], (EMB_DIM,), jnp.float32),         # norm2 beta
        1.0 + 0.01 * jax.random.normal(kg[4], (EMB_DIM,), jnp.float32),   # norm3 gamma
        0.01 * jax.random.normal(kg[5], (EMB_DIM,), jnp.float32),         # norm3 beta
    ], axis=0)
    tail = jnp.zeros((APACK_ROWS - EMB_DIM - 1, 5 * EMB_DIM), jnp.float32)
    tail = tail.at[0:6, 0:EMB_DIM].set(attn_ln)
    attn_pack = jnp.concatenate([attn_w, attn_b, tail], axis=0)           # [40, 160]

    attr_embedder = 0.1 * jax.random.normal(ks[6], (N_ATTRS, EMB_DIM), jnp.float32)
    obj_embedder = 0.1 * jax.random.normal(ks[7], (N_OBJS, EMB_DIM), jnp.float32)

    return dict(w1=w1, lnb1=lnb1, w2_img=w2_img, w2_att=w2_att, b2=b2,
                attn_pack=attn_pack,
                attr_embedder=attr_embedder, obj_embedder=obj_embedder)


# --------------------------- pure-JAX reference -----------------------------------
def asp_reference(img, params):
    E, hd = EMB_DIM, HEAD_DIM
    ap = params["attn_pack"]
    aw = ap[0:E, :]
    ab = ap[E:E + 1, :]
    aln = ap[E + 1:E + 7, 0:E]

    def mlp(x, w1, lnb, w2, b2):
        h = jnp.dot(x.astype(jnp.bfloat16), w1,
                    preferred_element_type=jnp.float32) + lnb[0:1, :]
        h = _layernorm(h, lnb[1:2, :], lnb[2:3, :])
        h = jnp.maximum(h, 0.0)
        y = jnp.dot(h.astype(jnp.bfloat16), w2,
                    preferred_element_type=jnp.float32) + b2
        return jnp.maximum(y, 0.0)

    pair = jnp.concatenate([params["attr_embedder"], params["obj_embedder"]], axis=0)
    x = _layernorm(pair, aln[0:1, :], aln[1:2, :])
    qkv = jnp.dot(x, aw[:, 0:3 * E]) + ab[:, 0:3 * E]
    q, k, v = qkv[:, 0:E], qkv[:, E:2 * E], qkv[:, 2 * E:3 * E]
    outs = []
    for h in range(NUM_HEADS):
        sl = slice(h * hd, (h + 1) * hd)
        s = jnp.dot(q[:, sl] / math.sqrt(hd), k[:, sl].T)
        outs.append(jnp.dot(jax.nn.softmax(s, axis=-1), v[:, sl]))
    attn = jnp.dot(jnp.concatenate(outs, axis=-1), aw[:, 3 * E:4 * E]) + ab[:, 3 * E:4 * E]
    y = _layernorm(x + attn, aln[2:3, :], aln[3:4, :])
    y2 = jnp.maximum(jnp.dot(y, aw[:, 4 * E:5 * E]) + ab[:, 4 * E:5 * E], 0.0)
    att = _layernorm(y + y2, aln[4:5, :], aln[5:6, :])

    def branch(bidx, att_rows):
        w1 = params["w1"][bidx]
        lnb = params["lnb1"][bidx]
        img_feats = mlp(img, w1[0:FEAT_DIM], lnb[0:3],
                        params["w2_img"][bidx], params["b2"][bidx, 0:1])
        att_feats = mlp(att_rows, w1[FEAT_DIM:FEAT_DIM + EMB_DIM], lnb[3:6],
                        params["w2_att"][bidx], params["b2"][bidx, 1:2])
        return img_feats, att_feats

    attr_img, attr_att = branch(0, att[0:N_ATTRS])
    obj_img, obj_att = branch(1, att[N_ATTRS:PAIR_N])
    sa = jnp.dot(attr_img.astype(jnp.bfloat16), attr_att.astype(jnp.bfloat16).T,
                 preferred_element_type=jnp.float32)
    so = jnp.dot(obj_img.astype(jnp.bfloat16), obj_att.astype(jnp.bfloat16).T,
                 preferred_element_type=jnp.float32)
    return (sa[:, :, None] * so[:, None, :]).reshape(img.shape[0], -1)


# ----------------------------------- main ------------------------------------------
if __name__ == "__main__":
    key = jax.random.PRNGKey(0)
    kp, kx = jax.random.split(key)
    params = init_asp_params(kp)
    img = jax.random.normal(kx, (BATCH, FEAT_DIM), jnp.float32)

    score, scores = asp_forward(img, params)
    score = jax.block_until_ready(score)

    assert score.shape == (BATCH, N_ATTRS * N_OBJS)
    assert bool(jnp.all(jnp.isfinite(score)))
    assert len(scores) == N_ATTRS * N_OBJS

    ref = asp_reference(img, params)
    rel_err = float(jnp.max(jnp.abs(score - ref)) / (jnp.max(jnp.abs(ref)) + 1e-6))
    assert rel_err < 5e-2, f"kernel/reference mismatch: rel_err={rel_err}"

    print("KERNEL_OK")
</pallas_src>

<mosaic_0001>
module attributes {stable_mosaic.version = 11 : i64} {
  func.func @asp_fused_kernel(%arg0: i32, %arg1: i32, %arg2: memref<2x32xf32, #tpu.memory_space<vmem>>, %arg3: memref<16x32xf32, #tpu.memory_space<vmem>>, %arg4: memref<40x160xf32, #tpu.memory_space<vmem>>, %arg5: memref<1x64x768xbf16, #tpu.memory_space<vmem>>, %arg6: memref<1x6x768xf32, #tpu.memory_space<vmem>>, %arg7: memref<1x768x256xbf16, #tpu.memory_space<vmem>>, %arg8: memref<1x768x256xbf16, #tpu.memory_space<vmem>>, %arg9: memref<1x2x256xf32, #tpu.memory_space<vmem>>, %arg10: memref<1x2x16xf32, #tpu.memory_space<vmem>>, %arg11: memref<16x32xf32, #tpu.memory_space<vmem>>, %arg12: memref<2x768xbf16, #tpu.memory_space<vmem>>, %arg13: memref<16x768xbf16, #tpu.memory_space<vmem>>) attributes {dimension_semantics = [#tpu.dimension_semantics<parallel>, #tpu.dimension_semantics<arbitrary>], iteration_bounds = array<i64: 2, 4>, scalar_prefetch = 0 : i64, scratch_operands = 3 : i64, tpu.core_type = #tpu.core_type<tc>, window_params = [{pipeline_mode = #tpu.pipeline_mode<synchronous>, transform_indices = @transform_0, window_bounds = array<i64: 2, 32>}, {pipeline_mode = #tpu.pipeline_mode<synchronous>, transform_indices = @transform_1, window_bounds = array<i64: 16, 32>}, {pipeline_mode = #tpu.pipeline_mode<synchronous>, transform_indices = @transform_2, window_bounds = array<i64: 40, 160>}, {transform_indices = @transform_3, window_bounds = array<i64: 1, 64, 768>}, {transform_indices = @transform_4, window_bounds = array<i64: 1, 6, 768>}, {transform_indices = @transform_5, window_bounds = array<i64: 1, 768, 256>}, {transform_indices = @transform_6, window_bounds = array<i64: 1, 768, 256>}, {transform_indices = @transform_7, window_bounds = array<i64: 1, 2, 256>}, {transform_indices = @transform_8, window_bounds = array<i64: 1, 2, 16>}]} {
    %c0_i32 = arith.constant 0 : i32
    %0 = arith.cmpi eq, %arg1, %c0_i32 : i32
    %1 = arith.extui %0 : i1 to i32
    %c0_i32_0 = arith.constant 0 : i32
    %2 = arith.cmpi ne, %1, %c0_i32_0 : i32
    scf.if %2 {
      %c0_23 = arith.constant 0 : index
      %c0_24 = arith.constant 0 : index
      %32 = vector.load %arg4[%c0_23, %c0_24] : memref<40x160xf32, #tpu.memory_space<vmem>>, vector<40x160xf32>
      %33 = vector.extract_strided_slice %32 {offsets = [0, 0], sizes = [32, 160], strides = [1, 1]} : vector<40x160xf32> to vector<32x160xf32>
      %34 = vector.extract_strided_slice %32 {offsets = [32, 0], sizes = [1, 160], strides = [1, 1]} : vector<40x160xf32> to vector<1x160xf32>
      %35 = vector.extract_strided_slice %32 {offsets = [33, 0], sizes = [6, 32], strides = [1, 1]} : vector<40x160xf32> to vector<6x32xf32>
      %c0_25 = arith.constant 0 : index
      %c0_26 = arith.constant 0 : index
      %36 = vector.load %arg3[%c0_25, %c0_26] : memref<16x32xf32, #tpu.memory_space<vmem>>, vector<16x32xf32>
      %37 = vector.extract_strided_slice %35 {offsets = [0, 0], sizes = [1, 32], strides = [1, 1]} : vector<6x32xf32> to vector<1x32xf32>
      %38 = vector.extract_strided_slice %35 {offsets = [1, 0], sizes = [1, 32], strides = [1, 1]} : vector<6x32xf32> to vector<1x32xf32>
      %cst_27 = arith.constant dense<0.000000e+00> : vector<16xf32>
      %39 = vector.multi_reduction <add>, %36, %cst_27 [1] : vector<16x32xf32> to vector<16xf32>
      %40 = vector.shape_cast %39 : vector<16xf32> to vector<16x1xf32>
      %cst_28 = arith.constant 3.200000e+01 : f32
      %41 = vector.broadcast %cst_28 : f32 to vector<16x1xf32>
      %42 = arith.divf %40, %41 : vector<16x1xf32>
      %43 = vector.broadcast %42 : vector<16x1xf32> to vector<16x32xf32>
      %44 = arith.subf %36, %43 : vector<16x32xf32>
      %45 = vector.broadcast %42 : vector<16x1xf32> to vector<16x32xf32>
      %46 = arith.subf %36, %45 : vector<16x32xf32>
      %47 = arith.mulf %44, %46 : vector<16x32xf32>
      %cst_29 = arith.constant dense<0.000000e+00> : vector<16xf32>
      %48 = vector.multi_reduction <add>, %47, %cst_29 [1] : vector<16x32xf32> to vector<16xf32>
      %49 = vector.shape_cast %48 : vector<16xf32> to vector<16x1xf32>
      %cst_30 = arith.constant 3.200000e+01 : f32
      %50 = vector.broadcast %cst_30 : f32 to vector<16x1xf32>
      %51 = arith.divf %49, %50 : vector<16x1xf32>
      %52 = vector.broadcast %42 : vector<16x1xf32> to vector<16x32xf32>
      %53 = arith.subf %36, %52 : vector<16x32xf32>
      %cst_31 = arith.constant 9.99999974E-6 : f32
      %54 = vector.broadcast %cst_31 : f32 to vector<16x1xf32>
      %55 = arith.addf %51, %54 : vector<16x1xf32>
      %56 = math.rsqrt %55 : vector<16x1xf32>
      %57 = vector.broadcast %56 : vector<16x1xf32> to vector<16x32xf32>
      %58 = arith.mulf %53, %57 : vector<16x32xf32>
      %59 = vector.broadcast %37 : vector<1x32xf32> to vector<16x32xf32>
      %60 = arith.mulf %58, %59 : vector<16x32xf32>
      %61 = vector.broadcast %38 : vector<1x32xf32> to vector<16x32xf32>
      %62 = arith.addf %60, %61 : vector<16x32xf32>
      %63 = vector.extract_strided_slice %33 {offsets = [0, 0], sizes = [32, 96], strides = [1, 1]} : vector<32x160xf32> to vector<32x96xf32>
      %cst_32 = arith.constant dense<0.000000e+00> : vector<16x96xf32>
      %64 = tpu.matmul %62, %63, %cst_32 {dimension_numbers = #tpu.dot_dimension_numbers<[1], [0], [0], [1], [0, 0, 1, 1], [], []>} : vector<16x32xf32>, vector<32x96xf32>, vector<16x96xf32> -> vector<16x96xf32>
      %65 = vector.extract_strided_slice %34 {offsets = [0, 0], sizes = [1, 96], strides = [1, 1]} : vector<1x160xf32> to vector<1x96xf32>
      %66 = vector.broadcast %65 : vector<1x96xf32> to vector<16x96xf32>
      %67 = arith.addf %64, %66 : vector<16x96xf32>
      %68 = vector.extract_strided_slice %67 {offsets = [0, 0], sizes = [16, 32], strides = [1, 1]} : vector<16x96xf32> to vector<16x32xf32>
      %69 = vector.extract_strided_slice %67 {offsets = [0, 32], sizes = [16, 32], strides = [1, 1]} : vector<16x96xf32> to vector<16x32xf32>
      %70 = vector.extract_strided_slice %67 {offsets = [0, 64], sizes = [16, 32], strides = [1, 1]} : vector<16x96xf32> to vector<16x32xf32>
      %71 = vector.extract_strided_slice %68 {offsets = [0, 0], sizes = [16, 8], strides = [1, 1]} : vector<16x32xf32> to vector<16x8xf32>
      %cst_33 = arith.constant 0.353553385 : f32
      %72 = vector.broadcast %cst_33 : f32 to vector<16x8xf32>
      %73 = arith.mulf %71, %72 : vector<16x8xf32>
      %74 = vector.extract_strided_slice %69 {offsets = [0, 0], sizes = [16, 8], strides = [1, 1]} : vector<16x32xf32> to vector<16x8xf32>
      %cst_34 = arith.constant dense<0.000000e+00> : vector<16x16xf32>
      %75 = tpu.matmul %73, %74, %cst_34 {dimension_numbers = #tpu.dot_dimension_numbers<[1], [1], [0], [0], [0, 0, 1, 0], [], []>} : vector<16x8xf32>, vector<16x8xf32>, vector<16x16xf32> -> vector<16x16xf32>
      %cst_35 = arith.constant dense<0xFF800000> : vector<16xf32>
      %76 = vector.multi_reduction <maximumf>, %75, %cst_35 [1] : vector<16x16xf32> to vector<16xf32>
      %77 = vector.shape_cast %76 : vector<16xf32> to vector<16x1xf32>
      %78 = vector.broadcast %77 : vector<16x1xf32> to vector<16x16xf32>
      %79 = arith.subf %75, %78 : vector<16x16xf32>
      %80 = math.exp %79 : vector<16x16xf32>
      %cst_36 = arith.constant dense<0.000000e+00> : vector<16xf32>
      %81 = vector.multi_reduction <add>, %80, %cst_36 [1] : vector<16x16xf32> to vector<16xf32>
      %82 = vector.shape_cast %81 : vector<16xf32> to vector<16x1xf32>
      %83 = vector.broadcast %82 : vector<16x1xf32> to vector<16x16xf32>
      %84 = arith.divf %80, %83 : vector<16x16xf32>
      %85 = vector.extract_strided_slice %70 {offsets = [0, 0], sizes = [16, 8], strides = [1, 1]} : vector<16x32xf32> to vector<16x8xf32>
      %cst_37 = arith.constant dense<0.000000e+00> : vector<16x8xf32>
      %86 = tpu.matmul %84, %85, %cst_37 {dimension_numbers = #tpu.dot_dimension_numbers<[1], [0], [0], [1], [0, 0, 1, 1], [], []>} : vector<16x16xf32>, vector<16x8xf32>, vector<16x8xf32> -> vector<16x8xf32>
      %c0_38 = arith.constant 0 : index
      %c0_39 = arith.constant 0 : index
      %87 = vector.load %arg11[%c0_38, %c0_39] : memref<16x32xf32, #tpu.memory_space<vmem>>, vector<16x8xf32>
      tpu.vector_store %arg11[%c0_38, %c0_39], %86 {strides = array<i32>} : memref<16x32xf32, #tpu.memory_space<vmem>>, vector<16x8xf32>,
      %88 = vector.extract_strided_slice %68 {offsets = [0, 8], sizes = [16, 8], strides = [1, 1]} : vector<16x32xf32> to vector<16x8xf32>
      %cst_40 = arith.constant 0.353553385 : f32
      %89 = vector.broadcast %cst_40 : f32 to vector<16x8xf32>
      %90 = arith.mulf %88, %89 : vector<16x8xf32>
      %91 = vector.extract_strided_slice %69 {offsets = [0, 8], sizes = [16, 8], strides = [1, 1]} : vector<16x32xf32> to vector<16x8xf32>
      %cst_41 = arith.constant dense<0.000000e+00> : vector<16x16xf32>
      %92 = tpu.matmul %90, %91, %cst_41 {dimension_numbers = #tpu.dot_dimension_numbers<[1], [1], [0], [0], [0, 0, 1, 0], [], []>} : vector<16x8xf32>, vector<16x8xf32>, vector<16x16xf32> -> vector<16x16xf32>
      %cst_42 = arith.constant dense<0xFF800000> : vector<16xf32>
      %93 = vector.multi_reduction <maximumf>, %92, %cst_42 [1] : vector<16x16xf32> to vector<16xf32>
      %94 = vector.shape_cast %93 : vector<16xf32> to vector<16x1xf32>
      %95 = vector.broadcast %94 : vector<16x1xf32> to vector<16x16xf32>
      %96 = arith.subf %92, %95 : vector<16x16xf32>
      %97 = math.exp %96 : vector<16x16xf32>
      %cst_43 = arith.constant dense<0.000000e+00> : vector<16xf32>
      %98 = vector.multi_reduction <add>, %97, %cst_43 [1] : vector<16x16xf32> to vector<16xf32>
      %99 = vector.shape_cast %98 : vector<16xf32> to vector<16x1xf32>
      %100 = vector.broadcast %99 : vector<16x1xf32> to vector<16x16xf32>
      %101 = arith.divf %97, %100 : vector<16x16xf32>
      %102 = vector.extract_strided_slice %70 {offsets = [0, 8], sizes = [16, 8], strides = [1, 1]} : vector<16x32xf32> to vector<16x8xf32>
      %cst_44 = arith.constant dense<0.000000e+00> : vector<16x8xf32>
      %103 = tpu.matmul %101, %102, %cst_44 {dimension_numbers = #tpu.dot_dimension_numbers<[1], [0], [0], [1], [0, 0, 1, 1], [], []>} : vector<16x16xf32>, vector<16x8xf32>, vector<16x8xf32> -> vector<16x8xf32>
      %c0_45 = arith.constant 0 : index
      %c8 = arith.constant 8 : index
      %104 = vector.load %arg11[%c0_45, %c8] : memref<16x32xf32, #tpu.memory_space<vmem>>, vector<16x8xf32>
      tpu.vector_store %arg11[%c0_45, %c8], %103 {strides = array<i32>} : memref<16x32xf32, #tpu.memory_space<vmem>>, vector<16x8xf32>,
      %105 = vector.extract_strided_slice %68 {offsets = [0, 16], sizes = [16, 8], strides = [1, 1]} : vector<16x32xf32> to vector<16x8xf32>
      %cst_46 = arith.constant 0.353553385 : f32
      %106 = vector.broadcast %cst_46 : f32 to vector<16x8xf32>
      %107 = arith.mulf %105, %106 : vector<16x8xf32>
      %108 = vector.extract_strided_slice %69 {offsets = [0, 16], sizes = [16, 8], strides = [1, 1]} : vector<16x32xf32> to vector<16x8xf32>
      %cst_47 = arith.constant dense<0.000000e+00> : vector<16x16xf32>
      %109 = tpu.matmul %107, %108, %cst_47 {dimension_numbers = #tpu.dot_dimension_numbers<[1], [1], [0], [0], [0, 0, 1, 0], [], []>} : vector<16x8xf32>, vector<16x8xf32>, vector<16x16xf32> -> vector<16x16xf32>
      %cst_48 = arith.constant dense<0xFF800000> : vector<16xf32>
      %110 = vector.multi_reduction <maximumf>, %109, %cst_48 [1] : vector<16x16xf32> to vector<16xf32>
      %111 = vector.shape_cast %110 : vector<16xf32> to vector<16x1xf32>
      %112 = vector.broadcast %111 : vector<16x1xf32> to vector<16x16xf32>
      %113 = arith.subf %109, %112 : vector<16x16xf32>
      %114 = math.exp %113 : vector<16x16xf32>
      %cst_49 = arith.constant dense<0.000000e+00> : vector<16xf32>
      %115 = vector.multi_reduction <add>, %114, %cst_49 [1] : vector<16x16xf32> to vector<16xf32>
      %116 = vector.shape_cast %115 : vector<16xf32> to vector<16x1xf32>
      %117 = vector.broadcast %116 : vector<16x1xf32> to vector<16x16xf32>
      %118 = arith.divf %114, %117 : vector<16x16xf32>
      %119 = vector.extract_strided_slice %70 {offsets = [0, 16], sizes = [16, 8], strides = [1, 1]} : vector<16x32xf32> to vector<16x8xf32>
      %cst_50 = arith.constant dense<0.000000e+00> : vector<16x8xf32>
      %120 = tpu.matmul %118, %119, %cst_50 {dimension_numbers = #tpu.dot_dimension_numbers<[1], [0], [0], [1], [0, 0, 1, 1], [], []>} : vector<16x16xf32>, vector<16x8xf32>, vector<16x8xf32> -> vector<16x8xf32>
      %c0_51 = arith.constant 0 : index
      %c16 = arith.constant 16 : index
      %121 = vector.load %arg11[%c0_51, %c16] : memref<16x32xf32, #tpu.memory_space<vmem>>, vector<16x8xf32>
      tpu.vector_store %arg11[%c0_51, %c16], %120 {strides = array<i32>} : memref<16x32xf32, #tpu.memory_space<vmem>>, vector<16x8xf32>,
      %122 = vector.extract_strided_slice %68 {offsets = [0, 24], sizes = [16, 8], strides = [1, 1]} : vector<16x32xf32> to vector<16x8xf32>
      %cst_52 = arith.constant 0.353553385 : f32
      %123 = vector.broadcast %cst_52 : f32 to vector<16x8xf32>
      %124 = arith.mulf %122, %123 : vector<16x8xf32>
      %125 = vector.extract_strided_slice %69 {offsets = [0, 24], sizes = [16, 8], strides = [1, 1]} : vector<16x32xf32> to vector<16x8xf32>
      %cst_53 = arith.constant dense<0.000000e+00> : vector<16x16xf32>
      %126 = tpu.matmul %124, %125, %cst_53 {dimension_numbers = #tpu.dot_dimension_numbers<[1], [1], [0], [0], [0, 0, 1, 0], [], []>} : vector<16x8xf32>, vector<16x8xf32>, vector<16x16xf32> -> vector<16x16xf32>
      %cst_54 = arith.constant dense<0xFF800000> : vector<16xf32>
      %127 = vector.multi_reduction <maximumf>, %126, %cst_54 [1] : vector<16x16xf32> to vector<16xf32>
      %128 = vector.shape_cast %127 : vector<16xf32> to vector<16x1xf32>
      %129 = vector.broadcast %128 : vector<16x1xf32> to vector<16x16xf32>
      %130 = arith.subf %126, %129 : vector<16x16xf32>
      %131 = math.exp %130 : vector<16x16xf32>
      %cst_55 = arith.constant dense<0.000000e+00> : vector<16xf32>
      %132 = vector.multi_reduction <add>, %131, %cst_55 [1] : vector<16x16xf32> to vector<16xf32>
      %133 = vector.shape_cast %132 : vector<16xf32> to vector<16x1xf32>
      %134 = vector.broadcast %133 : vector<16x1xf32> to vector<16x16xf32>
      %135 = arith.divf %131, %134 : vector<16x16xf32>
      %136 = vector.extract_strided_slice %70 {offsets = [0, 24], sizes = [16, 8], strides = [1, 1]} : vector<16x32xf32> to vector<16x8xf32>
      %cst_56 = arith.constant dense<0.000000e+00> : vector<16x8xf32>
      %137 = tpu.matmul %135, %136, %cst_56 {dimension_numbers = #tpu.dot_dimension_numbers<[1], [0], [0], [1], [0, 0, 1, 1], [], []>} : vector<16x16xf32>, vector<16x8xf32>, vector<16x8xf32> -> vector<16x8xf32>
      %c0_57 = arith.constant 0 : index
      %c24 = arith.constant 24 : index
      %138 = vector.load %arg11[%c0_57, %c24] : memref<16x32xf32, #tpu.memory_space<vmem>>, vector<16x8xf32>
      tpu.vector_store %arg11[%c0_57, %c24], %137 {strides = array<i32>} : memref<16x32xf32, #tpu.memory_space<vmem>>, vector<16x8xf32>,
      %c0_58 = arith.constant 0 : index
      %c0_59 = arith.constant 0 : index
      %139 = vector.load %arg11[%c0_58, %c0_59] : memref<16x32xf32, #tpu.memory_space<vmem>>, vector<16x32xf32>
      %140 = vector.extract_strided_slice %33 {offsets = [0, 96], sizes = [32, 32], strides = [1, 1]} : vector<32x160xf32> to vector<32x32xf32>
      %cst_60 = arith.constant dense<0.000000e+00> : vector<16x32xf32>
      %141 = tpu.matmul %139, %140, %cst_60 {dimension_numbers = #tpu.dot_dimension_numbers<[1], [0], [0], [1], [0, 0, 1, 1], [], []>} : vector<16x32xf32>, vector<32x32xf32>, vector<16x32xf32> -> vector<16x32xf32>
      %142 = vector.extract_strided_slice %34 {offsets = [0, 96], sizes = [1, 32], strides = [1, 1]} : vector<1x160xf32> to vector<1x32xf32>
      %143 = vector.broadcast %142 : vector<1x32xf32> to vector<16x32xf32>
      %144 = arith.addf %141, %143 : vector<16x32xf32>
      %145 = arith.addf %62, %144 : vector<16x32xf32>
      %146 = vector.extract_strided_slice %35 {offsets = [2, 0], sizes = [1, 32], strides = [1, 1]} : vector<6x32xf32> to vector<1x32xf32>
      %147 = vector.extract_strided_slice %35 {offsets = [3, 0], sizes = [1, 32], strides = [1, 1]} : vector<6x32xf32> to vector<1x32xf32>
      %cst_61 = arith.constant dense<0.000000e+00> : vector<16xf32>
      %148 = vector.multi_reduction <add>, %145, %cst_61 [1] : vector<16x32xf32> to vector<16xf32>
      %149 = vector.shape_cast %148 : vector<16xf32> to vector<16x1xf32>
      %cst_62 = arith.constant 3.200000e+01 : f32
      %150 = vector.broadcast %cst_62 : f32 to vector<16x1xf32>
      %151 = arith.divf %149, %150 : vector<16x1xf32>
      %152 = vector.broadcast %151 : vector<16x1xf32> to vector<16x32xf32>
      %153 = arith.subf %145, %152 : vector<16x32xf32>
      %154 = vector.broadcast %151 : vector<16x1xf32> to vector<16x32xf32>
      %155 = arith.subf %145, %154 : vector<16x32xf32>
      %156 = arith.mulf %153, %155 : vector<16x32xf32>
      %cst_63 = arith.constant dense<0.000000e+00> : vector<16xf32>
      %157 = vector.multi_reduction <add>, %156, %cst_63 [1] : vector<16x32xf32> to vector<16xf32>
      %158 = vector.shape_cast %157 : vector<16xf32> to vector<16x1xf32>
      %cst_64 = arith.constant 3.200000e+01 : f32
      %159 = vector.broadcast %cst_64 : f32 to vector<16x1xf32>
      %160 = arith.divf %158, %159 : vector<16x1xf32>
      %161 = vector.broadcast %151 : vector<16x1xf32> to vector<16x32xf32>
      %162 = arith.subf %145, %161 : vector<16x32xf32>
      %cst_65 = arith.constant 9.99999974E-6 : f32
      %163 = vector.broadcast %cst_65 : f32 to vector<16x1xf32>
      %164 = arith.addf %160, %163 : vector<16x1xf32>
      %165 = math.rsqrt %164 : vector<16x1xf32>
      %166 = vector.broadcast %165 : vector<16x1xf32> to vector<16x32xf32>
      %167 = arith.mulf %162, %166 : vector<16x32xf32>
      %168 = vector.broadcast %146 : vector<1x32xf32> to vector<16x32xf32>
      %169 = arith.mulf %167, %168 : vector<16x32xf32>
      %170 = vector.broadcast %147 : vector<1x32xf32> to vector<16x32xf32>
      %171 = arith.addf %169, %170 : vector<16x32xf32>
      %172 = vector.extract_strided_slice %33 {offsets = [0, 128], sizes = [32, 32], strides = [1, 1]} : vector<32x160xf32> to vector<32x32xf32>
      %cst_66 = arith.constant dense<0.000000e+00> : vector<16x32xf32>
      %173 = tpu.matmul %171, %172, %cst_66 {dimension_numbers = #tpu.dot_dimension_numbers<[1], [0], [0], [1], [0, 0, 1, 1], [], []>} : vector<16x32xf32>, vector<32x32xf32>, vector<16x32xf32> -> vector<16x32xf32>
      %174 = vector.extract_strided_slice %34 {offsets = [0, 128], sizes = [1, 32], strides = [1, 1]} : vector<1x160xf32> to vector<1x32xf32>
      %175 = vector.broadcast %174 : vector<1x32xf32> to vector<16x32xf32>
      %176 = arith.addf %173, %175 : vector<16x32xf32>
      %cst_67 = arith.constant 0.000000e+00 : f32
      %177 = vector.broadcast %cst_67 : f32 to vector<16x32xf32>
      %178 = arith.maximumf %176, %177 : vector<16x32xf32>
      %179 = arith.addf %171, %178 : vector<16x32xf32>
      %180 = vector.extract_strided_slice %35 {offsets = [4, 0], sizes = [1, 32], strides = [1, 1]} : vector<6x32xf32> to vector<1x32xf32>
      %181 = vector.extract_strided_slice %35 {offsets = [5, 0], sizes = [1, 32], strides = [1, 1]} : vector<6x32xf32> to vector<1x32xf32>
      %cst_68 = arith.constant dense<0.000000e+00> : vector<16xf32>
      %182 = vector.multi_reduction <add>, %179, %cst_68 [1] : vector<16x32xf32> to vector<16xf32>
      %183 = vector.shape_cast %182 : vector<16xf32> to vector<16x1xf32>
      %cst_69 = arith.constant 3.200000e+01 : f32
      %184 = vector.broadcast %cst_69 : f32 to vector<16x1xf32>
      %185 = arith.divf %183, %184 : vector<16x1xf32>
      %186 = vector.broadcast %185 : vector<16x1xf32> to vector<16x32xf32>
      %187 = arith.subf %179, %186 : vector<16x32xf32>
      %188 = vector.broadcast %185 : vector<16x1xf32> to vector<16x32xf32>
      %189 = arith.subf %179, %188 : vector<16x32xf32>
      %190 = arith.mulf %187, %189 : vector<16x32xf32>
      %cst_70 = arith.constant dense<0.000000e+00> : vector<16xf32>
      %191 = vector.multi_reduction <add>, %190, %cst_70 [1] : vector<16x32xf32> to vector<16xf32>
      %192 = vector.shape_cast %191 : vector<16xf32> to vector<16x1xf32>
      %cst_71 = arith.constant 3.200000e+01 : f32
      %193 = vector.broadcast %cst_71 : f32 to vector<16x1xf32>
      %194 = arith.divf %192, %193 : vector<16x1xf32>
      %195 = vector.broadcast %185 : vector<16x1xf32> to vector<16x32xf32>
      %196 = arith.subf %179, %195 : vector<16x32xf32>
      %cst_72 = arith.constant 9.99999974E-6 : f32
      %197 = vector.broadcast %cst_72 : f32 to vector<16x1xf32>
      %198 = arith.addf %194, %197 : vector<16x1xf32>
      %199 = math.rsqrt %198 : vector<16x1xf32>
      %200 = vector.broadcast %199 : vector<16x1xf32> to vector<16x32xf32>
      %201 = arith.mulf %196, %200 : vector<16x32xf32>
      %202 = vector.broadcast %180 : vector<1x32xf32> to vector<16x32xf32>
      %203 = arith.mulf %201, %202 : vector<16x32xf32>
      %204 = vector.broadcast %181 : vector<1x32xf32> to vector<16x32xf32>
      %205 = arith.addf %203, %204 : vector<16x32xf32>
      %c0_73 = arith.constant 0 : index
      %c0_74 = arith.constant 0 : index
      %c0_75 = arith.constant 0 : index
      %206 = vector.load %arg5[%c0_73, %c0_74, %c0_75] : memref<1x64x768xbf16, #tpu.memory_space<vmem>>, vector<1x64x768xbf16>
      %207 = vector.shape_cast %206 : vector<1x64x768xbf16> to vector<64x768xbf16>
      %c0_76 = arith.constant 0 : index
      %c0_77 = arith.constant 0 : index
      %c0_78 = arith.constant 0 : index
      %208 = vector.load %arg6[%c0_76, %c0_77, %c0_78] : memref<1x6x768xf32, #tpu.memory_space<vmem>>, vector<1x6x768xf32>
      %209 = vector.shape_cast %208 : vector<1x6x768xf32> to vector<6x768xf32>
      %c0_79 = arith.constant 0 : index
      %c0_80 = arith.constant 0 : index
      %210 = vector.load %arg2[%c0_79, %c0_80] : memref<2x32xf32, #tpu.memory_space<vmem>>, vector<2x32xf32>
      %211 = arith.truncf %210 : vector<2x32xf32> to vector<2x32xbf16>
      %212 = vector.extract_strided_slice %207 {offsets = [0, 0], sizes = [32, 768], strides = [1, 1]} : vector<64x768xbf16> to vector<32x768xbf16>
      %cst_81 = arith.constant dense<0.000000e+00> : vector<2x768xf32>
      %213 = tpu.matmul %211, %212, %cst_81 {dimension_numbers = #tpu.dot_dimension_numbers<[1], [0], [0], [1], [0, 0, 1, 1], [], []>} : vector<2x32xbf16>, vector<32x768xbf16>, vector<2x768xf32> -> vector<2x768xf32>
      %214 = vector.extract_strided_slice %209 {offsets = [0, 0], sizes = [1, 768], strides = [1, 1]} : vector<6x768xf32> to vector<1x768xf32>
      %215 = vector.broadcast %214 : vector<1x768xf32> to vector<2x768xf32>
      %216 = arith.addf %213, %215 : vector<2x768xf32>
      %217 = vector.extract_strided_slice %209 {offsets = [1, 0], sizes = [1, 768], strides = [1, 1]} : vector<6x768xf32> to vector<1x768xf32>
      %218 = vector.extract_strided_slice %209 {offsets = [2, 0], sizes = [1, 768], strides = [1, 1]} : vector<6x768xf32> to vector<1x768xf32>
      %cst_82 = arith.constant dense<0.000000e+00> : vector<2xf32>
      %219 = vector.multi_reduction <add>, %216, %cst_82 [1] : vector<2x768xf32> to vector<2xf32>
      %220 = vector.shape_cast %219 : vector<2xf32> to vector<2x1xf32>
      %cst_83 = arith.constant 7.680000e+02 : f32
      %221 = vector.broadcast %cst_83 : f32 to vector<2x1xf32>
      %222 = arith.divf %220, %221 : vector<2x1xf32>
      %223 = vector.broadcast %222 : vector<2x1xf32> to vector<2x768xf32>
      %224 = arith.subf %216, %223 : vector<2x768xf32>
      %225 = vector.broadcast %222 : vector<2x1xf32> to vector<2x768xf32>
      %226 = arith.subf %216, %225 : vector<2x768xf32>
      %227 = arith.mulf %224, %226 : vector<2x768xf32>
      %cst_84 = arith.constant dense<0.000000e+00> : vector<2xf32>
      %228 = vector.multi_reduction <add>, %227, %cst_84 [1] : vector<2x768xf32> to vector<2xf32>
      %229 = vector.shape_cast %228 : vector<2xf32> to vector<2x1xf32>
      %cst_85 = arith.constant 7.680000e+02 : f32
      %230 = vector.broadcast %cst_85 : f32 to vector<2x1xf32>
      %231 = arith.divf %229, %230 : vector<2x1xf32>
      %232 = vector.broadcast %222 : vector<2x1xf32> to vector<2x768xf32>
      %233 = arith.subf %216, %232 : vector<2x768xf32>
      %cst_86 = arith.constant 9.99999974E-6 : f32
      %234 = vector.broadcast %cst_86 : f32 to vector<2x1xf32>
      %235 = arith.addf %231, %234 : vector<2x1xf32>
      %236 = math.rsqrt %235 : vector<2x1xf32>
      %237 = vector.broadcast %236 : vector<2x1xf32> to vector<2x768xf32>
      %238 = arith.mulf %233, %237 : vector<2x768xf32>
      %239 = vector.broadcast %217 : vector<1x768xf32> to vector<2x768xf32>
      %240 = arith.mulf %238, %239 : vector<2x768xf32>
      %241 = vector.broadcast %218 : vector<1x768xf32> to vector<2x768xf32>
      %242 = arith.addf %240, %241 : vector<2x768xf32>
      %cst_87 = arith.constant 0.000000e+00 : f32
      %243 = vector.broadcast %cst_87 : f32 to vector<2x768xf32>
      %244 = arith.maximumf %242, %243 : vector<2x768xf32>
      %245 = arith.truncf %244 : vector<2x768xf32> to vector<2x768xbf16>
      %c0_88 = arith.constant 0 : index
      %c0_89 = arith.constant 0 : index
      %246 = vector.load %arg12[%c0_88, %c0_89] : memref<2x768xbf16, #tpu.memory_space<vmem>>, vector<2x768xbf16>
      tpu.vector_store %arg12[%c0_88, %c0_89], %245 {strides = array<i32>} : memref<2x768xbf16, #tpu.memory_space<vmem>>, vector<2x768xbf16>,
      %247 = arith.truncf %205 : vector<16x32xf32> to vector<16x32xbf16>
      %248 = vector.extract_strided_slice %207 {offsets = [32, 0], sizes = [32, 768], strides = [1, 1]} : vector<64x768xbf16> to vector<32x768xbf16>
      %cst_90 = arith.constant dense<0.000000e+00> : vector<16x768xf32>
      %249 = tpu.matmul %247, %248, %cst_90 {dimension_numbers = #tpu.dot_dimension_numbers<[1], [0], [0], [1], [0, 0, 1, 1], [], []>} : vector<16x32xbf16>, vector<32x768xbf16>, vector<16x768xf32> -> vector<16x768xf32>
      %250 = vector.extract_strided_slice %209 {offsets = [3, 0], sizes = [1, 768], strides = [1, 1]} : vector<6x768xf32> to vector<1x768xf32>
      %251 = vector.broadcast %250 : vector<1x768xf32> to vector<16x768xf32>
      %252 = arith.addf %249, %251 : vector<16x768xf32>
      %253 = vector.extract_strided_slice %209 {offsets = [4, 0], sizes = [1, 768], strides = [1, 1]} : vector<6x768xf32> to vector<1x768xf32>
      %254 = vector.extract_strided_slice %209 {offsets = [5, 0], sizes = [1, 768], strides = [1, 1]} : vector<6x768xf32> to vector<1x768xf32>
      %cst_91 = arith.constant dense<0.000000e+00> : vector<16xf32>
      %255 = vector.multi_reduction <add>, %252, %cst_91 [1] : vector<16x768xf32> to vector<16xf32>
      %256 = vector.shape_cast %255 : vector<16xf32> to vector<16x1xf32>
      %cst_92 = arith.constant 7.680000e+02 : f32
      %257 = vector.broadcast %cst_92 : f32 to vector<16x1xf32>
      %258 = arith.divf %256, %257 : vector<16x1xf32>
      %259 = vector.broadcast %258 : vector<16x1xf32> to vector<16x768xf32>
      %260 = arith.subf %252, %259 : vector<16x768xf32>
      %261 = vector.broadcast %258 : vector<16x1xf32> to vector<16x768xf32>
      %262 = arith.subf %252, %261 : vector<16x768xf32>
      %263 = arith.mulf %260, %262 : vector<16x768xf32>
      %cst_93 = arith.constant dense<0.000000e+00> : vector<16xf32>
      %264 = vector.multi_reduction <add>, %263, %cst_93 [1] : vector<16x768xf32> to vector<16xf32>
      %265 = vector.shape_cast %264 : vector<16xf32> to vector<16x1xf32>
      %cst_94 = arith.constant 7.680000e+02 : f32
      %266 = vector.broadcast %cst_94 : f32 to vector<16x1xf32>
      %267 = arith.divf %265, %266 : vector<16x1xf32>
      %268 = vector.broadcast %258 : vector<16x1xf32> to vector<16x768xf32>
      %269 = arith.subf %252, %268 : vector<16x768xf32>
      %cst_95 = arith.constant 9.99999974E-6 : f32
      %270 = vector.broadcast %cst_95 : f32 to vector<16x1xf32>
      %271 = arith.addf %267, %270 : vector<16x1xf32>
      %272 = math.rsqrt %271 : vector<16x1xf32>
      %273 = vector.broadcast %272 : vector<16x1xf32> to vector<16x768xf32>
      %274 = arith.mulf %269, %273 : vector<16x768xf32>
      %275 = vector.broadcast %253 : vector<1x768xf32> to vector<16x768xf32>
      %276 = arith.mulf %274, %275 : vector<16x768xf32>
      %277 = vector.broadcast %254 : vector<1x768xf32> to vector<16x768xf32>
      %278 = arith.addf %276, %277 : vector<16x768xf32>
      %cst_96 = arith.constant 0.000000e+00 : f32
      %279 = vector.broadcast %cst_96 : f32 to vector<16x768xf32>
      %280 = arith.maximumf %278, %279 : vector<16x768xf32>
      %281 = arith.truncf %280 : vector<16x768xf32> to vector<16x768xbf16>
      %c0_97 = arith.constant 0 : index
      %c0_98 = arith.constant 0 : index
      %282 = vector.load %arg13[%c0_97, %c0_98] : memref<16x768xbf16, #tpu.memory_space<vmem>>, vector<16x768xbf16>
      tpu.vector_store %arg13[%c0_97, %c0_98], %281 {strides = array<i32>} : memref<16x768xbf16, #tpu.memory_space<vmem>>, vector<16x768xbf16>,
      %cst_99 = arith.constant 0.000000e+00 : f32
      %283 = vector.broadcast %cst_99 : f32 to vector<2x16xf32>
      %c0_100 = arith.constant 0 : index
      %c0_101 = arith.constant 0 : index
      %c0_102 = arith.constant 0 : index
      %284 = vector.load %arg10[%c0_100, %c0_101, %c0_102] : memref<1x2x16xf32, #tpu.memory_space<vmem>>, vector<1x2x16xf32>
      %285 = vector.shape_cast %284 : vector<1x2x16xf32> to vector<2x16xf32>
      %286 = vector.shape_cast %283 : vector<2x16xf32> to vector<1x2x16xf32>
      tpu.vector_store %arg10[%c0_100, %c0_101, %c0_102], %286 {strides = array<i32>} : memref<1x2x16xf32, #tpu.memory_space<vmem>>, vector<1x2x16xf32>,
    } else {
    }
    %c0 = arith.constant 0 : index
    %c0_1 = arith.constant 0 : index
    %c0_2 = arith.constant 0 : index
    %3 = vector.load %arg9[%c0, %c0_1, %c0_2] : memref<1x2x256xf32, #tpu.memory_space<vmem>>, vector<1x2x256xf32>
    %4 = vector.shape_cast %3 : vector<1x2x256xf32> to vector<2x256xf32>
    %c0_3 = arith.constant 0 : index
    %c0_4 = arith.constant 0 : index
    %5 = vector.load %arg12[%c0_3, %c0_4] : memref<2x768xbf16, #tpu.memory_space<vmem>>, vector<2x768xbf16>
    %c0_5 = arith.constant 0 : index
    %c0_6 = arith.constant 0 : index
    %c0_7 = arith.constant 0 : index
    %6 = vector.load %arg7[%c0_5, %c0_6, %c0_7] : memref<1x768x256xbf16, #tpu.memory_space<vmem>>, vector<1x768x256xbf16>
    %7 = vector.shape_cast %6 : vector<1x768x256xbf16> to vector<768x256xbf16>
    %cst = arith.constant dense<0.000000e+00> : vector<2x256xf32>
    %8 = tpu.matmul %5, %7, %cst {dimension_numbers = #tpu.dot_dimension_numbers<[1], [0], [0], [1], [0, 0, 1, 1], [], []>} : vector<2x768xbf16>, vector<768x256xbf16>, vector<2x256xf32> -> vector<2x256xf32>
    %9 = vector.extract_strided_slice %4 {offsets = [0, 0], sizes = [1, 256], strides = [1, 1]} : vector<2x256xf32> to vector<1x256xf32>
    %10 = vector.broadcast %9 : vector<1x256xf32> to vector<2x256xf32>
    %11 = arith.addf %8, %10 : vector<2x256xf32>
    %cst_8 = arith.constant 0.000000e+00 : f32
    %12 = vector.broadcast %cst_8 : f32 to vector<2x256xf32>
    %13 = arith.maximumf %11, %12 : vector<2x256xf32>
    %c0_9 = arith.constant 0 : index
    %c0_10 = arith.constant 0 : index
    %14 = vector.load %arg13[%c0_9, %c0_10] : memref<16x768xbf16, #tpu.memory_space<vmem>>, vector<16x768xbf16>
    %c0_11 = arith.constant 0 : index
    %c0_12 = arith.constant 0 : index
    %c0_13 = arith.constant 0 : index
    %15 = vector.load %arg8[%c0_11, %c0_12, %c0_13] : memref<1x768x256xbf16, #tpu.memory_space<vmem>>, vector<1x768x256xbf16>
    %16 = vector.shape_cast %15 : vector<1x768x256xbf16> to vector<768x256xbf16>
    %cst_14 = arith.constant dense<0.000000e+00> : vector<16x256xf32>
    %17 = tpu.matmul %14, %16, %cst_14 {dimension_numbers = #tpu.dot_dimension_numbers<[1], [0], [0], [1], [0, 0, 1, 1], [], []>} : vector<16x768xbf16>, vector<768x256xbf16>, vector<16x256xf32> -> vector<16x256xf32>
    %18 = vector.extract_strided_slice %4 {offsets = [1, 0], sizes = [1, 256], strides = [1, 1]} : vector<2x256xf32> to vector<1x256xf32>
    %19 = vector.broadcast %18 : vector<1x256xf32> to vector<16x256xf32>
    %20 = arith.addf %17, %19 : vector<16x256xf32>
    %cst_15 = arith.constant 0.000000e+00 : f32
    %21 = vector.broadcast %cst_15 : f32 to vector<16x256xf32>
    %22 = arith.maximumf %20, %21 : vector<16x256xf32>
    %c0_16 = arith.constant 0 : index
    %c0_17 = arith.constant 0 : index
    %c0_18 = arith.constant 0 : index
    %23 = vector.load %arg10[%c0_16, %c0_17, %c0_18] : memref<1x2x16xf32, #tpu.memory_space<vmem>>, vector<1x2x16xf32>
    %24 = vector.shape_cast %23 : vector<1x2x16xf32> to vector<2x16xf32>
    %25 = arith.truncf %13 : vector<2x256xf32> to vector<2x256xbf16>
    %26 = arith.truncf %22 : vector<16x256xf32> to vector<16x256xbf16>
    %cst_19 = arith.constant dense<0.000000e+00> : vector<2x16xf32>
    %27 = tpu.matmul %25, %26, %cst_19 {dimension_numbers = #tpu.dot_dimension_numbers<[1], [1], [0], [0], [0, 0, 1, 0], [], []>} : vector<2x256xbf16>, vector<16x256xbf16>, vector<2x16xf32> -> vector<2x16xf32>
    %28 = arith.addf %24, %27 : vector<2x16xf32>
    %c0_20 = arith.constant 0 : index
    %c0_21 = arith.constant 0 : index
    %c0_22 = arith.constant 0 : index
    %29 = vector.load %arg10[%c0_20, %c0_21, %c0_22] : memref<1x2x16xf32, #tpu.memory_space<vmem>>, vector<1x2x16xf32>
    %30 = vector.shape_cast %29 : vector<1x2x16xf32> to vector<2x16xf32>
    %31 = vector.shape_cast %28 : vector<2x16xf32> to vector<1x2x16xf32>
    tpu.vector_store %arg10[%c0_20, %c0_21, %c0_22], %31 {strides = array<i32>} : memref<1x2x16xf32, #tpu.memory_space<vmem>>, vector<1x2x16xf32>,
    return
  }
  func.func @transform_0(%arg0: i32, %arg1: i32) -> (i32, i32) {
    %c0_i32 = arith.constant 0 : i32
    %c0_i32_0 = arith.constant 0 : i32
    %c0_i32_1 = arith.constant 0 : i32
    return %c0_i32, %c0_i32_0 : i32, i32
  }
  func.func @transform_1(%arg0: i32, %arg1: i32) -> (i32, i32) {
    %c0_i32 = arith.constant 0 : i32
    %c0_i32_0 = arith.constant 0 : i32
    %c0_i32_1 = arith.constant 0 : i32
    return %c0_i32, %c0_i32_0 : i32, i32
  }
  func.func @transform_2(%arg0: i32, %arg1: i32) -> (i32, i32) {
    %c0_i32 = arith.constant 0 : i32
    %c0_i32_0 = arith.constant 0 : i32
    %c0_i32_1 = arith.constant 0 : i32
    return %c0_i32, %c0_i32_0 : i32, i32
  }
  func.func @transform_3(%arg0: i32, %arg1: i32) -> (i32, i32, i32) {
    %c0_i32 = arith.constant 0 : i32
    %c0_i32_0 = arith.constant 0 : i32
    %c0_i32_1 = arith.constant 0 : i32
    return %arg0, %c0_i32, %c0_i32_0 : i32, i32, i32
  }
  func.func @transform_4(%arg0: i32, %arg1: i32) -> (i32, i32, i32) {
    %c0_i32 = arith.constant 0 : i32
    %c0_i32_0 = arith.constant 0 : i32
    %c0_i32_1 = arith.constant 0 : i32
    return %arg0, %c0_i32, %c0_i32_0 : i32, i32, i32
  }
  func.func @transform_5(%arg0: i32, %arg1: i32) -> (i32, i32, i32) {
    %c0_i32 = arith.constant 0 : i32
    %c0_i32_0 = arith.constant 0 : i32
    return %arg0, %c0_i32, %arg1 : i32, i32, i32
  }
  func.func @transform_6(%arg0: i32, %arg1: i32) -> (i32, i32, i32) {
    %c0_i32 = arith.constant 0 : i32
    %c0_i32_0 = arith.constant 0 : i32
    return %arg0, %c0_i32, %arg1 : i32, i32, i32
  }
  func.func @transform_7(%arg0: i32, %arg1: i32) -> (i32, i32, i32) {
    %c0_i32 = arith.constant 0 : i32
    %c0_i32_0 = arith.constant 0 : i32
    return %arg0, %c0_i32, %arg1 : i32, i32, i32
  }
  func.func @transform_8(%arg0: i32, %arg1: i32) -> (i32, i32, i32) {
    %c0_i32 = arith.constant 0 : i32
    %c0_i32_0 = arith.constant 0 : i32
    %c0_i32_1 = arith.constant 0 : i32
    return %arg0, %c0_i32, %c0_i32_0 : i32, i32, i32
  }
}

</mosaic_0001>

<llo_original>
// kernel: _asp_score.1
$region0: #{_asp_score.1}
  #allocation0 [shape = 'u32[]', space=smem, size = 0x4, offset = 0x4, fixed_abs, tag = 'smem constant byte address 0x4 - core index']
  #allocation1 [shape = 'u32[72,128]{1,0:T(1,128)}', space=vmem, size = 0x9000, scoped, tag = 'internal scratch']
  #allocation2 [shape = 'f32[16,32]{1,0:T(8,128)}', space=vmem, size = 0x2000, scoped, tag = 'scratch operand']
  #allocation3 [shape = 'bf16[2,768]{1,0:T(2,128)(2,1)}', space=vmem, size = 0xc00, scoped, tag = 'scratch operand']
  #allocation4 [shape = 'bf16[16,768]{1,0:T(8,128)(2,1)}', space=vmem, size = 0x6000, scoped, tag = 'scratch operand']
  %s0 = inlined_call_operand.hbm [shape: f32[2,32], index: 0, kind: input, shape index: {}]
  %s1 = inlined_call_operand.vmem [shape: f32[16,32], index: 1, kind: input, shape index: {}]
  %s2 = inlined_call_operand.hbm [shape: f32[40,160], index: 2, kind: input, shape index: {}]
  %s3 = inlined_call_operand.hbm [shape: bf16[2,64,768], index: 3, kind: input, shape index: {}]
  %s4 = inlined_call_operand.vmem [shape: f32[2,6,768], index: 4, kind: input, shape index: {}]
  %s5 = inlined_call_operand.hbm [shape: bf16[2,768,1024], index: 5, kind: input, shape index: {}]
  %s6 = inlined_call_operand.hbm [shape: bf16[2,768,1024], index: 6, kind: input, shape index: {}]
  %s7 = inlined_call_operand.hbm [shape: f32[2,2,1024], index: 7, kind: input, shape index: {}]
  %s8 = inlined_call_operand.vmem [shape: f32[2,2,16], index: 8, kind: output, shape index: {}]
  %s9 = sld [smem:[#allocation0]]
  $region93: #{_asp_score.1} parent=0
    _
  %s11 = ssub.s32 1, %s9
  %s12 = scalar_select 0, %s11, %s9
  $region1: #{_asp_score.1} parent=0
    #allocation5 [shape = 'u8[1024]{0}', space=vmem, size = 0x400, scoped, tag = 'input window, operand 0, single buffered']
    #allocation6 [shape = 's32[2]{0}', space=sflag, size = 0x8, scoped, tag = 'scoped memory for _asp_score.1']
    #allocation7 [shape = 'u8[40960]{0}', space=vmem, size = 0xa000, scoped, tag = 'input window, operand 2, single buffered']
    #allocation8 [shape = 's32[1]{0}', space=sflag, size = 0x4, scoped, tag = 'scoped memory for _asp_score.1']
    #allocation9 [shape = 'u8[196608]{0}', space=vmem, size = 0x30000, scoped, tag = 'input window, operand 3']
    #allocation10 [shape = 'u8[786432]{0}', space=vmem, size = 0xc0000, scoped, tag = 'input window, operand 5']
    #allocation11 [shape = 'u8[786432]{0}', space=vmem, size = 0xc0000, scoped, tag = 'input window, operand 6']
    #allocation12 [shape = 'u8[4096]{0}', space=vmem, size = 0x1000, scoped, tag = 'input window, operand 7']
    %13 = vsyncpa [#allocation6], 0
    %14 = vsyncpa [#allocation8], 0
    loop: start=0, step=1, limit=10
    $region2: #{_asp_score.1} parent=1 // loop_pre_header
      _
    $region3: #{_asp_score.1} parent=1 // loop_header
      %s16 = sphi 0, %s20
      %p17 = scmp.ge.s32.totalorder %s16, 10
      %s23 = sphi 0, %s35
      %s24 = sphi 0, %s31
      %s25 = sphi 0, %s23
      %s26 = sphi 0, %s24
      %s27 = sphi 0, %s25
      %s28 = sphi 0, %s26
      %s36 = sphi 0, %s36
      %s38 = sphi 0, %s36
      %s39 = sphi 0, %s38
      %s53 = sphi 0, %s39
      %s57 = sphi 0, %s57
      %s59 = sphi 0, %s57
      %s60 = sphi 0, %s59
      %s74 = sphi 0, %s60
      %s78 = sphi 0, %s78
      %s80 = sphi 0, %s78
      %s81 = sphi 0, %s80
      %s95 = sphi 0, %s81
      %s101 = sphi 0, %s103
      %s104 = sphi 0, %s101
      %s105 = sphi 0, %s104
      %s121 = sphi 0, %s105
      %s127 = sphi 0, %s129
      %s130 = sphi 0, %s127
      %s131 = sphi 0, %s130
      %s147 = sphi 0, %s131
      %s155 = sphi 0, %s157
      %s158 = sphi 0, %s155
      %s159 = sphi 0, %s158
      %s175 = sphi 0, %s159
      %s183 = sphi 0, %s185
      %s186 = sphi 0, %s183
      %s187 = sphi 0, %s186
      %s203 = sphi 0, %s187
      %s211 = sphi 0, %s213
      %s214 = sphi 0, %s211
      %s215 = sphi 0, %s214
      %s231 = sphi 0, %s215
      %s237 = sphi 0, %s239
      %s240 = sphi 0, %s237
      %s241 = sphi 0, %s240
      %s257 = sphi 0, %s241
    $region4: #{_asp_score.1} parent=1 // loop_header_branch
      %19 = sbr.rel (%p17) target = $region8
    $region5: #{_asp_score.1} parent=1 // loop_body
      %s21 = ssub.s32 %s16, 1
      %s22 = ssub.s32 %s16, 2
      %s29 = sadd.s32 1, %s24
      %p30 = scmp.ge.s32.totalorder %s29, 4
      %s31 = scalar_select %p30, 0, %s29
      %s32 = sadd.s32 1, %s23
      %s33 = scalar_select %p30, %s32, %s23
      %p34 = scmp.ge.s32.totalorder %s33, 2
      %s35 = scalar_select %p34, 0, %s33
      %s37 = sadd.s32 %s36, 1
      %p40 = scmp.eq.s32.totalorder %s16, 7
      %p41 = scmp.ne.s32.totalorder %s36, %s38
      %p42 = scmp.eq.s32.totalorder %s16, 0
      %p43 = por %p41, %p42
      %p44 = scmp.ne.s32.totalorder %s36, %s38
      %p45 = scmp.eq.s32.totalorder %s21, 7
      %p46 = por %p44, %p45
      %p47 = scmp.ne.s32.totalorder %s38, %s39
      %p48 = scmp.eq.s32.totalorder %s21, 0
      %p49 = por %p47, %p48
      %p50 = scmp.ne.s32.totalorder %s38, %s39
      %p51 = scmp.eq.s32.totalorder %s22, 7
      %p52 = por %p50, %p51
      %p54 = scmp.ne.s32.totalorder %s39, %s53
      %p55 = scmp.eq.s32.totalorder %s22, 0
      %p56 = por %p54, %p55
      %s58 = sadd.s32 %s57, 1
      %p61 = scmp.eq.s32.totalorder %s16, 7
      %p62 = scmp.ne.s32.totalorder %s57, %s59
      %p63 = scmp.eq.s32.totalorder %s16, 0
      %p64 = por %p62, %p63
      %p65 = scmp.ne.s32.totalorder %s57, %s59
      %p66 = scmp.eq.s32.totalorder %s21, 7
      %p67 = por %p65, %p66
      %p68 = scmp.ne.s32.totalorder %s59, %s60
      %p69 = scmp.eq.s32.totalorder %s21, 0
      %p70 = por %p68, %p69
      %p71 = scmp.ne.s32.totalorder %s59, %s60
      %p72 = scmp.eq.s32.totalorder %s22, 7
      %p73 = por %p71, %p72
      %p75 = scmp.ne.s32.totalorder %s60, %s74
      %p76 = scmp.eq.s32.totalorder %s22, 0
      %p77 = por %p75, %p76
      %s79 = sadd.s32 %s78, 1
      %p82 = scmp.eq.s32.totalorder %s16, 7
      %p83 = scmp.ne.s32.totalorder %s78, %s80
      %p84 = scmp.eq.s32.totalorder %s16, 0
      %p85 = por %p83, %p84
      %p86 = scmp.ne.s32.totalorder %s78, %s80
      %p87 = scmp.eq.s32.totalorder %s21, 7
      %p88 = por %p86, %p87
      %p89 = scmp.ne.s32.totalorder %s80, %s81
      %p90 = scmp.eq.s32.totalorder %s21, 0
      %p91 = por %p89, %p90
      %p92 = scmp.ne.s32.totalorder %s80, %s81
      %p93 = scmp.eq.s32.totalorder %s22, 7
      %p94 = por %p92, %p93
      %p96 = scmp.ne.s32.totalorder %s81, %s95
      %p97 = scmp.eq.s32.totalorder %s22, 0
      %p98 = por %p96, %p97
      %s99 = ssub.s32 %s23, %s35
      %p100 = scmp.eq.s32.totalorder %s99, 0
      %s102 = sadd.s32 %s101, 1
      %s103 = scalar_select %p100, %s101, %s102
      %p106 = pneg %p100
      %p107 = scmp.eq.s32.totalorder %s16, 7
      %p108 = por %p106, %p107
      %p109 = scmp.ne.s32.totalorder %s101, %s104
      %p110 = scmp.eq.s32.totalorder %s16, 0
      %p111 = por %p109, %p110
      %p112 = scmp.ne.s32.totalorder %s101, %s104
      %p113 = scmp.eq.s32.totalorder %s21, 7
      %p114 = por %p112, %p113
      %p115 = scmp.ne.s32.totalorder %s104, %s105
      %p116 = scmp.eq.s32.totalorder %s21, 0
      %p117 = por %p115, %p116
      %p118 = scmp.ne.s32.totalorder %s104, %s105
      %p119 = scmp.eq.s32.totalorder %s22, 7
      %p120 = por %p118, %p119
      %p122 = scmp.ne.s32.totalorder %s105, %s121
      %p123 = scmp.eq.s32.totalorder %s22, 0
      %p124 = por %p122, %p123
      %s125 = ssub.s32 %s23, %s35
      %p126 = scmp.eq.s32.totalorder %s125, 0
      %s128 = sadd.s32 %s127, 1
      %s129 = scalar_select %p126, %s127, %s128
      %p132 = pneg %p126
      %p133 = scmp.eq.s32.totalorder %s16, 7
      %p134 = por %p132, %p133
      %p135 = scmp.ne.s32.totalorder %s127, %s130
      %p136 = scmp.eq.s32.totalorder %s16, 0
      %p137 = por %p135, %p136
      %p138 = scmp.ne.s32.totalorder %s127, %s130
      %p139 = scmp.eq.s32.totalorder %s21, 7
      %p140 = por %p138, %p139
      %p141 = scmp.ne.s32.totalorder %s130, %s131
      %p142 = scmp.eq.s32.totalorder %s21, 0
      %p143 = por %p141, %p142
      %p144 = scmp.ne.s32.totalorder %s130, %s131
      %p145 = scmp.eq.s32.totalorder %s22, 7
      %p146 = por %p144, %p145
      %p148 = scmp.ne.s32.totalorder %s131, %s147
      %p149 = scmp.eq.s32.totalorder %s22, 0
      %p150 = por %p148, %p149
      %s151 = ssub.s32 %s23, %s35
      %s152 = ssub.s32 %s24, %s31
      %s153 = sor.u32 %s151, %s152
      %p154 = scmp.eq.s32.totalorder %s153, 0
      %s156 = sadd.s32 %s155, 1
      %s157 = scalar_select %p154, %s155, %s156
      %p160 = pneg %p154
      %p161 = scmp.eq.s32.totalorder %s16, 7
      %p162 = por %p160, %p161
      %p163 = scmp.ne.s32.totalorder %s155, %s158
      %p164 = scmp.eq.s32.totalorder %s16, 0
      %p165 = por %p163, %p164
      %p166 = scmp.ne.s32.totalorder %s155, %s158
      %p167 = scmp.eq.s32.totalorder %s21, 7
      %p168 = por %p166, %p167
      %p169 = scmp.ne.s32.totalorder %s158, %s159
      %p170 = scmp.eq.s32.totalorder %s21, 0
      %p171 = por %p169, %p170
      %p172 = scmp.ne.s32.totalorder %s158, %s159
      %p173 = scmp.eq.s32.totalorder %s22, 7
      %p174 = por %p172, %p173
      %p176 = scmp.ne.s32.totalorder %s159, %s175
      %p177 = scmp.eq.s32.totalorder %s22, 0
      %p178 = por %p176, %p177
      %s179 = ssub.s32 %s23, %s35
      %s180 = ssub.s32 %s24, %s31
      %s181 = sor.u32 %s179, %s180
      %p182 = scmp.eq.s32.totalorder %s181, 0
      %s184 = sadd.s32 %s183, 1
      %s185 = scalar_select %p182, %s183, %s184
      %p188 = pneg %p182
      %p189 = scmp.eq.s32.totalorder %s16, 7
      %p190 = por %p188, %p189
      %p191 = scmp.ne.s32.totalorder %s183, %s186
      %p192 = scmp.eq.s32.totalorder %s16, 0
      %p193 = por %p191, %p192
      %p194 = scmp.ne.s32.totalorder %s183, %s186
      %p195 = scmp.eq.s32.totalorder %s21, 7
      %p196 = por %p194, %p195
      %p197 = scmp.ne.s32.totalorder %s186, %s187
      %p198 = scmp.eq.s32.totalorder %s21, 0
      %p199 = por %p197, %p198
      %p200 = scmp.ne.s32.totalorder %s186, %s187
      %p201 = scmp.eq.s32.totalorder %s22, 7
      %p202 = por %p200, %p201
      %p204 = scmp.ne.s32.totalorder %s187, %s203
      %p205 = scmp.eq.s32.totalorder %s22, 0
      %p206 = por %p204, %p205
      %s207 = ssub.s32 %s23, %s35
      %s208 = ssub.s32 %s24, %s31
      %s209 = sor.u32 %s207, %s208
      %p210 = scmp.eq.s32.totalorder %s209, 0
      %s212 = sadd.s32 %s211, 1
      %s213 = scalar_select %p210, %s211, %s212
      %p216 = pneg %p210
      %p217 = scmp.eq.s32.totalorder %s16, 7
      %p218 = por %p216, %p217
      %p219 = scmp.ne.s32.totalorder %s211, %s214
      %p220 = scmp.eq.s32.totalorder %s16, 0
      %p221 = por %p219, %p220
      %p222 = scmp.ne.s32.totalorder %s211, %s214
      %p223 = scmp.eq.s32.totalorder %s21, 7
      %p224 = por %p222, %p223
      %p225 = scmp.ne.s32.totalorder %s214, %s215
      %p226 = scmp.eq.s32.totalorder %s21, 0
      %p227 = por %p225, %p226
      %p228 = scmp.ne.s32.totalorder %s214, %s215
      %p229 = scmp.eq.s32.totalorder %s22, 7
      %p230 = por %p228, %p229
      %p232 = scmp.ne.s32.totalorder %s215, %s231
      %p233 = scmp.eq.s32.totalorder %s22, 0
      %p234 = por %p232, %p233
      %s235 = ssub.s32 %s23, %s35
      %p236 = scmp.eq.s32.totalorder %s235, 0
      %s238 = sadd.s32 %s237, 1
      %s239 = scalar_select %p236, %s237, %s238
      %p242 = pneg %p236
      %p243 = scmp.eq.s32.totalorder %s16, 7
      %p244 = por %p242, %p243
      %p245 = scmp.ne.s32.totalorder %s237, %s240
      %p246 = scmp.eq.s32.totalorder %s16, 0
      %p247 = por %p245, %p246
      %p248 = scmp.ne.s32.totalorder %s237, %s240
      %p249 = scmp.eq.s32.totalorder %s21, 7
      %p250 = por %p248, %p249
      %p251 = scmp.ne.s32.totalorder %s240, %s241
      %p252 = scmp.eq.s32.totalorder %s21, 0
      %p253 = por %p251, %p252
      %p254 = scmp.ne.s32.totalorder %s240, %s241
      %p255 = scmp.eq.s32.totalorder %s22, 7
      %p256 = por %p254, %p255
      %p258 = scmp.ne.s32.totalorder %s241, %s257
      %p259 = scmp.eq.s32.totalorder %s22, 0
      %p260 = por %p258, %p259
      %p261 = scmp.le.s32.totalorder 1, %s16
      %p262 = scmp.lt.s32.totalorder %s16, 9
      %p263 = pnand %p261, %p262
      %p264 = pneg %p263
      // Predicated region
      $region9: #{_asp_score.1} parent=5 // pred_check
        _
      $region10: #{_asp_score.1} parent=5 // pred_check_branch
        %266 = sbr.rel (%p263) target = $region12
      $region11: #{_asp_score.1} parent=5 // pred_region
        %s267 = ssub.s32 %s16, 1
        // Predicated region
        $region13: #{_asp_score.1} parent=11 // pred_check
          %p268 = pneg %p49
        $region14: #{_asp_score.1} parent=11 // pred_check_branch
          %270 = sbr.rel (%p268) target = $region16
        $region15: #{_asp_score.1} parent=11 // pred_region
          %272 = vsyncadd [#allocation6], 0
          %s274 = sshll.u32 %s0, 4
          %s275 = int_to_ptr.hbm [resolvable:$true] %s274
          %s276 = sshll.u32 [#allocation5], 4
          %s277 = int_to_ptr.vmem [resolvable:$true] %s276
          %279 = dma.hbm_to_vmem [thread:$0]  %s275, 32, %s277, [#allocation6]
        $region16: #{_asp_score.1} parent=11 // pred_fallthru
          _
        // Predicated region
        $region17: #{_asp_score.1} parent=11 // pred_check
          %p280 = pneg %p70
        $region18: #{_asp_score.1} parent=11 // pred_check_branch
          %282 = sbr.rel (%p280) target = $region20
        $region19: #{_asp_score.1} parent=11 // pred_region
          _
        $region20: #{_asp_score.1} parent=11 // pred_fallthru
          _
        // Predicated region
        $region21: #{_asp_score.1} parent=11 // pred_check
          %p283 = pneg %p91
        $region22: #{_asp_score.1} parent=11 // pred_check_branch
          %285 = sbr.rel (%p283) target = $region24
        $region23: #{_asp_score.1} parent=11 // pred_region
          %287 = vsyncadd [#allocation8], 0
          %s288 = sshll.u32 %s2, 4
          %s289 = int_to_ptr.hbm [resolvable:$true] %s288
          %s290 = sshll.u32 [#allocation7], 4
          %s291 = int_to_ptr.vmem [resolvable:$true] %s290
          %296 = dma.hbm_to_vmem [thread:$0]  %s289, 1280, %s291, [#allocation8], 256, 256, 16
        $region24: #{_asp_score.1} parent=11 // pred_fallthru
          _
      $region12: #{_asp_score.1} parent=5 // pred_fallthru
        _
      %p297 = scmp.lt.s32.totalorder %s16, 8
      // Predicated region
      $region25: #{_asp_score.1} parent=5 // pred_check
        %p298 = pneg %p297
      $region26: #{_asp_score.1} parent=5 // pred_check_branch
        %300 = sbr.rel (%p298) target = $region28
      $region27: #{_asp_score.1} parent=5 // pred_region
        // Predicated region
        $region29: #{_asp_score.1} parent=27 // pred_check
          %p301 = pneg %p111
        $region30: #{_asp_score.1} parent=27 // pred_check_branch
          %303 = sbr.rel (%p301) target = $region32
        $region31: #{_asp_score.1} parent=27 // pred_region
          %s304 = sand.u32 %s16, 1
          %s305 = scalar_lea.sflag [#allocation6], %s304
          %s306 = sand.u32 %s101, 1
          %s307 = smul.addr %s306, 192
          %s308 = scalar_lea.vmem [#allocation9], %s307
          %310 = vsyncadd %s305, 0
          %s311 = smul.addr %s23, 48
          %s312 = smul.addr %s311, 4
          %s313 = scalar_lea.hbm %s3, %s312
          %s314 = sshll.u32 %s313, 4
          %s315 = int_to_ptr.hbm [resolvable:$true] %s314
          %s316 = sshll.u32 %s308, 4
          %s317 = int_to_ptr.vmem [resolvable:$true] %s316
          %322 = dma.hbm_to_vmem [thread:$0]  %s315, 3072, %s317, %s305, 384, 384, 24
        $region32: #{_asp_score.1} parent=27 // pred_fallthru
          _
        // Predicated region
        $region33: #{_asp_score.1} parent=27 // pred_check
          %p323 = pneg %p137
        $region34: #{_asp_score.1} parent=27 // pred_check_branch
          %325 = sbr.rel (%p323) target = $region36
        $region35: #{_asp_score.1} parent=27 // pred_region
          %p326 = scmp.lt.s32.totalorder %s23, 1
          %s327 = scalar_select %p326, %s23, 1
          %s328 = smul.addr %s327, 6
          %s329 = smul.addr %s328, 8
          %s330 = scalar_lea.vmem %s4, %s329
        $region36: #{_asp_score.1} parent=27 // pred_fallthru
          _
        // Predicated region
        $region37: #{_asp_score.1} parent=27 // pred_check
          %p331 = pneg %p165
        $region38: #{_asp_score.1} parent=27 // pred_check_branch
          %333 = sbr.rel (%p331) target = $region40
        $region39: #{_asp_score.1} parent=27 // pred_region
          %s334 = sand.u32 %s16, 1
          %s335 = scalar_lea.sflag [#allocation6], %s334
          %s336 = sand.u32 %s155, 1
          %s337 = smul.addr %s336, 768
          %s338 = scalar_lea.vmem [#allocation10], %s337
          %s339 = smul.u32 2, %s24
          %341 = vsyncadd %s335, 0
          %s342 = smul.addr %s23, 768
          %s343 = sadd.s32 %s339, %s342
          %s344 = smul.addr %s343, 4
          %s345 = scalar_lea.hbm %s5, %s344
          %s346 = sshll.u32 %s345, 4
          %s347 = int_to_ptr.hbm [resolvable:$true] %s346
          %s348 = sshll.u32 %s338, 4
          %s349 = int_to_ptr.vmem [resolvable:$true] %s348
          %354 = dma.hbm_to_vmem [thread:$0]  %s347, 12288, %s349, %s335, 512, 128, 8
        $region40: #{_asp_score.1} parent=27 // pred_fallthru
          _
        // Predicated region
        $region41: #{_asp_score.1} parent=27 // pred_check
          %p355 = pneg %p193
        $region42: #{_asp_score.1} parent=27 // pred_check_branch
          %357 = sbr.rel (%p355) target = $region44
        $region43: #{_asp_score.1} parent=27 // pred_region
          %s358 = sand.u32 %s16, 1
          %s359 = scalar_lea.sflag [#allocation6], %s358
          %s360 = sand.u32 %s183, 1
          %s361 = smul.addr %s360, 768
          %s362 = scalar_lea.vmem [#allocation11], %s361
          %s363 = smul.u32 2, %s24
          %365 = vsyncadd %s359, 0
          %s366 = smul.addr %s23, 768
          %s367 = sadd.s32 %s363, %s366
          %s368 = smul.addr %s367, 4
          %s369 = scalar_lea.hbm %s6, %s368
          %s370 = sshll.u32 %s369, 4
          %s371 = int_to_ptr.hbm [resolvable:$true] %s370
          %s372 = sshll.u32 %s362, 4
          %s373 = int_to_ptr.vmem [resolvable:$true] %s372
          %378 = dma.hbm_to_vmem [thread:$0]  %s371, 12288, %s373, %s359, 512, 128, 8
        $region44: #{_asp_score.1} parent=27 // pred_fallthru
          _
        // Predicated region
        $region45: #{_asp_score.1} parent=27 // pred_check
          %p379 = pneg %p221
        $region46: #{_asp_score.1} parent=27 // pred_check_branch
          %381 = sbr.rel (%p379) target = $region48
        $region47: #{_asp_score.1} parent=27 // pred_region
          %s382 = sand.u32 %s16, 1
          %s383 = scalar_lea.sflag [#allocation6], %s382
          %s384 = sand.u32 %s211, 1
          %s385 = smul.addr %s384, 4
          %s386 = scalar_lea.vmem [#allocation12], %s385
          %s387 = smul.u32 2, %s24
          %389 = vsyncadd %s383, 0
          %s390 = smul.addr %s23, 8
          %s391 = sadd.s32 %s387, %s390
          %s392 = smul.addr %s391, 2
          %s393 = scalar_lea.hbm %s7, %s392
          %s395 = sshll.u32 %s393, 4
          %s396 = int_to_ptr.hbm [resolvable:$true] %s395
          %s397 = sshll.u32 %s386, 4
          %s398 = int_to_ptr.vmem [resolvable:$true] %s397
          %400 = dma.hbm_to_vmem [thread:$0]  %s396, 64, %s398, %s383
        $region48: #{_asp_score.1} parent=27 // pred_fallthru
          _
      $region28: #{_asp_score.1} parent=5 // pred_fallthru
        _
      %p401 = scmp.le.s32.totalorder 1, %s16
      %p402 = scmp.lt.s32.totalorder %s16, 9
      %p403 = pnand %p401, %p402
      %p404 = pneg %p403
      // Predicated region
      $region49: #{_asp_score.1} parent=5 // pred_check
        _
      $region50: #{_asp_score.1} parent=5 // pred_check_branch
        %406 = sbr.rel (%p403) target = $region52
      $region51: #{_asp_score.1} parent=5 // pred_region
        %s407 = ssub.s32 %s16, 1
        // Predicated region
        $region53: #{_asp_score.1} parent=51 // pred_check
          %p408 = pneg %p49
        $region54: #{_asp_score.1} parent=51 // pred_check_branch
          %410 = sbr.rel (%p408) target = $region56
        $region55: #{_asp_score.1} parent=51 // pred_region
          %412 = dma.done [#allocation6], 32
        $region56: #{_asp_score.1} parent=51 // pred_fallthru
          _
        // Predicated region
        $region57: #{_asp_score.1} parent=51 // pred_check
          %p413 = pneg %p91
        $region58: #{_asp_score.1} parent=51 // pred_check_branch
          %415 = sbr.rel (%p413) target = $region60
        $region59: #{_asp_score.1} parent=51 // pred_region
          %417 = dma.done [#allocation8], 1280
        $region60: #{_asp_score.1} parent=51 // pred_fallthru
          _
        %s418 = sand.u32 %s21, 1
        %s419 = scalar_lea.sflag [#allocation6], %s418
        %s420 = sand.u32 %s104, 1
        %s421 = smul.addr %s420, 192
        %s422 = scalar_lea.vmem [#allocation9], %s421
        // Predicated region
        $region61: #{_asp_score.1} parent=51 // pred_check
          %p423 = pneg %p117
        $region62: #{_asp_score.1} parent=51 // pred_check_branch
          %425 = sbr.rel (%p423) target = $region64
        $region63: #{_asp_score.1} parent=51 // pred_region
          %427 = dma.done %s419, 3072
        $region64: #{_asp_score.1} parent=51 // pred_fallthru
          _
        %s428 = sand.u32 %s21, 1
        %s429 = scalar_lea.sflag [#allocation6], %s428
        %s430 = sand.u32 %s158, 1
        %s431 = smul.addr %s430, 768
        %s432 = scalar_lea.vmem [#allocation10], %s431
        // Predicated region
        $region65: #{_asp_score.1} parent=51 // pred_check
          %p433 = pneg %p171
        $region66: #{_asp_score.1} parent=51 // pred_check_branch
          %435 = sbr.rel (%p433) target = $region68
        $region67: #{_asp_score.1} parent=51 // pred_region
          %437 = dma.done %s429, 12288
        $region68: #{_asp_score.1} parent=51 // pred_fallthru
          _
        %s438 = sand.u32 %s21, 1
        %s439 = scalar_lea.sflag [#allocation6], %s438
        %s440 = sand.u32 %s186, 1
        %s441 = smul.addr %s440, 768
        %s442 = scalar_lea.vmem [#allocation11], %s441
        // Predicated region
        $region69: #{_asp_score.1} parent=51 // pred_check
          %p443 = pneg %p199
        $region70: #{_asp_score.1} parent=51 // pred_check_branch
          %445 = sbr.rel (%p443) target = $region72
        $region71: #{_asp_score.1} parent=51 // pred_region
          %447 = dma.done %s439, 12288
        $region72: #{_asp_score.1} parent=51 // pred_fallthru
          _
        %s448 = sand.u32 %s21, 1
        %s449 = scalar_lea.sflag [#allocation6], %s448
        %s450 = sand.u32 %s214, 1
        %s451 = smul.addr %s450, 4
        %s452 = scalar_lea.vmem [#allocation12], %s451
        // Predicated region
        $region73: #{_asp_score.1} parent=51 // pred_check
          %p453 = pneg %p227
        $region74: #{_asp_score.1} parent=51 // pred_check_branch
          %455 = sbr.rel (%p453) target = $region76
        $region75: #{_asp_score.1} parent=51 // pred_region
          %457 = dma.done %s449, 64
        $region76: #{_asp_score.1} parent=51 // pred_fallthru
          _
        %p458 = pneg %p49
        %p459 = pneg %p46
        %p460 = pneg %p70
        %p461 = pneg %p67
        %p462 = pneg %p91
        %p463 = pneg %p88
        %s464 = sand.u32 %s21, 1
        %s465 = scalar_lea.sflag [#allocation6], %s464
        %s466 = sand.u32 %s104, 1
        %s467 = smul.addr %s466, 192
        %s468 = scalar_lea.vmem [#allocation9], %s467
        %p469 = pneg %p117
        %p470 = pneg %p114
        %p471 = scmp.lt.s32.totalorder %s25, 1
        %s472 = scalar_select %p471, %s25, 1
        %s473 = smul.addr %s472, 6
        %s474 = smul.addr %s473, 8
        %s475 = scalar_lea.vmem %s4, %s474
        %p476 = pneg %p143
        %p477 = pneg %p140
        %s478 = sand.u32 %s21, 1
        %s479 = scalar_lea.sflag [#allocation6], %s478
        %s480 = sand.u32 %s158, 1
        %s481 = smul.addr %s480, 768
        %s482 = scalar_lea.vmem [#allocation10], %s481
        %p483 = pneg %p171
        %p484 = pneg %p168
        %s485 = sand.u32 %s21, 1
        %s486 = scalar_lea.sflag [#allocation6], %s485
        %s487 = sand.u32 %s186, 1
        %s488 = smul.addr %s487, 768
        %s489 = scalar_lea.vmem [#allocation11], %s488
        %p490 = pneg %p199
        %p491 = pneg %p196
        %s492 = sand.u32 %s21, 1
        %s493 = scalar_lea.sflag [#allocation6], %s492
        %s494 = sand.u32 %s214, 1
        %s495 = smul.addr %s494, 4
        %s496 = scalar_lea.vmem [#allocation12], %s495
        %p497 = pneg %p227
        %p498 = pneg %p224
        %p499 = pneg %p253
        %p500 = pneg %p250
        %p501 = scmp.lt.s32.totalorder %s25, 1
        %s502 = scalar_select %p501, %s25, 1
        %s503 = smul.addr %s502, 2
        %s504 = scalar_lea.vmem %s8, %s503
        %p505 = scmp.lt.s32.totalorder %s25, 1
        %s506 = scalar_select %p505, %s25, 1
        %s507 = smul.addr %s506, 6
        %s508 = smul.addr %s507, 8
        %s509 = scalar_lea.vmem %s4, %s508
        %s510 = smul.u32 2, %s26
        %s511 = smul.u32 2, %s26
        %s512 = smul.u32 2, %s26
        %p513 = scmp.lt.s32.totalorder %s25, 1
        %s514 = scalar_select %p513, %s25, 1
        %s515 = smul.addr %s514, 2
        %s516 = scalar_lea.vmem %s8, %s515
        %p518 = scmp.eq.s32.totalorder %s26, 0
        // Predicated region
        $region77: #{_asp_score.1} parent=51 // pred_check
          %p519 = pneg %p518
        $region78: #{_asp_score.1} parent=51 // pred_check_branch
          %521 = sbr.rel (%p519) target = $region80
        $region79: #{_asp_score.1} parent=51 // pred_region
          %v522 = vld [vmem:[#allocation7] sm:$0xff]
          %v523 = vld [vmem:[#allocation7 + $0x8] sm:$0xff]
          %v524 = vld [vmem:[#allocation7 + $0x10] sm:$0xff]
          %v525 = vld [vmem:[#allocation7 + $0x18] sm:$0xff]
          %v526 = vld [vmem:[#allocation7 + $0x20] sm:$0xff]
          %v527 = vld [vmem:[#allocation7 + $0x28] sm:$0xff]
          %v528 = vld [vmem:[#allocation7 + $0x30] sm:$0xff]
          %v529 = vld [vmem:[#allocation7 + $0x38] sm:$0xff]
          %v530 = vld [vmem:[#allocation7 + $0x40] sm:$0xff]
          %v531 = vld [vmem:[#allocation7 + $0x48] sm:$0xff]
          %v532 = vld [vmem:[%s1] sm:$0xff]
          %v533 = vld [vmem:[%s1 + $0x8] sm:$0xff]
          %vm534 = vcmask 261120
          %v535 = vsel %vm534, %v532, 0.0
          %536 = vadd.xlane.f32.xlu0 %v535
          %v537 = vpop.xlane.xlu0 %536
          %v538 = vsel %vm534, %v533, 0.0
          %539 = vadd.xlane.f32.xlu0 %v538
          %v540 = vpop.xlane.xlu0 %539
          %v541 = vrcp.pop 32.0
          %v542 = vmul.f32 32.0, %v541
          %v543 = vsub.f32 1.0, %v542
          %v544 = vmul.f32 %v541, %v543
          %v545 = vadd.f32 %v541, %v544
          %vm546 = vweird.f32 %v541
          %v547 = vsel %vm546, %v541, %v545
          %v548 = vmul.f32 %v537, %v547
          %v549 = vmul.f32 %v540, %v547
          %v550 = vsub.f32 %v532, %v548
          %v551 = vsub.f32 %v533, %v549
          %v552 = vmul.f32 %v550, %v550
          %v553 = vmul.f32 %v551, %v551
          %v554 = vsel %vm534, %v552, 0.0
          %555 = vadd.xlane.f32.xlu0 %v554
          %v556 = vpop.xlane.xlu0 %555
          %v557 = vsel %vm534, %v553, 0.0
          %558 = vadd.xlane.f32.xlu0 %v557
          %v559 = vpop.xlane.xlu0 %558
          %v560 = vmul.f32 %v556, %v547
          %v561 = vmul.f32 %v559, %v547
          %v562 = vadd.f32 %v560, 1e-05
          %v563 = vadd.f32 %v561, 1e-05
          %v564 = vrsqrt.pop %v562
          %v565 = vmul.f32 %v564, %v562
          %v566 = vmul.f32 %v565, %v564
          %v567 = vmul.f32 0.5, %v566
          %v568 = vsub.f32 1.5, %v567
          %v569 = vmul.f32 %v564, %v568
          %vm570 = vweird.f32 %v562
          %vm571 = vweird.f32 %v564
          %vm572 = vmor %vm570, %vm571
          %v573 = vsel %vm572, %v564, %v569
          %v574 = vrsqrt.pop %v563
          %v575 = vmul.f32 %v574, %v563
          %v576 = vmul.f32 %v575, %v574
          %v577 = vmul.f32 0.5, %v576
          %v578 = vsub.f32 1.5, %v577
          %v579 = vmul.f32 %v574, %v578
          %vm580 = vweird.f32 %v563
          %vm581 = vweird.f32 %v574
          %vm582 = vmor %vm580, %vm581
          %v583 = vsel %vm582, %v574, %v579
          %v584 = vmul.f32 %v550, %v573
          %v585 = vmul.f32 %v551, %v583
          %v586 = vperm.slane %v530, 1
          %v587 = vmul.f32 %v584, %v586
          %v588 = vmul.f32 %v585, %v586
          %v589 = vperm.slane %v530, 2
          %v590 = vadd.f32 %v587, %v589
          %v591 = vadd.f32 %v588, %v589
          %v592 = vperm.slane %v530, 0
          %v594 = vsel %vm534, %v590, 0
          %v597 = vsel %vm534, %v591, 0
          %599 = vmatpush.msra.mxu0 0.0
          %600 = vmatpush.msra.mxu0 0.0
          %601 = vmatpush.msra.mxu0 0.0
          %602 = vmatpush.msra.mxu0 0.0
          %603 = vmatpush.msra.mxu0 0.0
          %604 = vmatpush.msra.mxu0 0.0
          %605 = vmatpush.msra.mxu0 0.0
          %606 = vmatpush.msra.mxu0 0.0
          %607 = vmatpush.msra.mxu0 0.0
          %608 = vmatpush.msra.mxu0 0.0
          %609 = vmatpush.msra.mxu0 0.0
          %610 = vmatpush.msra.mxu0 0.0
          %611 = vmatpush.msra.mxu0 %v528
          %612 = vmatpush.msra.mxu0 %v526
          %613 = vmatpush.msra.mxu0 %v524
          %614 = vmatpush.msra.mxu0 %v522
          %615 = vmatmul.f32.gmra.mxu0 %v594
          %v616 = vpop.f32.mrf.mxu0
          %v617 = vadd.f32 %v592, %v616
          %618 = vmatmul.f32.gmra.mxu0 %v597
          %v619 = vpop.f32.mrf.mxu0
          %v620 = vadd.f32 %v592, %v619
          %621 = vdwg.mxu0
          %v622 = vmul.f32 %v617, 0.35355338
          %v623 = vmul.f32 %v620, 0.35355338
          %626 = vrot.lane.b32.xlu0 %v617, 96
          %v627 = vpop.permute.xlu0 %626
          %628 = vrot.lane.b32.xlu0 %v620, 96
          %v629 = vpop.permute.xlu0 %628
          %vm630 = vcmask 64512
          %v632 = vsel %vm630, %v622, 0
          %v635 = vsel %vm630, %v623, 0
          %v637 = vsel %vm630, %v627, 0
          %v639 = vsel %vm630, %v629, 0
          %641 = vmatpush.xpose.msra.mxu0 0.0
          %642 = vmatpush.xpose.msra.mxu0 0.0
          %643 = vmatpush.xpose.msra.mxu0 0.0
          %644 = vmatpush.xpose.msra.mxu0 0.0
          %645 = vmatpush.xpose.msra.mxu0 0.0
          %646 = vmatpush.xpose.msra.mxu0 0.0
          %647 = vmatpush.xpose.msra.mxu0 0.0
          %648 = vmatpush.xpose.msra.mxu0 0.0
          %649 = vmatpush.xpose.msra.mxu0 0.0
          %650 = vmatpush.xpose.msra.mxu0 0.0
          %651 = vmatpush.xpose.msra.mxu0 0.0
          %652 = vmatpush.xpose.msra.mxu0 0.0
          %653 = vmatpush.xpose.msra.mxu0 0.0
          %654 = vmatpush.xpose.msra.mxu0 0.0
          %655 = vmatpush.xpose.msra.mxu0 %v639
          %656 = vmatpush.xpose.msra.mxu0 %v637
          %657 = vmatmul.f32.gmra.mxu0 %v632
          %v658 = vpop.f32.mrf.mxu0
          %v659 = vadd.f32 0.0, %v658
          %660 = vmatmul.f32.gmra.mxu0 %v635
          %v661 = vpop.f32.mrf.mxu0
          %v662 = vadd.f32 0.0, %v661
          %663 = vdwg.mxu0
          %vm664 = vcmask 130048
          %v665 = vsel %vm664, %v659, -inf
          %666 = vmax.xlane.f32.xlu0 %v665
          %v667 = vpop.xlane.xlu0 %666
          %v668 = vsel %vm664, %v662, -inf
          %669 = vmax.xlane.f32.xlu0 %v668
          %v670 = vpop.xlane.xlu0 %669
          %v671 = vsub.f32 %v659, %v667
          %v672 = vsub.f32 %v662, %v670
          %v673 = vmul.f32 %v671, 1.442695
          %v674 = vpow.pop %v673
          %v675 = vmul.f32 %v672, 1.442695
          %v676 = vpow.pop %v675
          %v677 = vsel %vm664, %v674, 0.0
          %678 = vadd.xlane.f32.xlu0 %v677
          %v679 = vpop.xlane.xlu0 %678
          %v680 = vsel %vm664, %v676, 0.0
          %681 = vadd.xlane.f32.xlu0 %v680
          %v682 = vpop.xlane.xlu0 %681
          %v683 = vrcp.pop %v679
          %v684 = vmul.f32 %v679, %v683
          %v685 = vsub.f32 1.0, %v684
          %v686 = vmul.f32 %v683, %v685
          %v687 = vadd.f32 %v683, %v686
          %vm688 = vweird.f32 %v679
          %vm689 = vweird.f32 %v683
          %vm690 = vmor %vm688, %vm689
          %v691 = vsel %vm690, %v683, %v687
          %v692 = vand.u32 2147483647, %v679
          %vm693 = vcmp.eq.f32.partialorder %v692, 8.507059e+37
          %v694 = vand.u32 %v679, 2147483648
          %v695 = vor.u32 1.1754944e-38, %v694
          %v696 = vsel %vm693, %v695, %v691
          %v697 = vmul.f32 %v674, %v696
          %v698 = vrcp.pop %v682
          %v699 = vmul.f32 %v682, %v698
          %v700 = vsub.f32 1.0, %v699
          %v701 = vmul.f32 %v698, %v700
          %v702 = vadd.f32 %v698, %v701
          %vm703 = vweird.f32 %v682
          %vm704 = vweird.f32 %v698
          %vm705 = vmor %vm703, %vm704
          %v706 = vsel %vm705, %v698, %v702
          %v707 = vand.u32 2147483647, %v682
          %vm708 = vcmp.eq.f32.partialorder %v707, 8.507059e+37
          %v709 = vand.u32 %v682, 2147483648
          %v710 = vor.u32 1.1754944e-38, %v709
          %v711 = vsel %vm708, %v710, %v706
          %v712 = vmul.f32 %v676, %v711
          %713 = vrot.lane.b32.xlu0 %v617, 64
          %v714 = vpop.permute.xlu0 %713
          %715 = vrot.lane.b32.xlu0 %v620, 64
          %v716 = vpop.permute.xlu0 %715
          %v720 = vsel %vm664, %v697, 0
          %v723 = vsel %vm664, %v712, 0
          %725 = vmatpush.msra.mxu0 0.0
          %726 = vmatpush.msra.mxu0 0.0
          %727 = vmatpush.msra.mxu0 0.0
          %728 = vmatpush.msra.mxu0 0.0
          %729 = vmatpush.msra.mxu0 0.0
          %730 = vmatpush.msra.mxu0 0.0
          %731 = vmatpush.msra.mxu0 0.0
          %732 = vmatpush.msra.mxu0 0.0
          %733 = vmatpush.msra.mxu0 0.0
          %734 = vmatpush.msra.mxu0 0.0
          %735 = vmatpush.msra.mxu0 0.0
          %736 = vmatpush.msra.mxu0 0.0
          %737 = vmatpush.msra.mxu0 0.0
          %738 = vmatpush.msra.mxu0 0.0
          %739 = vmatpush.msra.mxu0 %v716
          %740 = vmatpush.msra.mxu0 %v714
          %741 = vmatmul.f32.gmra.mxu0 %v720
          %v742 = vpop.f32.mrf.mxu0
          %v743 = vadd.f32 0.0, %v742
          %744 = vmatmul.f32.gmra.mxu0 %v723
          %v745 = vpop.f32.mrf.mxu0
          %v746 = vadd.f32 0.0, %v745
          %747 = vdwg.mxu0
          %748 = vst.msk [vmem:[#allocation2] sm:$0xff] %vm630, %v743
          %749 = vst.msk [vmem:[#allocation2 + $0x8] sm:$0xff] %vm630, %v746
          %750 = vrot.lane.b32.xlu0 %v622, 120
          %v751 = vpop.permute.xlu0 %750
          %752 = vrot.lane.b32.xlu0 %v623, 120
          %v753 = vpop.permute.xlu0 %752
          %754 = vrot.lane.b32.xlu0 %v617, 88
          %v755 = vpop.permute.xlu0 %754
          %756 = vrot.lane.b32.xlu0 %v620, 88
          %v757 = vpop.permute.xlu0 %756
          %v758 = vsel %vm630, %v751, 0
          %v760 = vsel %vm630, %v753, 0
          %v762 = vsel %vm630, %v755, 0
          %v764 = vsel %vm630, %v757, 0
          %766 = vmatpush.xpose.msra.mxu0 0.0
          %767 = vmatpush.xpose.msra.mxu0 0.0
          %768 = vmatpush.xpose.msra.mxu0 0.0
          %769 = vmatpush.xpose.msra.mxu0 0.0
          %770 = vmatpush.xpose.msra.mxu0 0.0
          %771 = vmatpush.xpose.msra.mxu0 0.0
          %772 = vmatpush.xpose.msra.mxu0 0.0
          %773 = vmatpush.xpose.msra.mxu0 0.0
          %774 = vmatpush.xpose.msra.mxu0 0.0
          %775 = vmatpush.xpose.msra.mxu0 0.0
          %776 = vmatpush.xpose.msra.mxu0 0.0
          %777 = vmatpush.xpose.msra.mxu0 0.0
          %778 = vmatpush.xpose.msra.mxu0 0.0
          %779 = vmatpush.xpose.msra.mxu0 0.0
          %780 = vmatpush.xpose.msra.mxu0 %v764
          %781 = vmatpush.xpose.msra.mxu0 %v762
          %782 = vmatmul.f32.gmra.mxu0 %v758
          %v783 = vpop.f32.mrf.mxu0
          %v784 = vadd.f32 0.0, %v783
          %785 = vmatmul.f32.gmra.mxu0 %v760
          %v786 = vpop.f32.mrf.mxu0
          %v787 = vadd.f32 0.0, %v786
          %788 = vdwg.mxu0
          %v789 = vsel %vm664, %v784, -inf
          %790 = vmax.xlane.f32.xlu0 %v789
          %v791 = vpop.xlane.xlu0 %790
          %v792 = vsel %vm664, %v787, -inf
          %793 = vmax.xlane.f32.xlu0 %v792
          %v794 = vpop.xlane.xlu0 %793
          %v795 = vsub.f32 %v784, %v791
          %v796 = vsub.f32 %v787, %v794
          %v797 = vmul.f32 %v795, 1.442695
          %v798 = vpow.pop %v797
          %v799 = vmul.f32 %v796, 1.442695
          %v800 = vpow.pop %v799
          %v801 = vsel %vm664, %v798, 0.0
          %802 = vadd.xlane.f32.xlu0 %v801
          %v803 = vpop.xlane.xlu0 %802
          %v804 = vsel %vm664, %v800, 0.0
          %805 = vadd.xlane.f32.xlu0 %v804
          %v806 = vpop.xlane.xlu0 %805
          %v807 = vrcp.pop %v803
          %v808 = vmul.f32 %v803, %v807
          %v809 = vsub.f32 1.0, %v808
          %v810 = vmul.f32 %v807, %v809
          %v811 = vadd.f32 %v807, %v810
          %vm812 = vweird.f32 %v803
          %vm813 = vweird.f32 %v807
          %vm814 = vmor %vm812, %vm813
          %v815 = vsel %vm814, %v807, %v811
          %v816 = vand.u32 2147483647, %v803
          %vm817 = vcmp.eq.f32.partialorder %v816, 8.507059e+37
          %v818 = vand.u32 %v803, 2147483648
          %v819 = vor.u32 1.1754944e-38, %v818
          %v820 = vsel %vm817, %v819, %v815
          %v821 = vmul.f32 %v798, %v820
          %v822 = vrcp.pop %v806
          %v823 = vmul.f32 %v806, %v822
          %v824 = vsub.f32 1.0, %v823
          %v825 = vmul.f32 %v822, %v824
          %v826 = vadd.f32 %v822, %v825
          %vm827 = vweird.f32 %v806
          %vm828 = vweird.f32 %v822
          %vm829 = vmor %vm827, %vm828
          %v830 = vsel %vm829, %v822, %v826
          %v831 = vand.u32 2147483647, %v806
          %vm832 = vcmp.eq.f32.partialorder %v831, 8.507059e+37
          %v833 = vand.u32 %v806, 2147483648
          %v834 = vor.u32 1.1754944e-38, %v833
          %v835 = vsel %vm832, %v834, %v830
          %v836 = vmul.f32 %v800, %v835
          %837 = vrot.lane.b32.xlu0 %v617, 56
          %v838 = vpop.permute.xlu0 %837
          %839 = vrot.lane.b32.xlu0 %v620, 56
          %v840 = vpop.permute.xlu0 %839
          %v844 = vsel %vm664, %v821, 0
          %v847 = vsel %vm664, %v836, 0
          %849 = vmatpush.msra.mxu0 0.0
          %850 = vmatpush.msra.mxu0 0.0
          %851 = vmatpush.msra.mxu0 0.0
          %852 = vmatpush.msra.mxu0 0.0
          %853 = vmatpush.msra.mxu0 0.0
          %854 = vmatpush.msra.mxu0 0.0
          %855 = vmatpush.msra.mxu0 0.0
          %856 = vmatpush.msra.mxu0 0.0
          %857 = vmatpush.msra.mxu0 0.0
          %858 = vmatpush.msra.mxu0 0.0
          %859 = vmatpush.msra.mxu0 0.0
          %860 = vmatpush.msra.mxu0 0.0
          %861 = vmatpush.msra.mxu0 0.0
          %862 = vmatpush.msra.mxu0 0.0
          %863 = vmatpush.msra.mxu0 %v840
          %864 = vmatpush.msra.mxu0 %v838
          %865 = vmatmul.f32.gmra.mxu0 %v844
          %v866 = vpop.f32.mrf.mxu0
          %v867 = vadd.f32 0.0, %v866
          %868 = vmatmul.f32.gmra.mxu0 %v847
          %v869 = vpop.f32.mrf.mxu0
          %v870 = vadd.f32 0.0, %v869
          %871 = vdwg.mxu0
          %874 = vrot.lane.b32.xlu0 %v867, 8
          %v875 = vpop.permute.xlu0 %874
          %876 = vrot.lane.b32.xlu0 %v870, 8
          %v877 = vpop.permute.xlu0 %876
          %vm880 = vcmask 130112
          %881 = vst.msk [vmem:[#allocation2] sm:$0xff] %vm880, %v875
          %882 = vst.msk [vmem:[#allocation2 + $0x8] sm:$0xff] %vm880, %v877
          %883 = vrot.lane.b32.xlu0 %v622, 112
          %v884 = vpop.permute.xlu0 %883
          %885 = vrot.lane.b32.xlu0 %v623, 112
          %v886 = vpop.permute.xlu0 %885
          %887 = vrot.lane.b32.xlu0 %v617, 80
          %v888 = vpop.permute.xlu0 %887
          %889 = vrot.lane.b32.xlu0 %v620, 80
          %v890 = vpop.permute.xlu0 %889
          %v891 = vsel %vm630, %v884, 0
          %v893 = vsel %vm630, %v886, 0
          %v895 = vsel %vm630, %v888, 0
          %v897 = vsel %vm630, %v890, 0
          %899 = vmatpush.xpose.msra.mxu0 0.0
          %900 = vmatpush.xpose.msra.mxu0 0.0
          %901 = vmatpush.xpose.msra.mxu0 0.0
          %902 = vmatpush.xpose.msra.mxu0 0.0
          %903 = vmatpush.xpose.msra.mxu0 0.0
          %904 = vmatpush.xpose.msra.mxu0 0.0
          %905 = vmatpush.xpose.msra.mxu0 0.0
          %906 = vmatpush.xpose.msra.mxu0 0.0
          %907 = vmatpush.xpose.msra.mxu0 0.0
          %908 = vmatpush.xpose.msra.mxu0 0.0
          %909 = vmatpush.xpose.msra.mxu0 0.0
          %910 = vmatpush.xpose.msra.mxu0 0.0
          %911 = vmatpush.xpose.msra.mxu0 0.0
          %912 = vmatpush.xpose.msra.mxu0 0.0
          %913 = vmatpush.xpose.msra.mxu0 %v897
          %914 = vmatpush.xpose.msra.mxu0 %v895
          %915 = vmatmul.f32.gmra.mxu0 %v891
          %v916 = vpop.f32.mrf.mxu0
          %v917 = vadd.f32 0.0, %v916
          %918 = vmatmul.f32.gmra.mxu0 %v893
          %v919 = vpop.f32.mrf.mxu0
          %v920 = vadd.f32 0.0, %v919
          %921 = vdwg.mxu0
          %v922 = vsel %vm664, %v917, -inf
          %923 = vmax.xlane.f32.xlu0 %v922
          %v924 = vpop.xlane.xlu0 %923
          %v925 = vsel %vm664, %v920, -inf
          %926 = vmax.xlane.f32.xlu0 %v925
          %v927 = vpop.xlane.xlu0 %926
          %v928 = vsub.f32 %v917, %v924
          %v929 = vsub.f32 %v920, %v927
          %v930 = vmul.f32 %v928, 1.442695
          %v931 = vpow.pop %v930
          %v932 = vmul.f32 %v929, 1.442695
          %v933 = vpow.pop %v932
          %v934 = vsel %vm664, %v931, 0.0
          %935 = vadd.xlane.f32.xlu0 %v934
          %v936 = vpop.xlane.xlu0 %935
          %v937 = vsel %vm664, %v933, 0.0
          %938 = vadd.xlane.f32.xlu0 %v937
          %v939 = vpop.xlane.xlu0 %938
          %v940 = vrcp.pop %v936
          %v941 = vmul.f32 %v936, %v940
          %v942 = vsub.f32 1.0, %v941
          %v943 = vmul.f32 %v940, %v942
          %v944 = vadd.f32 %v940, %v943
          %vm945 = vweird.f32 %v936
          %vm946 = vweird.f32 %v940
          %vm947 = vmor %vm945, %vm946
          %v948 = vsel %vm947, %v940, %v944
          %v949 = vand.u32 2147483647, %v936
          %vm950 = vcmp.eq.f32.partialorder %v949, 8.507059e+37
          %v951 = vand.u32 %v936, 2147483648
          %v952 = vor.u32 1.1754944e-38, %v951
          %v953 = vsel %vm950, %v952, %v948
          %v954 = vmul.f32 %v931, %v953
          %v955 = vrcp.pop %v939
          %v956 = vmul.f32 %v939, %v955
          %v957 = vsub.f32 1.0, %v956
          %v958 = vmul.f32 %v955, %v957
          %v959 = vadd.f32 %v955, %v958
          %vm960 = vweird.f32 %v939
          %vm961 = vweird.f32 %v955
          %vm962 = vmor %vm960, %vm961
          %v963 = vsel %vm962, %v955, %v959
          %v964 = vand.u32 2147483647, %v939
          %vm965 = vcmp.eq.f32.partialorder %v964, 8.507059e+37
          %v966 = vand.u32 %v939, 2147483648
          %v967 = vor.u32 1.1754944e-38, %v966
          %v968 = vsel %vm965, %v967, %v963
          %v969 = vmul.f32 %v933, %v968
          %970 = vrot.lane.b32.xlu0 %v617, 48
          %v971 = vpop.permute.xlu0 %970
          %972 = vrot.lane.b32.xlu0 %v620, 48
          %v973 = vpop.permute.xlu0 %972
          %v977 = vsel %vm664, %v954, 0
          %v980 = vsel %vm664, %v969, 0
          %982 = vmatpush.msra.mxu0 0.0
          %983 = vmatpush.msra.mxu0 0.0
          %984 = vmatpush.msra.mxu0 0.0
          %985 = vmatpush.msra.mxu0 0.0
          %986 = vmatpush.msra.mxu0 0.0
          %987 = vmatpush.msra.mxu0 0.0
          %988 = vmatpush.msra.mxu0 0.0
          %989 = vmatpush.msra.mxu0 0.0
          %990 = vmatpush.msra.mxu0 0.0
          %991 = vmatpush.msra.mxu0 0.0
          %992 = vmatpush.msra.mxu0 0.0
          %993 = vmatpush.msra.mxu0 0.0
          %994 = vmatpush.msra.mxu0 0.0
          %995 = vmatpush.msra.mxu0 0.0
          %996 = vmatpush.msra.mxu0 %v973
          %997 = vmatpush.msra.mxu0 %v971
          %998 = vmatmul.f32.gmra.mxu0 %v977
          %v999 = vpop.f32.mrf.mxu0
          %v1000 = vadd.f32 0.0, %v999
          %1001 = vmatmul.f32.gmra.mxu0 %v980
          %v1002 = vpop.f32.mrf.mxu0
          %v1003 = vadd.f32 0.0, %v1002
          %1004 = vdwg.mxu0
          %1007 = vrot.lane.b32.xlu0 %v1000, 16
          %v1008 = vpop.permute.xlu0 %1007
          %1009 = vrot.lane.b32.xlu0 %v1003, 16
          %v1010 = vpop.permute.xlu0 %1009
          %vm1013 = vcmask 195712
          %1014 = vst.msk [vmem:[#allocation2] sm:$0xff] %vm1013, %v1008
          %1015 = vst.msk [vmem:[#allocation2 + $0x8] sm:$0xff] %vm1013, %v1010
          %1016 = vrot.lane.b32.xlu0 %v622, 104
          %v1017 = vpop.permute.xlu0 %1016
          %1018 = vrot.lane.b32.xlu0 %v623, 104
          %v1019 = vpop.permute.xlu0 %1018
          %1020 = vrot.lane.b32.xlu0 %v617, 72
          %v1021 = vpop.permute.xlu0 %1020
          %1022 = vrot.lane.b32.xlu0 %v620, 72
          %v1023 = vpop.permute.xlu0 %1022
          %v1024 = vsel %vm630, %v1017, 0
          %v1026 = vsel %vm630, %v1019, 0
          %v1028 = vsel %vm630, %v1021, 0
          %v1030 = vsel %vm630, %v1023, 0
          %1032 = vmatpush.xpose.msra.mxu0 0.0
          %1033 = vmatpush.xpose.msra.mxu0 0.0
          %1034 = vmatpush.xpose.msra.mxu0 0.0
          %1035 = vmatpush.xpose.msra.mxu0 0.0
          %1036 = vmatpush.xpose.msra.mxu0 0.0
          %1037 = vmatpush.xpose.msra.mxu0 0.0
          %1038 = vmatpush.xpose.msra.mxu0 0.0
          %1039 = vmatpush.xpose.msra.mxu0 0.0
          %1040 = vmatpush.xpose.msra.mxu0 0.0
          %1041 = vmatpush.xpose.msra.mxu0 0.0
          %1042 = vmatpush.xpose.msra.mxu0 0.0
          %1043 = vmatpush.xpose.msra.mxu0 0.0
          %1044 = vmatpush.xpose.msra.mxu0 0.0
          %1045 = vmatpush.xpose.msra.mxu0 0.0
          %1046 = vmatpush.xpose.msra.mxu0 %v1030
          %1047 = vmatpush.xpose.msra.mxu0 %v1028
          %1048 = vmatmul.f32.gmra.mxu0 %v1024
          %v1049 = vpop.f32.mrf.mxu0
          %v1050 = vadd.f32 0.0, %v1049
          %1051 = vmatmul.f32.gmra.mxu0 %v1026
          %v1052 = vpop.f32.mrf.mxu0
          %v1053 = vadd.f32 0.0, %v1052
          %1054 = vdwg.mxu0
          %v1055 = vsel %vm664, %v1050, -inf
          %1056 = vmax.xlane.f32.xlu0 %v1055
          %v1057 = vpop.xlane.xlu0 %1056
          %v1058 = vsel %vm664, %v1053, -inf
          %1059 = vmax.xlane.f32.xlu0 %v1058
          %v1060 = vpop.xlane.xlu0 %1059
          %v1061 = vsub.f32 %v1050, %v1057
          %v1062 = vsub.f32 %v1053, %v1060
          %v1063 = vmul.f32 %v1061, 1.442695
          %v1064 = vpow.pop %v1063
          %v1065 = vmul.f32 %v1062, 1.442695
          %v1066 = vpow.pop %v1065
          %v1067 = vsel %vm664, %v1064, 0.0
          %1068 = vadd.xlane.f32.xlu0 %v1067
          %v1069 = vpop.xlane.xlu0 %1068
          %v1070 = vsel %vm664, %v1066, 0.0
          %1071 = vadd.xlane.f32.xlu0 %v1070
          %v1072 = vpop.xlane.xlu0 %1071
          %v1073 = vrcp.pop %v1069
          %v1074 = vmul.f32 %v1069, %v1073
          %v1075 = vsub.f32 1.0, %v1074
          %v1076 = vmul.f32 %v1073, %v1075
          %v1077 = vadd.f32 %v1073, %v1076
          %vm1078 = vweird.f32 %v1069
          %vm1079 = vweird.f32 %v1073
          %vm1080 = vmor %vm1078, %vm1079
          %v1081 = vsel %vm1080, %v1073, %v1077
          %v1082 = vand.u32 2147483647, %v1069
          %vm1083 = vcmp.eq.f32.partialorder %v1082, 8.507059e+37
          %v1084 = vand.u32 %v1069, 2147483648
          %v1085 = vor.u32 1.1754944e-38, %v1084
          %v1086 = vsel %vm1083, %v1085, %v1081
          %v1087 = vmul.f32 %v1064, %v1086
          %v1088 = vrcp.pop %v1072
          %v1089 = vmul.f32 %v1072, %v1088
          %v1090 = vsub.f32 1.0, %v1089
          %v1091 = vmul.f32 %v1088, %v1090
          %v1092 = vadd.f32 %v1088, %v1091
          %vm1093 = vweird.f32 %v1072
          %vm1094 = vweird.f32 %v1088
          %vm1095 = vmor %vm1093, %vm1094
          %v1096 = vsel %vm1095, %v1088, %v1092
          %v1097 = vand.u32 2147483647, %v1072
          %vm1098 = vcmp.eq.f32.partialorder %v1097, 8.507059e+37
          %v1099 = vand.u32 %v1072, 2147483648
          %v1100 = vor.u32 1.1754944e-38, %v1099
          %v1101 = vsel %vm1098, %v1100, %v1096
          %v1102 = vmul.f32 %v1066, %v1101
          %1103 = vrot.lane.b32.xlu0 %v617, 40
          %v1104 = vpop.permute.xlu0 %1103
          %1105 = vrot.lane.b32.xlu0 %v620, 40
          %v1106 = vpop.permute.xlu0 %1105
          %v1110 = vsel %vm664, %v1087, 0
          %v1113 = vsel %vm664, %v1102, 0
          %1115 = vmatpush.msra.mxu0 0.0
          %1116 = vmatpush.msra.mxu0 0.0
          %1117 = vmatpush.msra.mxu0 0.0
          %1118 = vmatpush.msra.mxu0 0.0
          %1119 = vmatpush.msra.mxu0 0.0
          %1120 = vmatpush.msra.mxu0 0.0
          %1121 = vmatpush.msra.mxu0 0.0
          %1122 = vmatpush.msra.mxu0 0.0
          %1123 = vmatpush.msra.mxu0 0.0
          %1124 = vmatpush.msra.mxu0 0.0
          %1125 = vmatpush.msra.mxu0 0.0
          %1126 = vmatpush.msra.mxu0 0.0
          %1127 = vmatpush.msra.mxu0 0.0
          %1128 = vmatpush.msra.mxu0 0.0
          %1129 = vmatpush.msra.mxu0 %v1106
          %1130 = vmatpush.msra.mxu0 %v1104
          %1131 = vmatmul.f32.gmra.mxu0 %v1110
          %v1132 = vpop.f32.mrf.mxu0
          %v1133 = vadd.f32 0.0, %v1132
          %1134 = vmatmul.f32.gmra.mxu0 %v1113
          %v1135 = vpop.f32.mrf.mxu0
          %v1136 = vadd.f32 0.0, %v1135
          %1137 = vdwg.mxu0
          %1140 = vrot.lane.b32.xlu0 %v1133, 24
          %v1141 = vpop.permute.xlu0 %1140
          %1142 = vrot.lane.b32.xlu0 %v1136, 24
          %v1143 = vpop.permute.xlu0 %1142
          %vm1146 = vcmask 261312
          %1147 = vst.msk [vmem:[#allocation2] sm:$0xff] %vm1146, %v1141
          %1148 = vst.msk [vmem:[#allocation2 + $0x8] sm:$0xff] %vm1146, %v1143
          %v1149 = vld [vmem:[#allocation2] sm:$0xff]
          %v1150 = vld [vmem:[#allocation2 + $0x8] sm:$0xff]
          %1155 = vrot.lane.b32.xlu0 %v522, 32
          %v1156 = vpop.permute.xlu0 %1155
          %1157 = vrot.lane.b32.xlu0 %v524, 32
          %v1158 = vpop.permute.xlu0 %1157
          %1159 = vrot.lane.b32.xlu0 %v526, 32
          %v1160 = vpop.permute.xlu0 %1159
          %1161 = vrot.lane.b32.xlu0 %v528, 32
          %v1162 = vpop.permute.xlu0 %1161
          %1168 = vrot.lane.b32.xlu0 %v592, 32
          %v1169 = vpop.permute.xlu0 %1168
          %v1172 = vsel %vm534, %v1149, 0
          %v1175 = vsel %vm534, %v1150, 0
          %1177 = vmatpush.msra.mxu0 0.0
          %1178 = vmatpush.msra.mxu0 0.0
          %1179 = vmatpush.msra.mxu0 0.0
          %1180 = vmatpush.msra.mxu0 0.0
          %1181 = vmatpush.msra.mxu0 0.0
          %1182 = vmatpush.msra.mxu0 0.0
          %1183 = vmatpush.msra.mxu0 0.0
          %1184 = vmatpush.msra.mxu0 0.0
          %1185 = vmatpush.msra.mxu0 0.0
          %1186 = vmatpush.msra.mxu0 0.0
          %1187 = vmatpush.msra.mxu0 0.0
          %1188 = vmatpush.msra.mxu0 0.0
          %1189 = vmatpush.msra.mxu0 %v1162
          %1190 = vmatpush.msra.mxu0 %v1160
          %1191 = vmatpush.msra.mxu0 %v1158
          %1192 = vmatpush.msra.mxu0 %v1156
          %1193 = vmatmul.f32.gmra.mxu0 %v1172
          %v1194 = vpop.f32.mrf.mxu0
          %v1195 = vadd.f32 %v1169, %v1194
          %1196 = vmatmul.f32.gmra.mxu0 %v1175
          %v1197 = vpop.f32.mrf.mxu0
          %v1198 = vadd.f32 %v1169, %v1197
          %1199 = vdwg.mxu0
          %v1200 = vadd.f32 %v590, %v1195
          %v1201 = vadd.f32 %v591, %v1198
          %v1202 = vsel %vm534, %v1200, 0.0
          %1203 = vadd.xlane.f32.xlu0 %v1202
          %v1204 = vpop.xlane.xlu0 %1203
          %v1205 = vsel %vm534, %v1201, 0.0
          %1206 = vadd.xlane.f32.xlu0 %v1205
          %v1207 = vpop.xlane.xlu0 %1206
          %v1208 = vmul.f32 %v1204, %v547
          %v1209 = vmul.f32 %v1207, %v547
          %v1210 = vsub.f32 %v1200, %v1208
          %v1211 = vsub.f32 %v1201, %v1209
          %v1212 = vmul.f32 %v1210, %v1210
          %v1213 = vmul.f32 %v1211, %v1211
          %v1214 = vsel %vm534, %v1212, 0.0
          %1215 = vadd.xlane.f32.xlu0 %v1214
          %v1216 = vpop.xlane.xlu0 %1215
          %v1217 = vsel %vm534, %v1213, 0.0
          %1218 = vadd.xlane.f32.xlu0 %v1217
          %v1219 = vpop.xlane.xlu0 %1218
          %v1220 = vmul.f32 %v1216, %v547
          %v1221 = vmul.f32 %v1219, %v547
          %v1222 = vadd.f32 %v1220, 1e-05
          %v1223 = vadd.f32 %v1221, 1e-05
          %v1224 = vrsqrt.pop %v1222
          %v1225 = vmul.f32 %v1224, %v1222
          %v1226 = vmul.f32 %v1225, %v1224
          %v1227 = vmul.f32 0.5, %v1226
          %v1228 = vsub.f32 1.5, %v1227
          %v1229 = vmul.f32 %v1224, %v1228
          %vm1230 = vweird.f32 %v1222
          %vm1231 = vweird.f32 %v1224
          %vm1232 = vmor %vm1230, %vm1231
          %v1233 = vsel %vm1232, %v1224, %v1229
          %v1234 = vrsqrt.pop %v1223
          %v1235 = vmul.f32 %v1234, %v1223
          %v1236 = vmul.f32 %v1235, %v1234
          %v1237 = vmul.f32 0.5, %v1236
          %v1238 = vsub.f32 1.5, %v1237
          %v1239 = vmul.f32 %v1234, %v1238
          %vm1240 = vweird.f32 %v1223
          %vm1241 = vweird.f32 %v1234
          %vm1242 = vmor %vm1240, %vm1241
          %v1243 = vsel %vm1242, %v1234, %v1239
          %v1244 = vmul.f32 %v1210, %v1233
          %v1245 = vmul.f32 %v1211, %v1243
          %v1246 = vperm.slane %v530, 3
          %v1247 = vmul.f32 %v1244, %v1246
          %v1248 = vmul.f32 %v1245, %v1246
          %v1249 = vperm.slane %v530, 4
          %v1250 = vadd.f32 %v1247, %v1249
          %v1251 = vadd.f32 %v1248, %v1249
          %v1252 = vperm.slane %v531, 0
          %v1254 = vsel %vm534, %v1250, 0
          %v1257 = vsel %vm534, %v1251, 0
          %1259 = vmatpush.msra.mxu0 0.0
          %1260 = vmatpush.msra.mxu0 0.0
          %1261 = vmatpush.msra.mxu0 0.0
          %1262 = vmatpush.msra.mxu0 0.0
          %1263 = vmatpush.msra.mxu0 0.0
          %1264 = vmatpush.msra.mxu0 0.0
          %1265 = vmatpush.msra.mxu0 0.0
          %1266 = vmatpush.msra.mxu0 0.0
          %1267 = vmatpush.msra.mxu0 0.0
          %1268 = vmatpush.msra.mxu0 0.0
          %1269 = vmatpush.msra.mxu0 0.0
          %1270 = vmatpush.msra.mxu0 0.0
          %1271 = vmatpush.msra.mxu0 %v529
          %1272 = vmatpush.msra.mxu0 %v527
          %1273 = vmatpush.msra.mxu0 %v525
          %1274 = vmatpush.msra.mxu0 %v523
          %1275 = vmatmul.f32.gmra.mxu0 %v1254
          %v1276 = vpop.f32.mrf.mxu0
          %v1277 = vadd.f32 %v1252, %v1276
          %1278 = vmatmul.f32.gmra.mxu0 %v1257
          %v1279 = vpop.f32.mrf.mxu0
          %v1280 = vadd.f32 %v1252, %v1279
          %1281 = vdwg.mxu0
          %v1282 = vmax.f32 %v1277, 0.0
          %v1283 = vmax.f32 %v1280, 0.0
          %v1284 = vadd.f32 %v1250, %v1282
          %v1285 = vadd.f32 %v1251, %v1283
          %v1286 = vsel %vm534, %v1284, 0.0
          %1287 = vadd.xlane.f32.xlu0 %v1286
          %v1288 = vpop.xlane.xlu0 %1287
          %v1289 = vsel %vm534, %v1285, 0.0
          %1290 = vadd.xlane.f32.xlu0 %v1289
          %v1291 = vpop.xlane.xlu0 %1290
          %v1292 = vmul.f32 %v1288, %v547
          %v1293 = vmul.f32 %v1291, %v547
          %v1294 = vsub.f32 %v1284, %v1292
          %v1295 = vsub.f32 %v1285, %v1293
          %v1296 = vmul.f32 %v1294, %v1294
          %v1297 = vmul.f32 %v1295, %v1295
          %v1298 = vsel %vm534, %v1296, 0.0
          %1299 = vadd.xlane.f32.xlu0 %v1298
          %v1300 = vpop.xlane.xlu0 %1299
          %v1301 = vsel %vm534, %v1297, 0.0
          %1302 = vadd.xlane.f32.xlu0 %v1301
          %v1303 = vpop.xlane.xlu0 %1302
          %v1304 = vmul.f32 %v1300, %v547
          %v1305 = vmul.f32 %v1303, %v547
          %v1306 = vadd.f32 %v1304, 1e-05
          %v1307 = vadd.f32 %v1305, 1e-05
          %v1308 = vrsqrt.pop %v1306
          %v1309 = vmul.f32 %v1308, %v1306
          %v1310 = vmul.f32 %v1309, %v1308
          %v1311 = vmul.f32 0.5, %v1310
          %v1312 = vsub.f32 1.5, %v1311
          %v1313 = vmul.f32 %v1308, %v1312
          %vm1314 = vweird.f32 %v1306
          %vm1315 = vweird.f32 %v1308
          %vm1316 = vmor %vm1314, %vm1315
          %v1317 = vsel %vm1316, %v1308, %v1313
          %v1318 = vrsqrt.pop %v1307
          %v1319 = vmul.f32 %v1318, %v1307
          %v1320 = vmul.f32 %v1319, %v1318
          %v1321 = vmul.f32 0.5, %v1320
          %v1322 = vsub.f32 1.5, %v1321
          %v1323 = vmul.f32 %v1318, %v1322
          %vm1324 = vweird.f32 %v1307
          %vm1325 = vweird.f32 %v1318
          %vm1326 = vmor %vm1324, %vm1325
          %v1327 = vsel %vm1326, %v1318, %v1323
          %v1328 = vmul.f32 %v1294, %v1317
          %v1329 = vmul.f32 %v1295, %v1327
          %v1330 = vperm.slane %v530, 5
          %v1331 = vmul.f32 %v1328, %v1330
          %v1332 = vmul.f32 %v1329, %v1330
          %v1333 = vperm.slane %v530, 6
          %v1334 = vadd.f32 %v1331, %v1333
          %v1335 = vadd.f32 %v1332, %v1333
          %v1336 = vld [vmem:[%s422] sm:$0xff]
          %v1337 = vld [vmem:[%s422 + $0x8] sm:$0xff]
          %v1338 = vld [vmem:[%s422 + $0x10] sm:$0xff]
          %v1339 = vld [vmem:[%s422 + $0x18] sm:$0xff]
          %v1340 = vld [vmem:[%s422 + $0x20] sm:$0xff]
          %v1341 = vld [vmem:[%s422 + $0x28] sm:$0xff]
          %v1342 = vld [vmem:[%s422 + $0x30] sm:$0xff]
          %v1343 = vld [vmem:[%s422 + $0x38] sm:$0xff]
          %v1344 = vld [vmem:[%s422 + $0x40] sm:$0xff]
          %v1345 = vld [vmem:[%s422 + $0x48] sm:$0xff]
          %v1346 = vld [vmem:[%s422 + $0x50] sm:$0xff]
          %v1347 = vld [vmem:[%s422 + $0x58] sm:$0xff]
          %v1348 = vld [vmem:[%s422 + $0x60] sm:$0xff]
          %v1349 = vld [vmem:[%s422 + $0x68] sm:$0xff]
          %v1350 = vld [vmem:[%s422 + $0x70] sm:$0xff]
          %v1351 = vld [vmem:[%s422 + $0x78] sm:$0xff]
          %v1352 = vld [vmem:[%s422 + $0x80] sm:$0xff]
          %v1353 = vld [vmem:[%s422 + $0x88] sm:$0xff]
          %v1354 = vld [vmem:[%s422 + $0x90] sm:$0xff]
          %v1355 = vld [vmem:[%s422 + $0x98] sm:$0xff]
          %v1356 = vld [vmem:[%s422 + $0xa0] sm:$0xff]
          %v1357 = vld [vmem:[%s422 + $0xa8] sm:$0xff]
          %v1358 = vld [vmem:[%s422 + $0xb0] sm:$0xff]
          %v1359 = vld [vmem:[%s422 + $0xb8] sm:$0xff]
          %v1360 = vld [vmem:[%s509] sm:$0x3f]
          %v1361 = vld [vmem:[%s509 + $0x8] sm:$0x3f]
          %v1362 = vld [vmem:[%s509 + $0x10] sm:$0x3f]
          %v1363 = vld [vmem:[%s509 + $0x18] sm:$0x3f]
          %v1364 = vld [vmem:[%s509 + $0x20] sm:$0x3f]
          %v1365 = vld [vmem:[%s509 + $0x28] sm:$0x3f]
          %v1366 = vld [vmem:[#allocation5] sm:$0x3]
          %v1367 = vpack.c.bf16 %v1366, %v1366
          %v1368 = vperm.slane %v1360, 0
          %v1369 = vperm.slane %v1361, 0
          %v1370 = vperm.slane %v1362, 0
          %v1371 = vperm.slane %v1363, 0
          %v1372 = vperm.slane %v1364, 0
          %v1373 = vperm.slane %v1365, 0
          %v1386 = vunpack.c.l.b16 %v1336
          %v1387 = vunpack.c.h.b16 %v1336
          %v1388 = vunpack.c.l.b16 %v1337
          %v1389 = vunpack.c.h.b16 %v1337
          %v1390 = vunpack.c.l.b16 %v1338
          %v1391 = vunpack.c.h.b16 %v1338
          %v1392 = vunpack.c.l.b16 %v1339
          %v1393 = vunpack.c.h.b16 %v1339
          %v1394 = vunpack.c.l.b16 %v1340
          %v1395 = vunpack.c.h.b16 %v1340
          %v1396 = vunpack.c.l.b16 %v1341
          %v1397 = vunpack.c.h.b16 %v1341
          %v1398 = vunpack.c.l.b16 %v1342
          %v1399 = vunpack.c.h.b16 %v1342
          %v1400 = vunpack.c.l.b16 %v1343
          %v1401 = vunpack.c.h.b16 %v1343
          %v1402 = vunpack.c.l.b16 %v1344
          %v1403 = vunpack.c.h.b16 %v1344
          %v1404 = vunpack.c.l.b16 %v1345
          %v1405 = vunpack.c.h.b16 %v1345
          %v1406 = vunpack.c.l.b16 %v1346
          %v1407 = vunpack.c.h.b16 %v1346
          %v1408 = vunpack.c.l.b16 %v1347
          %v1409 = vunpack.c.h.b16 %v1347
          %v1410 = vpack.c.b16 %v1392, %v1386
          %v1411 = vpack.c.b16 %v1393, %v1387
          %v1412 = vpack.c.b16 %v1394, %v1388
          %v1413 = vpack.c.b16 %v1395, %v1389
          %v1414 = vpack.c.b16 %v1396, %v1390
          %v1415 = vpack.c.b16 %v1397, %v1391
          %v1416 = vpack.c.b16 %v1404, %v1398
          %v1417 = vpack.c.b16 %v1405, %v1399
          %v1418 = vpack.c.b16 %v1406, %v1400
          %v1419 = vpack.c.b16 %v1407, %v1401
          %v1420 = vpack.c.b16 %v1408, %v1402
          %v1421 = vpack.c.b16 %v1409, %v1403
          %v1435 = vsel %vm534, %v1367, 0
          %1437 = vmatpush.bf16.msra.mxu0 0
          %1438 = vmatpush.bf16.msra.mxu0 0
          %1439 = vmatpush.bf16.msra.mxu0 0
          %1440 = vmatpush.bf16.msra.mxu0 0
          %1441 = vmatpush.bf16.msra.mxu0 0
          %1442 = vmatpush.bf16.msra.mxu0 0
          %1443 = vmatpush.bf16.msra.mxu0 %v1416
          %1444 = vmatpush.bf16.msra.mxu0 %v1410
          %1445 = vmatmul.bf16.gmra.mxu0 %v1435
          %v1446 = vpop.f32.mrf.mxu0
          %v1447 = vadd.f32 %v1368, %v1446
          %v1448 = vpop.f32.mrf.mxu0
          %1449 = vdwg.mxu0
          %1450 = vmatpush.bf16.msra.mxu0 0
          %1451 = vmatpush.bf16.msra.mxu0 0
          %1452 = vmatpush.bf16.msra.mxu0 0
          %1453 = vmatpush.bf16.msra.mxu0 0
          %1454 = vmatpush.bf16.msra.mxu0 0
          %1455 = vmatpush.bf16.msra.mxu0 0
          %1456 = vmatpush.bf16.msra.mxu0 %v1417
          %1457 = vmatpush.bf16.msra.mxu0 %v1411
          %1458 = vmatmul.bf16.gmra.mxu0 %v1435
          %v1459 = vpop.f32.mrf.mxu0
          %v1460 = vadd.f32 %v1369, %v1459
          %v1461 = vpop.f32.mrf.mxu0
          %1462 = vdwg.mxu0
          %1463 = vmatpush.bf16.msra.mxu0 0
          %1464 = vmatpush.bf16.msra.mxu0 0
          %1465 = vmatpush.bf16.msra.mxu0 0
          %1466 = vmatpush.bf16.msra.mxu0 0
          %1467 = vmatpush.bf16.msra.mxu0 0
          %1468 = vmatpush.bf16.msra.mxu0 0
          %1469 = vmatpush.bf16.msra.mxu0 %v1418
          %1470 = vmatpush.bf16.msra.mxu0 %v1412
          %1471 = vmatmul.bf16.gmra.mxu0 %v1435
          %v1472 = vpop.f32.mrf.mxu0
          %v1473 = vadd.f32 %v1370, %v1472
          %v1474 = vpop.f32.mrf.mxu0
          %1475 = vdwg.mxu0
          %1476 = vmatpush.bf16.msra.mxu0 0
          %1477 = vmatpush.bf16.msra.mxu0 0
          %1478 = vmatpush.bf16.msra.mxu0 0
          %1479 = vmatpush.bf16.msra.mxu0 0
          %1480 = vmatpush.bf16.msra.mxu0 0
          %1481 = vmatpush.bf16.msra.mxu0 0
          %1482 = vmatpush.bf16.msra.mxu0 %v1419
          %1483 = vmatpush.bf16.msra.mxu0 %v1413
          %1484 = vmatmul.bf16.gmra.mxu0 %v1435
          %v1485 = vpop.f32.mrf.mxu0
          %v1486 = vadd.f32 %v1371, %v1485
          %v1487 = vpop.f32.mrf.mxu0
          %1488 = vdwg.mxu0
          %1489 = vmatpush.bf16.msra.mxu0 0
          %1490 = vmatpush.bf16.msra.mxu0 0
          %1491 = vmatpush.bf16.msra.mxu0 0
          %1492 = vmatpush.bf16.msra.mxu0 0
          %1493 = vmatpush.bf16.msra.mxu0 0
          %1494 = vmatpush.bf16.msra.mxu0 0
          %1495 = vmatpush.bf16.msra.mxu0 %v1420
          %1496 = vmatpush.bf16.msra.mxu0 %v1414
          %1497 = vmatmul.bf16.gmra.mxu0 %v1435
          %v1498 = vpop.f32.mrf.mxu0
          %v1499 = vadd.f32 %v1372, %v1498
          %v1500 = vpop.f32.mrf.mxu0
          %1501 = vdwg.mxu0
          %1502 = vmatpush.bf16.msra.mxu0 0
          %1503 = vmatpush.bf16.msra.mxu0 0
          %1504 = vmatpush.bf16.msra.mxu0 0
          %1505 = vmatpush.bf16.msra.mxu0 0
          %1506 = vmatpush.bf16.msra.mxu0 0
          %1507 = vmatpush.bf16.msra.mxu0 0
          %1508 = vmatpush.bf16.msra.mxu0 %v1421
          %1509 = vmatpush.bf16.msra.mxu0 %v1415
          %1510 = vmatmul.bf16.gmra.mxu0 %v1435
          %v1511 = vpop.f32.mrf.mxu0
          %v1512 = vadd.f32 %v1373, %v1511
          %v1513 = vpop.f32.mrf.mxu0
          %1514 = vdwg.mxu0
          %vm1515 = vcmask 1041408
          %v1516 = vsel %vm1515, %v1447, 0.0
          %v1517 = vsel %vm1515, %v1460, 0.0
          %v1518 = vadd.f32 %v1516, %v1517
          %v1519 = vsel %vm1515, %v1473, 0.0
          %v1520 = vadd.f32 %v1518, %v1519
          %v1521 = vsel %vm1515, %v1486, 0.0
          %v1522 = vadd.f32 %v1520, %v1521
          %v1523 = vsel %vm1515, %v1499, 0.0
          %v1524 = vadd.f32 %v1522, %v1523
          %v1525 = vsel %vm1515, %v1512, 0.0
          %v1526 = vadd.f32 %v1524, %v1525
          %1527 = vadd.xlane.f32.xlu0 %v1526
          %v1528 = vpop.xlane.xlu0 %1527
          %v1529 = vrcp.pop 768.0
          %v1530 = vmul.f32 768.0, %v1529
          %v1531 = vsub.f32 1.0, %v1530
          %v1532 = vmul.f32 %v1529, %v1531
          %v1533 = vadd.f32 %v1529, %v1532
          %vm1534 = vweird.f32 %v1529
          %v1535 = vsel %vm1534, %v1529, %v1533
          %v1536 = vmul.f32 %v1528, %v1535
          %v1537 = vsub.f32 %v1447, %v1536
          %v1538 = vsub.f32 %v1460, %v1536
          %v1539 = vsub.f32 %v1473, %v1536
          %v1540 = vsub.f32 %v1486, %v1536
          %v1541 = vsub.f32 %v1499, %v1536
          %v1542 = vsub.f32 %v1512, %v1536
          %v1543 = vmul.f32 %v1537, %v1537
          %v1544 = vmul.f32 %v1538, %v1538
          %v1545 = vmul.f32 %v1539, %v1539
          %v1546 = vmul.f32 %v1540, %v1540
          %v1547 = vmul.f32 %v1541, %v1541
          %v1548 = vmul.f32 %v1542, %v1542
          %v1549 = vsel %vm1515, %v1543, 0.0
          %v1550 = vsel %vm1515, %v1544, 0.0
          %v1551 = vadd.f32 %v1549, %v1550
          %v1552 = vsel %vm1515, %v1545, 0.0
          %v1553 = vadd.f32 %v1551, %v1552
          %v1554 = vsel %vm1515, %v1546, 0.0
          %v1555 = vadd.f32 %v1553, %v1554
          %v1556 = vsel %vm1515, %v1547, 0.0
          %v1557 = vadd.f32 %v1555, %v1556
          %v1558 = vsel %vm1515, %v1548, 0.0
          %v1559 = vadd.f32 %v1557, %v1558
          %1560 = vadd.xlane.f32.xlu0 %v1559
          %v1561 = vpop.xlane.xlu0 %1560
          %v1562 = vmul.f32 %v1561, %v1535
          %v1563 = vadd.f32 %v1562, 1e-05
          %v1564 = vrsqrt.pop %v1563
          %v1565 = vmul.f32 %v1564, %v1563
          %v1566 = vmul.f32 %v1565, %v1564
          %v1567 = vmul.f32 0.5, %v1566
          %v1568 = vsub.f32 1.5, %v1567
          %v1569 = vmul.f32 %v1564, %v1568
          %vm1570 = vweird.f32 %v1563
          %vm1571 = vweird.f32 %v1564
          %vm1572 = vmor %vm1570, %vm1571
          %v1573 = vsel %vm1572, %v1564, %v1569
          %v1574 = vmul.f32 %v1537, %v1573
          %v1575 = vmul.f32 %v1538, %v1573
          %v1576 = vmul.f32 %v1539, %v1573
          %v1577 = vmul.f32 %v1540, %v1573
          %v1578 = vmul.f32 %v1541, %v1573
          %v1579 = vmul.f32 %v1542, %v1573
          %v1580 = vperm.slane %v1360, 1
          %v1581 = vperm.slane %v1361, 1
          %v1582 = vperm.slane %v1362, 1
          %v1583 = vperm.slane %v1363, 1
          %v1584 = vperm.slane %v1364, 1
          %v1585 = vperm.slane %v1365, 1
          %v1586 = vmul.f32 %v1574, %v1580
          %v1587 = vmul.f32 %v1575, %v1581
          %v1588 = vmul.f32 %v1576, %v1582
          %v1589 = vmul.f32 %v1577, %v1583
          %v1590 = vmul.f32 %v1578, %v1584
          %v1591 = vmul.f32 %v1579, %v1585
          %v1592 = vperm.slane %v1360, 2
          %v1593 = vperm.slane %v1361, 2
          %v1594 = vperm.slane %v1362, 2
          %v1595 = vperm.slane %v1363, 2
          %v1596 = vperm.slane %v1364, 2
          %v1597 = vperm.slane %v1365, 2
          %v1598 = vadd.f32 %v1586, %v1592
          %v1599 = vadd.f32 %v1587, %v1593
          %v1600 = vadd.f32 %v1588, %v1594
          %v1601 = vadd.f32 %v1589, %v1595
          %v1602 = vadd.f32 %v1590, %v1596
          %v1603 = vadd.f32 %v1591, %v1597
          %v1604 = vmax.f32 %v1598, 0.0
          %v1605 = vmax.f32 %v1599, 0.0
          %v1606 = vmax.f32 %v1600, 0.0
          %v1607 = vmax.f32 %v1601, 0.0
          %v1608 = vmax.f32 %v1602, 0.0
          %v1609 = vmax.f32 %v1603, 0.0
          %v1610 = vpack.c.bf16 %v1605, %v1604
          %v1611 = vpack.c.bf16 %v1607, %v1606
          %v1612 = vpack.c.bf16 %v1609, %v1608
          %v1616 = vrot.slane %v1610, 3
          %v1617 = vrot.slane %v1611, 6
          %v1618 = vrot.slane %v1611, 1
          %v1619 = vrot.slane %v1612, 4
          %v1620 = vrot.slane %v1612, 7
          %vm1621 = vcmask 1040384
          %v1624 = vsel %vm1621, %v1610, %v1616
          %v1626 = vsel %vm1515, %v1624, %v1617
          %vm1627 = vcmask 1043459
          %v1630 = vsel %vm1627, %v1618, %v1619
          %vm1631 = vcmask 1044483
          %v1633 = vsel %vm1631, %v1630, %v1620
          %vm1634 = vcmask 1042432
          %v1635 = vsel %vm1634, %v1626, %v1633
          %1637 = vst [vmem:[#allocation3] sm:$0x3f] %v1635
          %v1638 = vpack.c.bf16 %v1335, %v1334
          %v1639 = vperm.slane %v1360, 3
          %v1640 = vperm.slane %v1361, 3
          %v1641 = vperm.slane %v1362, 3
          %v1642 = vperm.slane %v1363, 3
          %v1643 = vperm.slane %v1364, 3
          %v1644 = vperm.slane %v1365, 3
          %v1657 = vunpack.c.l.b16 %v1348
          %v1658 = vunpack.c.h.b16 %v1348
          %v1659 = vunpack.c.l.b16 %v1349
          %v1660 = vunpack.c.h.b16 %v1349
          %v1661 = vunpack.c.l.b16 %v1350
          %v1662 = vunpack.c.h.b16 %v1350
          %v1663 = vunpack.c.l.b16 %v1351
          %v1664 = vunpack.c.h.b16 %v1351
          %v1665 = vunpack.c.l.b16 %v1352
          %v1666 = vunpack.c.h.b16 %v1352
          %v1667 = vunpack.c.l.b16 %v1353
          %v1668 = vunpack.c.h.b16 %v1353
          %v1669 = vunpack.c.l.b16 %v1354
          %v1670 = vunpack.c.h.b16 %v1354
          %v1671 = vunpack.c.l.b16 %v1355
          %v1672 = vunpack.c.h.b16 %v1355
          %v1673 = vunpack.c.l.b16 %v1356
          %v1674 = vunpack.c.h.b16 %v1356
          %v1675 = vunpack.c.l.b16 %v1357
          %v1676 = vunpack.c.h.b16 %v1357
          %v1677 = vunpack.c.l.b16 %v1358
          %v1678 = vunpack.c.h.b16 %v1358
          %v1679 = vunpack.c.l.b16 %v1359
          %v1680 = vunpack.c.h.b16 %v1359
          %v1681 = vpack.c.b16 %v1663, %v1657
          %v1682 = vpack.c.b16 %v1664, %v1658
          %v1683 = vpack.c.b16 %v1665, %v1659
          %v1684 = vpack.c.b16 %v1666, %v1660
          %v1685 = vpack.c.b16 %v1667, %v1661
          %v1686 = vpack.c.b16 %v1668, %v1662
          %v1687 = vpack.c.b16 %v1675, %v1669
          %v1688 = vpack.c.b16 %v1676, %v1670
          %v1689 = vpack.c.b16 %v1677, %v1671
          %v1690 = vpack.c.b16 %v1678, %v1672
          %v1691 = vpack.c.b16 %v1679, %v1673
          %v1692 = vpack.c.b16 %v1680, %v1674
          %v1706 = vsel %vm534, %v1638, 0
          %1708 = vmatpush.bf16.msra.mxu0 0
          %1709 = vmatpush.bf16.msra.mxu0 0
          %1710 = vmatpush.bf16.msra.mxu0 0
          %1711 = vmatpush.bf16.msra.mxu0 0
          %1712 = vmatpush.bf16.msra.mxu0 0
          %1713 = vmatpush.bf16.msra.mxu0 0
          %1714 = vmatpush.bf16.msra.mxu0 %v1687
          %1715 = vmatpush.bf16.msra.mxu0 %v1681
          %1716 = vmatmul.bf16.gmra.mxu0 %v1706
          %v1717 = vpop.f32.mrf.mxu0
          %v1718 = vadd.f32 %v1639, %v1717
          %v1719 = vpop.f32.mrf.mxu0
          %v1720 = vadd.f32 %v1639, %v1719
          %1721 = vdwg.mxu0
          %1722 = vmatpush.bf16.msra.mxu0 0
          %1723 = vmatpush.bf16.msra.mxu0 0
          %1724 = vmatpush.bf16.msra.mxu0 0
          %1725 = vmatpush.bf16.msra.mxu0 0
          %1726 = vmatpush.bf16.msra.mxu0 0
          %1727 = vmatpush.bf16.msra.mxu0 0
          %1728 = vmatpush.bf16.msra.mxu0 %v1688
          %1729 = vmatpush.bf16.msra.mxu0 %v1682
          %1730 = vmatmul.bf16.gmra.mxu0 %v1706
          %v1731 = vpop.f32.mrf.mxu0
          %v1732 = vadd.f32 %v1640, %v1731
          %v1733 = vpop.f32.mrf.mxu0
          %v1734 = vadd.f32 %v1640, %v1733
          %1735 = vdwg.mxu0
          %1736 = vmatpush.bf16.msra.mxu0 0
          %1737 = vmatpush.bf16.msra.mxu0 0
          %1738 = vmatpush.bf16.msra.mxu0 0
          %1739 = vmatpush.bf16.msra.mxu0 0
          %1740 = vmatpush.bf16.msra.mxu0 0
          %1741 = vmatpush.bf16.msra.mxu0 0
          %1742 = vmatpush.bf16.msra.mxu0 %v1689
          %1743 = vmatpush.bf16.msra.mxu0 %v1683
          %1744 = vmatmul.bf16.gmra.mxu0 %v1706
          %v1745 = vpop.f32.mrf.mxu0
          %v1746 = vadd.f32 %v1641, %v1745
          %v1747 = vpop.f32.mrf.mxu0
          %v1748 = vadd.f32 %v1641, %v1747
          %1749 = vdwg.mxu0
          %1750 = vmatpush.bf16.msra.mxu0 0
          %1751 = vmatpush.bf16.msra.mxu0 0
          %1752 = vmatpush.bf16.msra.mxu0 0
          %1753 = vmatpush.bf16.msra.mxu0 0
          %1754 = vmatpush.bf16.msra.mxu0 0
          %1755 = vmatpush.bf16.msra.mxu0 0
          %1756 = vmatpush.bf16.msra.mxu0 %v1690
          %1757 = vmatpush.bf16.msra.mxu0 %v1684
          %1758 = vmatmul.bf16.gmra.mxu0 %v1706
          %v1759 = vpop.f32.mrf.mxu0
          %v1760 = vadd.f32 %v1642, %v1759
          %v1761 = vpop.f32.mrf.mxu0
          %v1762 = vadd.f32 %v1642, %v1761
          %1763 = vdwg.mxu0
          %1764 = vmatpush.bf16.msra.mxu0 0
          %1765 = vmatpush.bf16.msra.mxu0 0
          %1766 = vmatpush.bf16.msra.mxu0 0
          %1767 = vmatpush.bf16.msra.mxu0 0
          %1768 = vmatpush.bf16.msra.mxu0 0
          %1769 = vmatpush.bf16.msra.mxu0 0
          %1770 = vmatpush.bf16.msra.mxu0 %v1691
          %1771 = vmatpush.bf16.msra.mxu0 %v1685
          %1772 = vmatmul.bf16.gmra.mxu0 %v1706
          %v1773 = vpop.f32.mrf.mxu0
          %v1774 = vadd.f32 %v1643, %v1773
          %v1775 = vpop.f32.mrf.mxu0
          %v1776 = vadd.f32 %v1643, %v1775
          %1777 = vdwg.mxu0
          %1778 = vmatpush.bf16.msra.mxu0 0
          %1779 = vmatpush.bf16.msra.mxu0 0
          %1780 = vmatpush.bf16.msra.mxu0 0
          %1781 = vmatpush.bf16.msra.mxu0 0
          %1782 = vmatpush.bf16.msra.mxu0 0
          %1783 = vmatpush.bf16.msra.mxu0 0
          %1784 = vmatpush.bf16.msra.mxu0 %v1692
          %1785 = vmatpush.bf16.msra.mxu0 %v1686
          %1786 = vmatmul.bf16.gmra.mxu0 %v1706
          %v1787 = vpop.f32.mrf.mxu0
          %v1788 = vadd.f32 %v1644, %v1787
          %v1789 = vpop.f32.mrf.mxu0
          %v1790 = vadd.f32 %v1644, %v1789
          %1791 = vdwg.mxu0
          %v1792 = vadd.f32 %v1718, %v1732
          %v1793 = vadd.f32 %v1792, %v1746
          %v1794 = vadd.f32 %v1793, %v1760
          %v1795 = vadd.f32 %v1794, %v1774
          %v1796 = vadd.f32 %v1795, %v1788
          %1797 = vadd.xlane.f32.xlu0 %v1796
          %v1798 = vpop.xlane.xlu0 %1797
          %v1799 = vadd.f32 %v1720, %v1734
          %v1800 = vadd.f32 %v1799, %v1748
          %v1801 = vadd.f32 %v1800, %v1762
          %v1802 = vadd.f32 %v1801, %v1776
          %v1803 = vadd.f32 %v1802, %v1790
          %1804 = vadd.xlane.f32.xlu0 %v1803
          %v1805 = vpop.xlane.xlu0 %1804
          %v1806 = vmul.f32 %v1798, %v1535
          %v1807 = vmul.f32 %v1805, %v1535
          %v1808 = vsub.f32 %v1718, %v1806
          %v1809 = vsub.f32 %v1732, %v1806
          %v1810 = vsub.f32 %v1746, %v1806
          %v1811 = vsub.f32 %v1760, %v1806
          %v1812 = vsub.f32 %v1774, %v1806
          %v1813 = vsub.f32 %v1788, %v1806
          %v1814 = vsub.f32 %v1720, %v1807
          %v1815 = vsub.f32 %v1734, %v1807
          %v1816 = vsub.f32 %v1748, %v1807
          %v1817 = vsub.f32 %v1762, %v1807
          %v1818 = vsub.f32 %v1776, %v1807
          %v1819 = vsub.f32 %v1790, %v1807
          %v1820 = vmul.f32 %v1808, %v1808
          %v1821 = vmul.f32 %v1809, %v1809
          %v1822 = vmul.f32 %v1810, %v1810
          %v1823 = vmul.f32 %v1811, %v1811
          %v1824 = vmul.f32 %v1812, %v1812
          %v1825 = vmul.f32 %v1813, %v1813
          %v1826 = vmul.f32 %v1814, %v1814
          %v1827 = vmul.f32 %v1815, %v1815
          %v1828 = vmul.f32 %v1816, %v1816
          %v1829 = vmul.f32 %v1817, %v1817
          %v1830 = vmul.f32 %v1818, %v1818
          %v1831 = vmul.f32 %v1819, %v1819
          %v1832 = vadd.f32 %v1820, %v1821
          %v1833 = vadd.f32 %v1832, %v1822
          %v1834 = vadd.f32 %v1833, %v1823
          %v1835 = vadd.f32 %v1834, %v1824
          %v1836 = vadd.f32 %v1835, %v1825
          %1837 = vadd.xlane.f32.xlu0 %v1836
          %v1838 = vpop.xlane.xlu0 %1837
          %v1839 = vadd.f32 %v1826, %v1827
          %v1840 = vadd.f32 %v1839, %v1828
          %v1841 = vadd.f32 %v1840, %v1829
          %v1842 = vadd.f32 %v1841, %v1830
          %v1843 = vadd.f32 %v1842, %v1831
          %1844 = vadd.xlane.f32.xlu0 %v1843
          %v1845 = vpop.xlane.xlu0 %1844
          %v1846 = vmul.f32 %v1838, %v1535
          %v1847 = vmul.f32 %v1845, %v1535
          %v1848 = vadd.f32 %v1846, 1e-05
          %v1849 = vadd.f32 %v1847, 1e-05
          %v1850 = vrsqrt.pop %v1848
          %v1851 = vmul.f32 %v1850, %v1848
          %v1852 = vmul.f32 %v1851, %v1850
          %v1853 = vmul.f32 0.5, %v1852
          %v1854 = vsub.f32 1.5, %v1853
          %v1855 = vmul.f32 %v1850, %v1854
          %vm1856 = vweird.f32 %v1848
          %vm1857 = vweird.f32 %v1850
          %vm1858 = vmor %vm1856, %vm1857
          %v1859 = vsel %vm1858, %v1850, %v1855
          %v1860 = vrsqrt.pop %v1849
          %v1861 = vmul.f32 %v1860, %v1849
          %v1862 = vmul.f32 %v1861, %v1860
          %v1863 = vmul.f32 0.5, %v1862
          %v1864 = vsub.f32 1.5, %v1863
          %v1865 = vmul.f32 %v1860, %v1864
          %vm1866 = vweird.f32 %v1849
          %vm1867 = vweird.f32 %v1860
          %vm1868 = vmor %vm1866, %vm1867
          %v1869 = vsel %vm1868, %v1860, %v1865
          %v1870 = vmul.f32 %v1808, %v1859
          %v1871 = vmul.f32 %v1809, %v1859
          %v1872 = vmul.f32 %v1810, %v1859
          %v1873 = vmul.f32 %v1811, %v1859
          %v1874 = vmul.f32 %v1812, %v1859
          %v1875 = vmul.f32 %v1813, %v1859
          %v1876 = vmul.f32 %v1814, %v1869
          %v1877 = vmul.f32 %v1815, %v1869
          %v1878 = vmul.f32 %v1816, %v1869
          %v1879 = vmul.f32 %v1817, %v1869
          %v1880 = vmul.f32 %v1818, %v1869
          %v1881 = vmul.f32 %v1819, %v1869
          %v1882 = vperm.slane %v1360, 4
          %v1883 = vperm.slane %v1361, 4
          %v1884 = vperm.slane %v1362, 4
          %v1885 = vperm.slane %v1363, 4
          %v1886 = vperm.slane %v1364, 4
          %v1887 = vperm.slane %v1365, 4
          %v1888 = vmul.f32 %v1870, %v1882
          %v1889 = vmul.f32 %v1871, %v1883
          %v1890 = vmul.f32 %v1872, %v1884
          %v1891 = vmul.f32 %v1873, %v1885
          %v1892 = vmul.f32 %v1874, %v1886
          %v1893 = vmul.f32 %v1875, %v1887
          %v1894 = vmul.f32 %v1876, %v1882
          %v1895 = vmul.f32 %v1877, %v1883
          %v1896 = vmul.f32 %v1878, %v1884
          %v1897 = vmul.f32 %v1879, %v1885
          %v1898 = vmul.f32 %v1880, %v1886
          %v1899 = vmul.f32 %v1881, %v1887
          %v1900 = vperm.slane %v1360, 5
          %v1901 = vperm.slane %v1361, 5
          %v1902 = vperm.slane %v1362, 5
          %v1903 = vperm.slane %v1363, 5
          %v1904 = vperm.slane %v1364, 5
          %v1905 = vperm.slane %v1365, 5
          %v1906 = vadd.f32 %v1888, %v1900
          %v1907 = vadd.f32 %v1889, %v1901
          %v1908 = vadd.f32 %v1890, %v1902
          %v1909 = vadd.f32 %v1891, %v1903
          %v1910 = vadd.f32 %v1892, %v1904
          %v1911 = vadd.f32 %v1893, %v1905
          %v1912 = vadd.f32 %v1894, %v1900
          %v1913 = vadd.f32 %v1895, %v1901
          %v1914 = vadd.f32 %v1896, %v1902
          %v1915 = vadd.f32 %v1897, %v1903
          %v1916 = vadd.f32 %v1898, %v1904
          %v1917 = vadd.f32 %v1899, %v1905
          %v1918 = vmax.f32 %v1906, 0.0
          %v1919 = vmax.f32 %v1907, 0.0
          %v1920 = vmax.f32 %v1908, 0.0
          %v1921 = vmax.f32 %v1909, 0.0
          %v1922 = vmax.f32 %v1910, 0.0
          %v1923 = vmax.f32 %v1911, 0.0
          %v1924 = vmax.f32 %v1912, 0.0
          %v1925 = vmax.f32 %v1913, 0.0
          %v1926 = vmax.f32 %v1914, 0.0
          %v1927 = vmax.f32 %v1915, 0.0
          %v1928 = vmax.f32 %v1916, 0.0
          %v1929 = vmax.f32 %v1917, 0.0
          %v1930 = vpack.c.bf16 %v1919, %v1918
          %v1931 = vpack.c.bf16 %v1921, %v1920
          %v1932 = vpack.c.bf16 %v1923, %v1922
          %v1933 = vpack.c.bf16 %v1925, %v1924
          %v1934 = vpack.c.bf16 %v1927, %v1926
          %v1935 = vpack.c.bf16 %v1929, %v1928
          %1936 = vst [vmem:[#allocation4] sm:$0xff] %v1930
          %1937 = vst [vmem:[#allocation4 + $0x8] sm:$0xff] %v1931
          %1938 = vst [vmem:[#allocation4 + $0x10] sm:$0xff] %v1932
          %1939 = vst [vmem:[#allocation4 + $0x18] sm:$0xff] %v1933
          %1940 = vst [vmem:[#allocation4 + $0x20] sm:$0xff] %v1934
          %1941 = vst [vmem:[#allocation4 + $0x28] sm:$0xff] %v1935
          %vm1942 = vcmask 123904
          %1943 = vst.msk [vmem:[%s516] sm:$0x3] %vm1942, 0.0
        $region80: #{_asp_score.1} parent=51 // pred_fallthru
          _
        %v1944 = vld [vmem:[%s452] sm:$0xf]
        %v1945 = vld [vmem:[#allocation3] sm:$0x3f]
        %v1946 = vld [vmem:[%s432] sm:$0xff]
        %v1947 = vld [vmem:[%s432 + $0x8] sm:$0xff]
        %v1948 = vld [vmem:[%s432 + $0x10] sm:$0xff]
        %v1949 = vld [vmem:[%s432 + $0x18] sm:$0xff]
        %v1950 = vld [vmem:[%s432 + $0x20] sm:$0xff]
        %v1951 = vld [vmem:[%s432 + $0x28] sm:$0xff]
        %v1952 = vld [vmem:[%s432 + $0x30] sm:$0xff]
        %v1953 = vld [vmem:[%s432 + $0x38] sm:$0xff]
        %v1954 = vld [vmem:[%s432 + $0x40] sm:$0xff]
        %v1955 = vld [vmem:[%s432 + $0x48] sm:$0xff]
        %v1956 = vld [vmem:[%s432 + $0x50] sm:$0xff]
        %v1957 = vld [vmem:[%s432 + $0x58] sm:$0xff]
        %v1958 = vld [vmem:[%s432 + $0x60] sm:$0xff]
        %v1959 = vld [vmem:[%s432 + $0x68] sm:$0xff]
        %v1960 = vld [vmem:[%s432 + $0x70] sm:$0xff]
        %v1961 = vld [vmem:[%s432 + $0x78] sm:$0xff]
        %v1962 = vld [vmem:[%s432 + $0x80] sm:$0xff]
        %v1963 = vld [vmem:[%s432 + $0x88] sm:$0xff]
        %v1964 = vld [vmem:[%s432 + $0x90] sm:$0xff]
        %v1965 = vld [vmem:[%s432 + $0x98] sm:$0xff]
        %v1966 = vld [vmem:[%s432 + $0xa0] sm:$0xff]
        %v1967 = vld [vmem:[%s432 + $0xa8] sm:$0xff]
        %v1968 = vld [vmem:[%s432 + $0xb0] sm:$0xff]
        %v1969 = vld [vmem:[%s432 + $0xb8] sm:$0xff]
        %v1970 = vld [vmem:[%s432 + $0xc0] sm:$0xff]
        %v1971 = vld [vmem:[%s432 + $0xc8] sm:$0xff]
        %v1972 = vld [vmem:[%s432 + $0xd0] sm:$0xff]
        %v1973 = vld [vmem:[%s432 + $0xd8] sm:$0xff]
        %v1974 = vld [vmem:[%s432 + $0xe0] sm:$0xff]
        %v1975 = vld [vmem:[%s432 + $0xe8] sm:$0xff]
        %v1976 = vld [vmem:[%s432 + $0xf0] sm:$0xff]
        %v1977 = vld [vmem:[%s432 + $0xf8] sm:$0xff]
        %v1978 = vld [vmem:[%s432 + $0x100] sm:$0xff]
        %v1979 = vld [vmem:[%s432 + $0x108] sm:$0xff]
        %v1980 = vld [vmem:[%s432 + $0x110] sm:$0xff]
        %v1981 = vld [vmem:[%s432 + $0x118] sm:$0xff]
        %v1982 = vld [vmem:[%s432 + $0x120] sm:$0xff]
        %v1983 = vld [vmem:[%s432 + $0x128] sm:$0xff]
        %v1984 = vld [vmem:[%s432 + $0x130] sm:$0xff]
        %v1985 = vld [vmem:[%s432 + $0x138] sm:$0xff]
        %v1986 = vld [vmem:[%s432 + $0x140] sm:$0xff]
        %v1987 = vld [vmem:[%s432 + $0x148] sm:$0xff]
        %v1988 = vld [vmem:[%s432 + $0x150] sm:$0xff]
        %v1989 = vld [vmem:[%s432 + $0x158] sm:$0xff]
        %v1990 = vld [vmem:[%s432 + $0x160] sm:$0xff]
        %v1991 = vld [vmem:[%s432 + $0x168] sm:$0xff]
        %v1992 = vld [vmem:[%s432 + $0x170] sm:$0xff]
        %v1993 = vld [vmem:[%s432 + $0x178] sm:$0xff]
        %v1994 = vld [vmem:[%s432 + $0x180] sm:$0xff]
        %v1995 = vld [vmem:[%s432 + $0x188] sm:$0xff]
        %v1996 = vld [vmem:[%s432 + $0x190] sm:$0xff]
        %v1997 = vld [vmem:[%s432 + $0x198] sm:$0xff]
        %v1998 = vld [vmem:[%s432 + $0x1a0] sm:$0xff]
        %v1999 = vld [vmem:[%s432 + $0x1a8] sm:$0xff]
        %v2000 = vld [vmem:[%s432 + $0x1b0] sm:$0xff]
        %v2001 = vld [vmem:[%s432 + $0x1b8] sm:$0xff]
        %v2002 = vld [vmem:[%s432 + $0x1c0] sm:$0xff]
        %v2003 = vld [vmem:[%s432 + $0x1c8] sm:$0xff]
        %v2004 = vld [vmem:[%s432 + $0x1d0] sm:$0xff]
        %v2005 = vld [vmem:[%s432 + $0x1d8] sm:$0xff]
        %v2006 = vld [vmem:[%s432 + $0x1e0] sm:$0xff]
        %v2007 = vld [vmem:[%s432 + $0x1e8] sm:$0xff]
        %v2008 = vld [vmem:[%s432 + $0x1f0] sm:$0xff]
        %v2009 = vld [vmem:[%s432 + $0x1f8] sm:$0xff]
        %v2010 = vld [vmem:[%s432 + $0x200] sm:$0xff]
        %v2011 = vld [vmem:[%s432 + $0x208] sm:$0xff]
        %v2012 = vld [vmem:[%s432 + $0x210] sm:$0xff]
        %v2013 = vld [vmem:[%s432 + $0x218] sm:$0xff]
        %v2014 = vld [vmem:[%s432 + $0x220] sm:$0xff]
        %v2015 = vld [vmem:[%s432 + $0x228] sm:$0xff]
        %v2016 = vld [vmem:[%s432 + $0x230] sm:$0xff]
        %v2017 = vld [vmem:[%s432 + $0x238] sm:$0xff]
        %v2018 = vld [vmem:[%s432 + $0x240] sm:$0xff]
        %v2019 = vld [vmem:[%s432 + $0x248] sm:$0xff]
        %v2020 = vld [vmem:[%s432 + $0x250] sm:$0xff]
        %v2021 = vld [vmem:[%s432 + $0x258] sm:$0xff]
        %v2022 = vld [vmem:[%s432 + $0x260] sm:$0xff]
        %v2023 = vld [vmem:[%s432 + $0x268] sm:$0xff]
        %v2024 = vld [vmem:[%s432 + $0x270] sm:$0xff]
        %v2025 = vld [vmem:[%s432 + $0x278] sm:$0xff]
        %v2026 = vld [vmem:[%s432 + $0x280] sm:$0xff]
        %v2027 = vld [vmem:[%s432 + $0x288] sm:$0xff]
        %v2028 = vld [vmem:[%s432 + $0x290] sm:$0xff]
        %v2029 = vld [vmem:[%s432 + $0x298] sm:$0xff]
        %v2030 = vld [vmem:[%s432 + $0x2a0] sm:$0xff]
        %v2031 = vld [vmem:[%s432 + $0x2a8] sm:$0xff]
        %v2032 = vld [vmem:[%s432 + $0x2b0] sm:$0xff]
        %v2033 = vld [vmem:[%s432 + $0x2b8] sm:$0xff]
        %v2034 = vld [vmem:[%s432 + $0x2c0] sm:$0xff]
        %v2035 = vld [vmem:[%s432 + $0x2c8] sm:$0xff]
        %v2036 = vld [vmem:[%s432 + $0x2d0] sm:$0xff]
        %v2037 = vld [vmem:[%s432 + $0x2d8] sm:$0xff]
        %v2038 = vld [vmem:[%s432 + $0x2e0] sm:$0xff]
        %v2039 = vld [vmem:[%s432 + $0x2e8] sm:$0xff]
        %v2040 = vld [vmem:[%s432 + $0x2f0] sm:$0xff]
        %v2041 = vld [vmem:[%s432 + $0x2f8] sm:$0xff]
        %v2043 = vperm.slane %v1944, 0
        %v2044 = vperm.slane %v1944, 2
        %v2047 = vperm.slane %v2043, 0
        %v2048 = vperm.slane %v2044, 0
        %2050 = vst [vmem:[#allocation1] ss:$9 sm:$0xff] %v1945
        %v2051 = vld [vmem:[#allocation1] sm:$0xff]
        %v2052 = vld [vmem:[#allocation1 + $0x9] sm:$0xff]
        %v2053 = vld [vmem:[#allocation1 + $0x12] sm:$0xff]
        %v2054 = vld [vmem:[#allocation1 + $0x1b] sm:$0xff]
        %v2055 = vld [vmem:[#allocation1 + $0x24] sm:$0xff]
        %v2056 = vld [vmem:[#allocation1 + $0x2d] sm:$0xff]
        %v2159 = vunpack.c.l.b16 %v1946
        %v2160 = vunpack.c.h.b16 %v1946
        %v2161 = vunpack.c.l.b16 %v1947
        %v2162 = vunpack.c.h.b16 %v1947
        %v2163 = vunpack.c.l.b16 %v1948
        %v2164 = vunpack.c.h.b16 %v1948
        %v2165 = vunpack.c.l.b16 %v1949
        %v2166 = vunpack.c.h.b16 %v1949
        %v2167 = vunpack.c.l.b16 %v1950
        %v2168 = vunpack.c.h.b16 %v1950
        %v2169 = vunpack.c.l.b16 %v1951
        %v2170 = vunpack.c.h.b16 %v1951
        %v2171 = vunpack.c.l.b16 %v1952
        %v2172 = vunpack.c.h.b16 %v1952
        %v2173 = vunpack.c.l.b16 %v1953
        %v2174 = vunpack.c.h.b16 %v1953
        %v2175 = vunpack.c.l.b16 %v1954
        %v2176 = vunpack.c.h.b16 %v1954
        %v2177 = vunpack.c.l.b16 %v1955
        %v2178 = vunpack.c.h.b16 %v1955
        %v2179 = vunpack.c.l.b16 %v1956
        %v2180 = vunpack.c.h.b16 %v1956
        %v2181 = vunpack.c.l.b16 %v1957
        %v2182 = vunpack.c.h.b16 %v1957
        %v2183 = vunpack.c.l.b16 %v1958
        %v2184 = vunpack.c.h.b16 %v1958
        %v2185 = vunpack.c.l.b16 %v1959
        %v2186 = vunpack.c.h.b16 %v1959
        %v2187 = vunpack.c.l.b16 %v1960
        %v2188 = vunpack.c.h.b16 %v1960
        %v2189 = vunpack.c.l.b16 %v1961
        %v2190 = vunpack.c.h.b16 %v1961
        %v2191 = vunpack.c.l.b16 %v1962
        %v2192 = vunpack.c.h.b16 %v1962
        %v2193 = vunpack.c.l.b16 %v1963
        %v2194 = vunpack.c.h.b16 %v1963
        %v2195 = vunpack.c.l.b16 %v1964
        %v2196 = vunpack.c.h.b16 %v1964
        %v2197 = vunpack.c.l.b16 %v1965
        %v2198 = vunpack.c.h.b16 %v1965
        %v2199 = vunpack.c.l.b16 %v1966
        %v2200 = vunpack.c.h.b16 %v1966
        %v2201 = vunpack.c.l.b16 %v1967
        %v2202 = vunpack.c.h.b16 %v1967
        %v2203 = vunpack.c.l.b16 %v1968
        %v2204 = vunpack.c.h.b16 %v1968
        %v2205 = vunpack.c.l.b16 %v1969
        %v2206 = vunpack.c.h.b16 %v1969
        %v2207 = vunpack.c.l.b16 %v1970
        %v2208 = vunpack.c.h.b16 %v1970
        %v2209 = vunpack.c.l.b16 %v1971
        %v2210 = vunpack.c.h.b16 %v1971
        %v2211 = vunpack.c.l.b16 %v1972
        %v2212 = vunpack.c.h.b16 %v1972
        %v2213 = vunpack.c.l.b16 %v1973
        %v2214 = vunpack.c.h.b16 %v1973
        %v2215 = vunpack.c.l.b16 %v1974
        %v2216 = vunpack.c.h.b16 %v1974
        %v2217 = vunpack.c.l.b16 %v1975
        %v2218 = vunpack.c.h.b16 %v1975
        %v2219 = vunpack.c.l.b16 %v1976
        %v2220 = vunpack.c.h.b16 %v1976
        %v2221 = vunpack.c.l.b16 %v1977
        %v2222 = vunpack.c.h.b16 %v1977
        %v2223 = vunpack.c.l.b16 %v1978
        %v2224 = vunpack.c.h.b16 %v1978
        %v2225 = vunpack.c.l.b16 %v1979
        %v2226 = vunpack.c.h.b16 %v1979
        %v2227 = vunpack.c.l.b16 %v1980
        %v2228 = vunpack.c.h.b16 %v1980
        %v2229 = vunpack.c.l.b16 %v1981
        %v2230 = vunpack.c.h.b16 %v1981
        %v2231 = vunpack.c.l.b16 %v1982
        %v2232 = vunpack.c.h.b16 %v1982
        %v2233 = vunpack.c.l.b16 %v1983
        %v2234 = vunpack.c.h.b16 %v1983
        %v2235 = vunpack.c.l.b16 %v1984
        %v2236 = vunpack.c.h.b16 %v1984
        %v2237 = vunpack.c.l.b16 %v1985
        %v2238 = vunpack.c.h.b16 %v1985
        %v2239 = vunpack.c.l.b16 %v1986
        %v2240 = vunpack.c.h.b16 %v1986
        %v2241 = vunpack.c.l.b16 %v1987
        %v2242 = vunpack.c.h.b16 %v1987
        %v2243 = vunpack.c.l.b16 %v1988
        %v2244 = vunpack.c.h.b16 %v1988
        %v2245 = vunpack.c.l.b16 %v1989
        %v2246 = vunpack.c.h.b16 %v1989
        %v2247 = vunpack.c.l.b16 %v1990
        %v2248 = vunpack.c.h.b16 %v1990
        %v2249 = vunpack.c.l.b16 %v1991
        %v2250 = vunpack.c.h.b16 %v1991
        %v2251 = vunpack.c.l.b16 %v1992
        %v2252 = vunpack.c.h.b16 %v1992
        %v2253 = vunpack.c.l.b16 %v1993
        %v2254 = vunpack.c.h.b16 %v1993
        %v2255 = vunpack.c.l.b16 %v1994
        %v2256 = vunpack.c.h.b16 %v1994
        %v2257 = vunpack.c.l.b16 %v1995
        %v2258 = vunpack.c.h.b16 %v1995
        %v2259 = vunpack.c.l.b16 %v1996
        %v2260 = vunpack.c.h.b16 %v1996
        %v2261 = vunpack.c.l.b16 %v1997
        %v2262 = vunpack.c.h.b16 %v1997
        %v2263 = vunpack.c.l.b16 %v1998
        %v2264 = vunpack.c.h.b16 %v1998
        %v2265 = vunpack.c.l.b16 %v1999
        %v2266 = vunpack.c.h.b16 %v1999
        %v2267 = vunpack.c.l.b16 %v2000
        %v2268 = vunpack.c.h.b16 %v2000
        %v2269 = vunpack.c.l.b16 %v2001
        %v2270 = vunpack.c.h.b16 %v2001
        %v2271 = vunpack.c.l.b16 %v2002
        %v2272 = vunpack.c.h.b16 %v2002
        %v2273 = vunpack.c.l.b16 %v2003
        %v2274 = vunpack.c.h.b16 %v2003
        %v2275 = vunpack.c.l.b16 %v2004
        %v2276 = vunpack.c.h.b16 %v2004
        %v2277 = vunpack.c.l.b16 %v2005
        %v2278 = vunpack.c.h.b16 %v2005
        %v2279 = vunpack.c.l.b16 %v2006
        %v2280 = vunpack.c.h.b16 %v2006
        %v2281 = vunpack.c.l.b16 %v2007
        %v2282 = vunpack.c.h.b16 %v2007
        %v2283 = vunpack.c.l.b16 %v2008
        %v2284 = vunpack.c.h.b16 %v2008
        %v2285 = vunpack.c.l.b16 %v2009
        %v2286 = vunpack.c.h.b16 %v2009
        %v2287 = vunpack.c.l.b16 %v2010
        %v2288 = vunpack.c.h.b16 %v2010
        %v2289 = vunpack.c.l.b16 %v2011
        %v2290 = vunpack.c.h.b16 %v2011
        %v2291 = vunpack.c.l.b16 %v2012
        %v2292 = vunpack.c.h.b16 %v2012
        %v2293 = vunpack.c.l.b16 %v2013
        %v2294 = vunpack.c.h.b16 %v2013
        %v2295 = vunpack.c.l.b16 %v2014
        %v2296 = vunpack.c.h.b16 %v2014
        %v2297 = vunpack.c.l.b16 %v2015
        %v2298 = vunpack.c.h.b16 %v2015
        %v2299 = vunpack.c.l.b16 %v2016
        %v2300 = vunpack.c.h.b16 %v2016
        %v2301 = vunpack.c.l.b16 %v2017
        %v2302 = vunpack.c.h.b16 %v2017
        %v2303 = vunpack.c.l.b16 %v2018
        %v2304 = vunpack.c.h.b16 %v2018
        %v2305 = vunpack.c.l.b16 %v2019
        %v2306 = vunpack.c.h.b16 %v2019
        %v2307 = vunpack.c.l.b16 %v2020
        %v2308 = vunpack.c.h.b16 %v2020
        %v2309 = vunpack.c.l.b16 %v2021
        %v2310 = vunpack.c.h.b16 %v2021
        %v2311 = vunpack.c.l.b16 %v2022
        %v2312 = vunpack.c.h.b16 %v2022
        %v2313 = vunpack.c.l.b16 %v2023
        %v2314 = vunpack.c.h.b16 %v2023
        %v2315 = vunpack.c.l.b16 %v2024
        %v2316 = vunpack.c.h.b16 %v2024
        %v2317 = vunpack.c.l.b16 %v2025
        %v2318 = vunpack.c.h.b16 %v2025
        %v2319 = vunpack.c.l.b16 %v2026
        %v2320 = vunpack.c.h.b16 %v2026
        %v2321 = vunpack.c.l.b16 %v2027
        %v2322 = vunpack.c.h.b16 %v2027
        %v2323 = vunpack.c.l.b16 %v2028
        %v2324 = vunpack.c.h.b16 %v2028
        %v2325 = vunpack.c.l.b16 %v2029
        %v2326 = vunpack.c.h.b16 %v2029
        %v2327 = vunpack.c.l.b16 %v2030
        %v2328 = vunpack.c.h.b16 %v2030
        %v2329 = vunpack.c.l.b16 %v2031
        %v2330 = vunpack.c.h.b16 %v2031
        %v2331 = vunpack.c.l.b16 %v2032
        %v2332 = vunpack.c.h.b16 %v2032
        %v2333 = vunpack.c.l.b16 %v2033
        %v2334 = vunpack.c.h.b16 %v2033
        %v2335 = vunpack.c.l.b16 %v2034
        %v2336 = vunpack.c.h.b16 %v2034
        %v2337 = vunpack.c.l.b16 %v2035
        %v2338 = vunpack.c.h.b16 %v2035
        %v2339 = vunpack.c.l.b16 %v2036
        %v2340 = vunpack.c.h.b16 %v2036
        %v2341 = vunpack.c.l.b16 %v2037
        %v2342 = vunpack.c.h.b16 %v2037
        %v2343 = vunpack.c.l.b16 %v2038
        %v2344 = vunpack.c.h.b16 %v2038
        %v2345 = vunpack.c.l.b16 %v2039
        %v2346 = vunpack.c.h.b16 %v2039
        %v2347 = vunpack.c.l.b16 %v2040
        %v2348 = vunpack.c.h.b16 %v2040
        %v2349 = vunpack.c.l.b16 %v2041
        %v2350 = vunpack.c.h.b16 %v2041
        %v2351 = vpack.c.b16 %v2161, %v2159
        %v2352 = vpack.c.b16 %v2162, %v2160
        %v2353 = vpack.c.b16 %v2165, %v2163
        %v2354 = vpack.c.b16 %v2166, %v2164
        %v2355 = vpack.c.b16 %v2169, %v2167
        %v2356 = vpack.c.b16 %v2170, %v2168
        %v2357 = vpack.c.b16 %v2173, %v2171
        %v2358 = vpack.c.b16 %v2174, %v2172
        %v2359 = vpack.c.b16 %v2177, %v2175
        %v2360 = vpack.c.b16 %v2178, %v2176
        %v2361 = vpack.c.b16 %v2181, %v2179
        %v2362 = vpack.c.b16 %v2182, %v2180
        %v2363 = vpack.c.b16 %v2185, %v2183
        %v2364 = vpack.c.b16 %v2186, %v2184
        %v2365 = vpack.c.b16 %v2189, %v2187
        %v2366 = vpack.c.b16 %v2190, %v2188
        %v2367 = vpack.c.b16 %v2193, %v2191
        %v2368 = vpack.c.b16 %v2194, %v2192
        %v2369 = vpack.c.b16 %v2197, %v2195
        %v2370 = vpack.c.b16 %v2198, %v2196
        %v2371 = vpack.c.b16 %v2201, %v2199
        %v2372 = vpack.c.b16 %v2202, %v2200
        %v2373 = vpack.c.b16 %v2205, %v2203
        %v2374 = vpack.c.b16 %v2206, %v2204
        %v2375 = vpack.c.b16 %v2209, %v2207
        %v2376 = vpack.c.b16 %v2210, %v2208
        %v2377 = vpack.c.b16 %v2213, %v2211
        %v2378 = vpack.c.b16 %v2214, %v2212
        %v2379 = vpack.c.b16 %v2217, %v2215
        %v2380 = vpack.c.b16 %v2218, %v2216
        %v2381 = vpack.c.b16 %v2221, %v2219
        %v2382 = vpack.c.b16 %v2222, %v2220
        %v2383 = vpack.c.b16 %v2225, %v2223
        %v2384 = vpack.c.b16 %v2226, %v2224
        %v2385 = vpack.c.b16 %v2229, %v2227
        %v2386 = vpack.c.b16 %v2230, %v2228
        %v2387 = vpack.c.b16 %v2233, %v2231
        %v2388 = vpack.c.b16 %v2234, %v2232
        %v2389 = vpack.c.b16 %v2237, %v2235
        %v2390 = vpack.c.b16 %v2238, %v2236
        %v2391 = vpack.c.b16 %v2241, %v2239
        %v2392 = vpack.c.b16 %v2242, %v2240
        %v2393 = vpack.c.b16 %v2245, %v2243
        %v2394 = vpack.c.b16 %v2246, %v2244
        %v2395 = vpack.c.b16 %v2249, %v2247
        %v2396 = vpack.c.b16 %v2250, %v2248
        %v2397 = vpack.c.b16 %v2253, %v2251
        %v2398 = vpack.c.b16 %v2254, %v2252
        %v2399 = vpack.c.b16 %v2257, %v2255
        %v2400 = vpack.c.b16 %v2258, %v2256
        %v2401 = vpack.c.b16 %v2261, %v2259
        %v2402 = vpack.c.b16 %v2262, %v2260
        %v2403 = vpack.c.b16 %v2265, %v2263
        %v2404 = vpack.c.b16 %v2266, %v2264
        %v2405 = vpack.c.b16 %v2269, %v2267
        %v2406 = vpack.c.b16 %v2270, %v2268
        %v2407 = vpack.c.b16 %v2273, %v2271
        %v2408 = vpack.c.b16 %v2274, %v2272
        %v2409 = vpack.c.b16 %v2277, %v2275
        %v2410 = vpack.c.b16 %v2278, %v2276
        %v2411 = vpack.c.b16 %v2281, %v2279
        %v2412 = vpack.c.b16 %v2282, %v2280
        %v2413 = vpack.c.b16 %v2285, %v2283
        %v2414 = vpack.c.b16 %v2286, %v2284
        %v2415 = vpack.c.b16 %v2289, %v2287
        %v2416 = vpack.c.b16 %v2290, %v2288
        %v2417 = vpack.c.b16 %v2293, %v2291
        %v2418 = vpack.c.b16 %v2294, %v2292
        %v2419 = vpack.c.b16 %v2297, %v2295
        %v2420 = vpack.c.b16 %v2298, %v2296
        %v2421 = vpack.c.b16 %v2301, %v2299
        %v2422 = vpack.c.b16 %v2302, %v2300
        %v2423 = vpack.c.b16 %v2305, %v2303
        %v2424 = vpack.c.b16 %v2306, %v2304
        %v2425 = vpack.c.b16 %v2309, %v2307
        %v2426 = vpack.c.b16 %v2310, %v2308
        %v2427 = vpack.c.b16 %v2313, %v2311
        %v2428 = vpack.c.b16 %v2314, %v2312
        %v2429 = vpack.c.b16 %v2317, %v2315
        %v2430 = vpack.c.b16 %v2318, %v2316
        %v2431 = vpack.c.b16 %v2321, %v2319
        %v2432 = vpack.c.b16 %v2322, %v2320
        %v2433 = vpack.c.b16 %v2325, %v2323
        %v2434 = vpack.c.b16 %v2326, %v2324
        %v2435 = vpack.c.b16 %v2329, %v2327
        %v2436 = vpack.c.b16 %v2330, %v2328
        %v2437 = vpack.c.b16 %v2333, %v2331
        %v2438 = vpack.c.b16 %v2334, %v2332
        %v2439 = vpack.c.b16 %v2337, %v2335
        %v2440 = vpack.c.b16 %v2338, %v2336
        %v2441 = vpack.c.b16 %v2341, %v2339
        %v2442 = vpack.c.b16 %v2342, %v2340
        %v2443 = vpack.c.b16 %v2345, %v2343
        %v2444 = vpack.c.b16 %v2346, %v2344
        %v2445 = vpack.c.b16 %v2349, %v2347
        %v2446 = vpack.c.b16 %v2350, %v2348
        %2543 = vmatpush.bf16.msra.mxu0 %v2365
        %2544 = vmatpush.bf16.msra.mxu0 %v2363
        %2545 = vmatpush.bf16.msra.mxu0 %v2361
        %2546 = vmatpush.bf16.msra.mxu0 %v2359
        %2547 = vmatpush.bf16.msra.mxu0 %v2357
        %2548 = vmatpush.bf16.msra.mxu0 %v2355
        %2549 = vmatpush.bf16.msra.mxu0 %v2353
        %2550 = vmatpush.bf16.msra.mxu0 %v2351
        %2551 = vmatmul.bf16.gmra.mxu0 %v2051
        %v2552 = vpop.f32.mrf.mxu0
        %v2553 = vadd.f32 %v2047, %v2552
        %v2554 = vpop.f32.mrf.mxu0
        %2555 = vdwg.mxu0
        %2556 = vmatpush.bf16.msra.mxu0 %v2381
        %2557 = vmatpush.bf16.msra.mxu0 %v2379
        %2558 = vmatpush.bf16.msra.mxu0 %v2377
        %2559 = vmatpush.bf16.msra.mxu0 %v2375
        %2560 = vmatpush.bf16.msra.mxu0 %v2373
        %2561 = vmatpush.bf16.msra.mxu0 %v2371
        %2562 = vmatpush.bf16.msra.mxu0 %v2369
        %2563 = vmatpush.bf16.msra.mxu0 %v2367
        %2564 = vmatmul.bf16.gmra.mxu0 %v2052
        %v2565 = vpop.f32.mrf.mxu0
        %v2566 = vadd.f32 %v2553, %v2565
        %v2567 = vpop.f32.mrf.mxu0
        %2568 = vdwg.mxu0
        %2569 = vmatpush.bf16.msra.mxu0 %v2397
        %2570 = vmatpush.bf16.msra.mxu0 %v2395
        %2571 = vmatpush.bf16.msra.mxu0 %v2393
        %2572 = vmatpush.bf16.msra.mxu0 %v2391
        %2573 = vmatpush.bf16.msra.mxu0 %v2389
        %2574 = vmatpush.bf16.msra.mxu0 %v2387
        %2575 = vmatpush.bf16.msra.mxu0 %v2385
        %2576 = vmatpush.bf16.msra.mxu0 %v2383
        %2577 = vmatmul.bf16.gmra.mxu0 %v2053
        %v2578 = vpop.f32.mrf.mxu0
        %v2579 = vadd.f32 %v2566, %v2578
        %v2580 = vpop.f32.mrf.mxu0
        %2581 = vdwg.mxu0
        %2582 = vmatpush.bf16.msra.mxu0 %v2413
        %2583 = vmatpush.bf16.msra.mxu0 %v2411
        %2584 = vmatpush.bf16.msra.mxu0 %v2409
        %2585 = vmatpush.bf16.msra.mxu0 %v2407
        %2586 = vmatpush.bf16.msra.mxu0 %v2405
        %2587 = vmatpush.bf16.msra.mxu0 %v2403
        %2588 = vmatpush.bf16.msra.mxu0 %v2401
        %2589 = vmatpush.bf16.msra.mxu0 %v2399
        %2590 = vmatmul.bf16.gmra.mxu0 %v2054
        %v2591 = vpop.f32.mrf.mxu0
        %v2592 = vadd.f32 %v2579, %v2591
        %v2593 = vpop.f32.mrf.mxu0
        %2594 = vdwg.mxu0
        %2595 = vmatpush.bf16.msra.mxu0 %v2429
        %2596 = vmatpush.bf16.msra.mxu0 %v2427
        %2597 = vmatpush.bf16.msra.mxu0 %v2425
        %2598 = vmatpush.bf16.msra.mxu0 %v2423
        %2599 = vmatpush.bf16.msra.mxu0 %v2421
        %2600 = vmatpush.bf16.msra.mxu0 %v2419
        %2601 = vmatpush.bf16.msra.mxu0 %v2417
        %2602 = vmatpush.bf16.msra.mxu0 %v2415
        %2603 = vmatmul.bf16.gmra.mxu0 %v2055
        %v2604 = vpop.f32.mrf.mxu0
        %v2605 = vadd.f32 %v2592, %v2604
        %v2606 = vpop.f32.mrf.mxu0
        %2607 = vdwg.mxu0
        %2608 = vmatpush.bf16.msra.mxu0 %v2445
        %2609 = vmatpush.bf16.msra.mxu0 %v2443
        %2610 = vmatpush.bf16.msra.mxu0 %v2441
        %2611 = vmatpush.bf16.msra.mxu0 %v2439
        %2612 = vmatpush.bf16.msra.mxu0 %v2437
        %2613 = vmatpush.bf16.msra.mxu0 %v2435
        %2614 = vmatpush.bf16.msra.mxu0 %v2433
        %2615 = vmatpush.bf16.msra.mxu0 %v2431
        %2616 = vmatmul.bf16.gmra.mxu0 %v2056
        %v2617 = vpop.f32.mrf.mxu0
        %v2618 = vadd.f32 %v2605, %v2617
        %v2619 = vpop.f32.mrf.mxu0
        %2620 = vdwg.mxu0
        %2621 = vmatpush.bf16.msra.mxu0 %v2366
        %2622 = vmatpush.bf16.msra.mxu0 %v2364
        %2623 = vmatpush.bf16.msra.mxu0 %v2362
        %2624 = vmatpush.bf16.msra.mxu0 %v2360
        %2625 = vmatpush.bf16.msra.mxu0 %v2358
        %2626 = vmatpush.bf16.msra.mxu0 %v2356
        %2627 = vmatpush.bf16.msra.mxu0 %v2354
        %2628 = vmatpush.bf16.msra.mxu0 %v2352
        %2629 = vmatmul.bf16.gmra.mxu0 %v2051
        %v2630 = vpop.f32.mrf.mxu0
        %v2631 = vadd.f32 %v2048, %v2630
        %v2632 = vpop.f32.mrf.mxu0
        %2633 = vdwg.mxu0
        %2634 = vmatpush.bf16.msra.mxu0 %v2382
        %2635 = vmatpush.bf16.msra.mxu0 %v2380
        %2636 = vmatpush.bf16.msra.mxu0 %v2378
        %2637 = vmatpush.bf16.msra.mxu0 %v2376
        %2638 = vmatpush.bf16.msra.mxu0 %v2374
        %2639 = vmatpush.bf16.msra.mxu0 %v2372
        %2640 = vmatpush.bf16.msra.mxu0 %v2370
        %2641 = vmatpush.bf16.msra.mxu0 %v2368
        %2642 = vmatmul.bf16.gmra.mxu0 %v2052
        %v2643 = vpop.f32.mrf.mxu0
        %v2644 = vadd.f32 %v2631, %v2643
        %v2645 = vpop.f32.mrf.mxu0
        %2646 = vdwg.mxu0
        %2647 = vmatpush.bf16.msra.mxu0 %v2398
        %2648 = vmatpush.bf16.msra.mxu0 %v2396
        %2649 = vmatpush.bf16.msra.mxu0 %v2394
        %2650 = vmatpush.bf16.msra.mxu0 %v2392
        %2651 = vmatpush.bf16.msra.mxu0 %v2390
        %2652 = vmatpush.bf16.msra.mxu0 %v2388
        %2653 = vmatpush.bf16.msra.mxu0 %v2386
        %2654 = vmatpush.bf16.msra.mxu0 %v2384
        %2655 = vmatmul.bf16.gmra.mxu0 %v2053
        %v2656 = vpop.f32.mrf.mxu0
        %v2657 = vadd.f32 %v2644, %v2656
        %v2658 = vpop.f32.mrf.mxu0
        %2659 = vdwg.mxu0
        %2660 = vmatpush.bf16.msra.mxu0 %v2414
        %2661 = vmatpush.bf16.msra.mxu0 %v2412
        %2662 = vmatpush.bf16.msra.mxu0 %v2410
        %2663 = vmatpush.bf16.msra.mxu0 %v2408
        %2664 = vmatpush.bf16.msra.mxu0 %v2406
        %2665 = vmatpush.bf16.msra.mxu0 %v2404
        %2666 = vmatpush.bf16.msra.mxu0 %v2402
        %2667 = vmatpush.bf16.msra.mxu0 %v2400
        %2668 = vmatmul.bf16.gmra.mxu0 %v2054
        %v2669 = vpop.f32.mrf.mxu0
        %v2670 = vadd.f32 %v2657, %v2669
        %v2671 = vpop.f32.mrf.mxu0
        %2672 = vdwg.mxu0
        %2673 = vmatpush.bf16.msra.mxu0 %v2430
        %2674 = vmatpush.bf16.msra.mxu0 %v2428
        %2675 = vmatpush.bf16.msra.mxu0 %v2426
        %2676 = vmatpush.bf16.msra.mxu0 %v2424
        %2677 = vmatpush.bf16.msra.mxu0 %v2422
        %2678 = vmatpush.bf16.msra.mxu0 %v2420
        %2679 = vmatpush.bf16.msra.mxu0 %v2418
        %2680 = vmatpush.bf16.msra.mxu0 %v2416
        %2681 = vmatmul.bf16.gmra.mxu0 %v2055
        %v2682 = vpop.f32.mrf.mxu0
        %v2683 = vadd.f32 %v2670, %v2682
        %v2684 = vpop.f32.mrf.mxu0
        %2685 = vdwg.mxu0
        %2686 = vmatpush.bf16.msra.mxu0 %v2446
        %2687 = vmatpush.bf16.msra.mxu0 %v2444
        %2688 = vmatpush.bf16.msra.mxu0 %v2442
        %2689 = vmatpush.bf16.msra.mxu0 %v2440
        %2690 = vmatpush.bf16.msra.mxu0 %v2438
        %2691 = vmatpush.bf16.msra.mxu0 %v2436
        %2692 = vmatpush.bf16.msra.mxu0 %v2434
        %2693 = vmatpush.bf16.msra.mxu0 %v2432
        %2694 = vmatmul.bf16.gmra.mxu0 %v2056
        %v2695 = vpop.f32.mrf.mxu0
        %v2696 = vadd.f32 %v2683, %v2695
        %v2697 = vpop.f32.mrf.mxu0
        %2698 = vdwg.mxu0
        %v2699 = vmax.f32 %v2618, 0.0
        %v2700 = vmax.f32 %v2696, 0.0
        %v2701 = vld [vmem:[#allocation4] sm:$0xff]
        %v2702 = vld [vmem:[#allocation4 + $0x8] sm:$0xff]
        %v2703 = vld [vmem:[#allocation4 + $0x10] sm:$0xff]
        %v2704 = vld [vmem:[#allocation4 + $0x18] sm:$0xff]
        %v2705 = vld [vmem:[#allocation4 + $0x20] sm:$0xff]
        %v2706 = vld [vmem:[#allocation4 + $0x28] sm:$0xff]
        %v2707 = vld [vmem:[%s442] sm:$0xff]
        %v2708 = vld [vmem:[%s442 + $0x8] sm:$0xff]
        %v2709 = vld [vmem:[%s442 + $0x10] sm:$0xff]
        %v2710 = vld [vmem:[%s442 + $0x18] sm:$0xff]
        %v2711 = vld [vmem:[%s442 + $0x20] sm:$0xff]
        %v2712 = vld [vmem:[%s442 + $0x28] sm:$0xff]
        %v2713 = vld [vmem:[%s442 + $0x30] sm:$0xff]
        %v2714 = vld [vmem:[%s442 + $0x38] sm:$0xff]
        %v2715 = vld [vmem:[%s442 + $0x40] sm:$0xff]
        %v2716 = vld [vmem:[%s442 + $0x48] sm:$0xff]
        %v2717 = vld [vmem:[%s442 + $0x50] sm:$0xff]
        %v2718 = vld [vmem:[%s442 + $0x58] sm:$0xff]
        %v2719 = vld [vmem:[%s442 + $0x60] sm:$0xff]
        %v2720 = vld [vmem:[%s442 + $0x68] sm:$0xff]
        %v2721 = vld [vmem:[%s442 + $0x70] sm:$0xff]
        %v2722 = vld [vmem:[%s442 + $0x78] sm:$0xff]
        %v2723 = vld [vmem:[%s442 + $0x80] sm:$0xff]
        %v2724 = vld [vmem:[%s442 + $0x88] sm:$0xff]
        %v2725 = vld [vmem:[%s442 + $0x90] sm:$0xff]
        %v2726 = vld [vmem:[%s442 + $0x98] sm:$0xff]
        %v2727 = vld [vmem:[%s442 + $0xa0] sm:$0xff]
        %v2728 = vld [vmem:[%s442 + $0xa8] sm:$0xff]
        %v2729 = vld [vmem:[%s442 + $0xb0] sm:$0xff]
        %v2730 = vld [vmem:[%s442 + $0xb8] sm:$0xff]
        %v2731 = vld [vmem:[%s442 + $0xc0] sm:$0xff]
        %v2732 = vld [vmem:[%s442 + $0xc8] sm:$0xff]
        %v2733 = vld [vmem:[%s442 + $0xd0] sm:$0xff]
        %v2734 = vld [vmem:[%s442 + $0xd8] sm:$0xff]
        %v2735 = vld [vmem:[%s442 + $0xe0] sm:$0xff]
        %v2736 = vld [vmem:[%s442 + $0xe8] sm:$0xff]
        %v2737 = vld [vmem:[%s442 + $0xf0] sm:$0xff]
        %v2738 = vld [vmem:[%s442 + $0xf8] sm:$0xff]
        %v2739 = vld [vmem:[%s442 + $0x100] sm:$0xff]
        %v2740 = vld [vmem:[%s442 + $0x108] sm:$0xff]
        %v2741 = vld [vmem:[%s442 + $0x110] sm:$0xff]
        %v2742 = vld [vmem:[%s442 + $0x118] sm:$0xff]
        %v2743 = vld [vmem:[%s442 + $0x120] sm:$0xff]
        %v2744 = vld [vmem:[%s442 + $0x128] sm:$0xff]
        %v2745 = vld [vmem:[%s442 + $0x130] sm:$0xff]
        %v2746 = vld [vmem:[%s442 + $0x138] sm:$0xff]
        %v2747 = vld [vmem:[%s442 + $0x140] sm:$0xff]
        %v2748 = vld [vmem:[%s442 + $0x148] sm:$0xff]
        %v2749 = vld [vmem:[%s442 + $0x150] sm:$0xff]
        %v2750 = vld [vmem:[%s442 + $0x158] sm:$0xff]
        %v2751 = vld [vmem:[%s442 + $0x160] sm:$0xff]
        %v2752 = vld [vmem:[%s442 + $0x168] sm:$0xff]
        %v2753 = vld [vmem:[%s442 + $0x170] sm:$0xff]
        %v2754 = vld [vmem:[%s442 + $0x178] sm:$0xff]
        %v2755 = vld [vmem:[%s442 + $0x180] sm:$0xff]
        %v2756 = vld [vmem:[%s442 + $0x188] sm:$0xff]
        %v2757 = vld [vmem:[%s442 + $0x190] sm:$0xff]
        %v2758 = vld [vmem:[%s442 + $0x198] sm:$0xff]
        %v2759 = vld [vmem:[%s442 + $0x1a0] sm:$0xff]
        %v2760 = vld [vmem:[%s442 + $0x1a8] sm:$0xff]
        %v2761 = vld [vmem:[%s442 + $0x1b0] sm:$0xff]
        %v2762 = vld [vmem:[%s442 + $0x1b8] sm:$0xff]
        %v2763 = vld [vmem:[%s442 + $0x1c0] sm:$0xff]
        %v2764 = vld [vmem:[%s442 + $0x1c8] sm:$0xff]
        %v2765 = vld [vmem:[%s442 + $0x1d0] sm:$0xff]
        %v2766 = vld [vmem:[%s442 + $0x1d8] sm:$0xff]
        %v2767 = vld [vmem:[%s442 + $0x1e0] sm:$0xff]
        %v2768 = vld [vmem:[%s442 + $0x1e8] sm:$0xff]
        %v2769 = vld [vmem:[%s442 + $0x1f0] sm:$0xff]
        %v2770 = vld [vmem:[%s442 + $0x1f8] sm:$0xff]
        %v2771 = vld [vmem:[%s442 + $0x200] sm:$0xff]
        %v2772 = vld [vmem:[%s442 + $0x208] sm:$0xff]
        %v2773 = vld [vmem:[%s442 + $0x210] sm:$0xff]
        %v2774 = vld [vmem:[%s442 + $0x218] sm:$0xff]
        %v2775 = vld [vmem:[%s442 + $0x220] sm:$0xff]
        %v2776 = vld [vmem:[%s442 + $0x228] sm:$0xff]
        %v2777 = vld [vmem:[%s442 + $0x230] sm:$0xff]
        %v2778 = vld [vmem:[%s442 + $0x238] sm:$0xff]
        %v2779 = vld [vmem:[%s442 + $0x240] sm:$0xff]
        %v2780 = vld [vmem:[%s442 + $0x248] sm:$0xff]
        %v2781 = vld [vmem:[%s442 + $0x250] sm:$0xff]
        %v2782 = vld [vmem:[%s442 + $0x258] sm:$0xff]
        %v2783 = vld [vmem:[%s442 + $0x260] sm:$0xff]
        %v2784 = vld [vmem:[%s442 + $0x268] sm:$0xff]
        %v2785 = vld [vmem:[%s442 + $0x270] sm:$0xff]
        %v2786 = vld [vmem:[%s442 + $0x278] sm:$0xff]
        %v2787 = vld [vmem:[%s442 + $0x280] sm:$0xff]
        %v2788 = vld [vmem:[%s442 + $0x288] sm:$0xff]
        %v2789 = vld [vmem:[%s442 + $0x290] sm:$0xff]
        %v2790 = vld [vmem:[%s442 + $0x298] sm:$0xff]
        %v2791 = vld [vmem:[%s442 + $0x2a0] sm:$0xff]
        %v2792 = vld [vmem:[%s442 + $0x2a8] sm:$0xff]
        %v2793 = vld [vmem:[%s442 + $0x2b0] sm:$0xff]
        %v2794 = vld [vmem:[%s442 + $0x2b8] sm:$0xff]
        %v2795 = vld [vmem:[%s442 + $0x2c0] sm:$0xff]
        %v2796 = vld [vmem:[%s442 + $0x2c8] sm:$0xff]
        %v2797 = vld [vmem:[%s442 + $0x2d0] sm:$0xff]
        %v2798 = vld [vmem:[%s442 + $0x2d8] sm:$0xff]
        %v2799 = vld [vmem:[%s442 + $0x2e0] sm:$0xff]
        %v2800 = vld [vmem:[%s442 + $0x2e8] sm:$0xff]
        %v2801 = vld [vmem:[%s442 + $0x2f0] sm:$0xff]
        %v2802 = vld [vmem:[%s442 + $0x2f8] sm:$0xff]
        %v2803 = vperm.slane %v1944, 1
        %v2804 = vperm.slane %v1944, 3
        %v2807 = vperm.slane %v2803, 1
        %v2808 = vperm.slane %v2804, 1
        %v2815 = vunpack.c.l.b16 %v2701
        %v2816 = vunpack.c.h.b16 %v2701
        %v2817 = vunpack.c.l.b16 %v2702
        %v2818 = vunpack.c.h.b16 %v2702
        %v2819 = vunpack.c.l.b16 %v2703
        %v2820 = vunpack.c.h.b16 %v2703
        %v2821 = vunpack.c.l.b16 %v2704
        %v2822 = vunpack.c.h.b16 %v2704
        %v2823 = vunpack.c.l.b16 %v2705
        %v2824 = vunpack.c.h.b16 %v2705
        %v2825 = vunpack.c.l.b16 %v2706
        %v2826 = vunpack.c.h.b16 %v2706
        %v2827 = vpack.c.b16 %v2821, %v2815
        %v2828 = vpack.c.b16 %v2822, %v2816
        %v2829 = vpack.c.b16 %v2823, %v2817
        %v2830 = vpack.c.b16 %v2824, %v2818
        %v2831 = vpack.c.b16 %v2825, %v2819
        %v2832 = vpack.c.b16 %v2826, %v2820
        %v2935 = vunpack.c.l.b16 %v2707
        %v2936 = vunpack.c.h.b16 %v2707
        %v2937 = vunpack.c.l.b16 %v2708
        %v2938 = vunpack.c.h.b16 %v2708
        %v2939 = vunpack.c.l.b16 %v2709
        %v2940 = vunpack.c.h.b16 %v2709
        %v2941 = vunpack.c.l.b16 %v2710
        %v2942 = vunpack.c.h.b16 %v2710
        %v2943 = vunpack.c.l.b16 %v2711
        %v2944 = vunpack.c.h.b16 %v2711
        %v2945 = vunpack.c.l.b16 %v2712
        %v2946 = vunpack.c.h.b16 %v2712
        %v2947 = vunpack.c.l.b16 %v2713
        %v2948 = vunpack.c.h.b16 %v2713
        %v2949 = vunpack.c.l.b16 %v2714
        %v2950 = vunpack.c.h.b16 %v2714
        %v2951 = vunpack.c.l.b16 %v2715
        %v2952 = vunpack.c.h.b16 %v2715
        %v2953 = vunpack.c.l.b16 %v2716
        %v2954 = vunpack.c.h.b16 %v2716
        %v2955 = vunpack.c.l.b16 %v2717
        %v2956 = vunpack.c.h.b16 %v2717
        %v2957 = vunpack.c.l.b16 %v2718
        %v2958 = vunpack.c.h.b16 %v2718
        %v2959 = vunpack.c.l.b16 %v2719
        %v2960 = vunpack.c.h.b16 %v2719
        %v2961 = vunpack.c.l.b16 %v2720
        %v2962 = vunpack.c.h.b16 %v2720
        %v2963 = vunpack.c.l.b16 %v2721
        %v2964 = vunpack.c.h.b16 %v2721
        %v2965 = vunpack.c.l.b16 %v2722
        %v2966 = vunpack.c.h.b16 %v2722
        %v2967 = vunpack.c.l.b16 %v2723
        %v2968 = vunpack.c.h.b16 %v2723
        %v2969 = vunpack.c.l.b16 %v2724
        %v2970 = vunpack.c.h.b16 %v2724
        %v2971 = vunpack.c.l.b16 %v2725
        %v2972 = vunpack.c.h.b16 %v2725
        %v2973 = vunpack.c.l.b16 %v2726
        %v2974 = vunpack.c.h.b16 %v2726
        %v2975 = vunpack.c.l.b16 %v2727
        %v2976 = vunpack.c.h.b16 %v2727
        %v2977 = vunpack.c.l.b16 %v2728
        %v2978 = vunpack.c.h.b16 %v2728
        %v2979 = vunpack.c.l.b16 %v2729
        %v2980 = vunpack.c.h.b16 %v2729
        %v2981 = vunpack.c.l.b16 %v2730
        %v2982 = vunpack.c.h.b16 %v2730
        %v2983 = vunpack.c.l.b16 %v2731
        %v2984 = vunpack.c.h.b16 %v2731
        %v2985 = vunpack.c.l.b16 %v2732
        %v2986 = vunpack.c.h.b16 %v2732
        %v2987 = vunpack.c.l.b16 %v2733
        %v2988 = vunpack.c.h.b16 %v2733
        %v2989 = vunpack.c.l.b16 %v2734
        %v2990 = vunpack.c.h.b16 %v2734
        %v2991 = vunpack.c.l.b16 %v2735
        %v2992 = vunpack.c.h.b16 %v2735
        %v2993 = vunpack.c.l.b16 %v2736
        %v2994 = vunpack.c.h.b16 %v2736
        %v2995 = vunpack.c.l.b16 %v2737
        %v2996 = vunpack.c.h.b16 %v2737
        %v2997 = vunpack.c.l.b16 %v2738
        %v2998 = vunpack.c.h.b16 %v2738
        %v2999 = vunpack.c.l.b16 %v2739
        %v3000 = vunpack.c.h.b16 %v2739
        %v3001 = vunpack.c.l.b16 %v2740
        %v3002 = vunpack.c.h.b16 %v2740
        %v3003 = vunpack.c.l.b16 %v2741
        %v3004 = vunpack.c.h.b16 %v2741
        %v3005 = vunpack.c.l.b16 %v2742
        %v3006 = vunpack.c.h.b16 %v2742
        %v3007 = vunpack.c.l.b16 %v2743
        %v3008 = vunpack.c.h.b16 %v2743
        %v3009 = vunpack.c.l.b16 %v2744
        %v3010 = vunpack.c.h.b16 %v2744
        %v3011 = vunpack.c.l.b16 %v2745
        %v3012 = vunpack.c.h.b16 %v2745
        %v3013 = vunpack.c.l.b16 %v2746
        %v3014 = vunpack.c.h.b16 %v2746
        %v3015 = vunpack.c.l.b16 %v2747
        %v3016 = vunpack.c.h.b16 %v2747
        %v3017 = vunpack.c.l.b16 %v2748
        %v3018 = vunpack.c.h.b16 %v2748
        %v3019 = vunpack.c.l.b16 %v2749
        %v3020 = vunpack.c.h.b16 %v2749
        %v3021 = vunpack.c.l.b16 %v2750
        %v3022 = vunpack.c.h.b16 %v2750
        %v3023 = vunpack.c.l.b16 %v2751
        %v3024 = vunpack.c.h.b16 %v2751
        %v3025 = vunpack.c.l.b16 %v2752
        %v3026 = vunpack.c.h.b16 %v2752
        %v3027 = vunpack.c.l.b16 %v2753
        %v3028 = vunpack.c.h.b16 %v2753
        %v3029 = vunpack.c.l.b16 %v2754
        %v3030 = vunpack.c.h.b16 %v2754
        %v3031 = vunpack.c.l.b16 %v2755
        %v3032 = vunpack.c.h.b16 %v2755
        %v3033 = vunpack.c.l.b16 %v2756
        %v3034 = vunpack.c.h.b16 %v2756
        %v3035 = vunpack.c.l.b16 %v2757
        %v3036 = vunpack.c.h.b16 %v2757
        %v3037 = vunpack.c.l.b16 %v2758
        %v3038 = vunpack.c.h.b16 %v2758
        %v3039 = vunpack.c.l.b16 %v2759
        %v3040 = vunpack.c.h.b16 %v2759
        %v3041 = vunpack.c.l.b16 %v2760
        %v3042 = vunpack.c.h.b16 %v2760
        %v3043 = vunpack.c.l.b16 %v2761
        %v3044 = vunpack.c.h.b16 %v2761
        %v3045 = vunpack.c.l.b16 %v2762
        %v3046 = vunpack.c.h.b16 %v2762
        %v3047 = vunpack.c.l.b16 %v2763
        %v3048 = vunpack.c.h.b16 %v2763
        %v3049 = vunpack.c.l.b16 %v2764
        %v3050 = vunpack.c.h.b16 %v2764
        %v3051 = vunpack.c.l.b16 %v2765
        %v3052 = vunpack.c.h.b16 %v2765
        %v3053 = vunpack.c.l.b16 %v2766
        %v3054 = vunpack.c.h.b16 %v2766
        %v3055 = vunpack.c.l.b16 %v2767
        %v3056 = vunpack.c.h.b16 %v2767
        %v3057 = vunpack.c.l.b16 %v2768
        %v3058 = vunpack.c.h.b16 %v2768
        %v3059 = vunpack.c.l.b16 %v2769
        %v3060 = vunpack.c.h.b16 %v2769
        %v3061 = vunpack.c.l.b16 %v2770
        %v3062 = vunpack.c.h.b16 %v2770
        %v3063 = vunpack.c.l.b16 %v2771
        %v3064 = vunpack.c.h.b16 %v2771
        %v3065 = vunpack.c.l.b16 %v2772
        %v3066 = vunpack.c.h.b16 %v2772
        %v3067 = vunpack.c.l.b16 %v2773
        %v3068 = vunpack.c.h.b16 %v2773
        %v3069 = vunpack.c.l.b16 %v2774
        %v3070 = vunpack.c.h.b16 %v2774
        %v3071 = vunpack.c.l.b16 %v2775
        %v3072 = vunpack.c.h.b16 %v2775
        %v3073 = vunpack.c.l.b16 %v2776
        %v3074 = vunpack.c.h.b16 %v2776
        %v3075 = vunpack.c.l.b16 %v2777
        %v3076 = vunpack.c.h.b16 %v2777
        %v3077 = vunpack.c.l.b16 %v2778
        %v3078 = vunpack.c.h.b16 %v2778
        %v3079 = vunpack.c.l.b16 %v2779
        %v3080 = vunpack.c.h.b16 %v2779
        %v3081 = vunpack.c.l.b16 %v2780
        %v3082 = vunpack.c.h.b16 %v2780
        %v3083 = vunpack.c.l.b16 %v2781
        %v3084 = vunpack.c.h.b16 %v2781
        %v3085 = vunpack.c.l.b16 %v2782
        %v3086 = vunpack.c.h.b16 %v2782
        %v3087 = vunpack.c.l.b16 %v2783
        %v3088 = vunpack.c.h.b16 %v2783
        %v3089 = vunpack.c.l.b16 %v2784
        %v3090 = vunpack.c.h.b16 %v2784
        %v3091 = vunpack.c.l.b16 %v2785
        %v3092 = vunpack.c.h.b16 %v2785
        %v3093 = vunpack.c.l.b16 %v2786
        %v3094 = vunpack.c.h.b16 %v2786
        %v3095 = vunpack.c.l.b16 %v2787
        %v3096 = vunpack.c.h.b16 %v2787
        %v3097 = vunpack.c.l.b16 %v2788
        %v3098 = vunpack.c.h.b16 %v2788
        %v3099 = vunpack.c.l.b16 %v2789
        %v3100 = vunpack.c.h.b16 %v2789
        %v3101 = vunpack.c.l.b16 %v2790
        %v3102 = vunpack.c.h.b16 %v2790
        %v3103 = vunpack.c.l.b16 %v2791
        %v3104 = vunpack.c.h.b16 %v2791
        %v3105 = vunpack.c.l.b16 %v2792
        %v3106 = vunpack.c.h.b16 %v2792
        %v3107 = vunpack.c.l.b16 %v2793
        %v3108 = vunpack.c.h.b16 %v2793
        %v3109 = vunpack.c.l.b16 %v2794
        %v3110 = vunpack.c.h.b16 %v2794
        %v3111 = vunpack.c.l.b16 %v2795
        %v3112 = vunpack.c.h.b16 %v2795
        %v3113 = vunpack.c.l.b16 %v2796
        %v3114 = vunpack.c.h.b16 %v2796
        %v3115 = vunpack.c.l.b16 %v2797
        %v3116 = vunpack.c.h.b16 %v2797
        %v3117 = vunpack.c.l.b16 %v2798
        %v3118 = vunpack.c.h.b16 %v2798
        %v3119 = vunpack.c.l.b16 %v2799
        %v3120 = vunpack.c.h.b16 %v2799
        %v3121 = vunpack.c.l.b16 %v2800
        %v3122 = vunpack.c.h.b16 %v2800
        %v3123 = vunpack.c.l.b16 %v2801
        %v3124 = vunpack.c.h.b16 %v2801
        %v3125 = vunpack.c.l.b16 %v2802
        %v3126 = vunpack.c.h.b16 %v2802
        %v3127 = vpack.c.b16 %v2937, %v2935
        %v3128 = vpack.c.b16 %v2938, %v2936
        %v3129 = vpack.c.b16 %v2941, %v2939
        %v3130 = vpack.c.b16 %v2942, %v2940
        %v3131 = vpack.c.b16 %v2945, %v2943
        %v3132 = vpack.c.b16 %v2946, %v2944
        %v3133 = vpack.c.b16 %v2949, %v2947
        %v3134 = vpack.c.b16 %v2950, %v2948
        %v3135 = vpack.c.b16 %v2953, %v2951
        %v3136 = vpack.c.b16 %v2954, %v2952
        %v3137 = vpack.c.b16 %v2957, %v2955
        %v3138 = vpack.c.b16 %v2958, %v2956
        %v3139 = vpack.c.b16 %v2961, %v2959
        %v3140 = vpack.c.b16 %v2962, %v2960
        %v3141 = vpack.c.b16 %v2965, %v2963
        %v3142 = vpack.c.b16 %v2966, %v2964
        %v3143 = vpack.c.b16 %v2969, %v2967
        %v3144 = vpack.c.b16 %v2970, %v2968
        %v3145 = vpack.c.b16 %v2973, %v2971
        %v3146 = vpack.c.b16 %v2974, %v2972
        %v3147 = vpack.c.b16 %v2977, %v2975
        %v3148 = vpack.c.b16 %v2978, %v2976
        %v3149 = vpack.c.b16 %v2981, %v2979
        %v3150 = vpack.c.b16 %v2982, %v2980
        %v3151 = vpack.c.b16 %v2985, %v2983
        %v3152 = vpack.c.b16 %v2986, %v2984
        %v3153 = vpack.c.b16 %v2989, %v2987
        %v3154 = vpack.c.b16 %v2990, %v2988
        %v3155 = vpack.c.b16 %v2993, %v2991
        %v3156 = vpack.c.b16 %v2994, %v2992
        %v3157 = vpack.c.b16 %v2997, %v2995
        %v3158 = vpack.c.b16 %v2998, %v2996
        %v3159 = vpack.c.b16 %v3001, %v2999
        %v3160 = vpack.c.b16 %v3002, %v3000
        %v3161 = vpack.c.b16 %v3005, %v3003
        %v3162 = vpack.c.b16 %v3006, %v3004
        %v3163 = vpack.c.b16 %v3009, %v3007
        %v3164 = vpack.c.b16 %v3010, %v3008
        %v3165 = vpack.c.b16 %v3013, %v3011
        %v3166 = vpack.c.b16 %v3014, %v3012
        %v3167 = vpack.c.b16 %v3017, %v3015
        %v3168 = vpack.c.b16 %v3018, %v3016
        %v3169 = vpack.c.b16 %v3021, %v3019
        %v3170 = vpack.c.b16 %v3022, %v3020
        %v3171 = vpack.c.b16 %v3025, %v3023
        %v3172 = vpack.c.b16 %v3026, %v3024
        %v3173 = vpack.c.b16 %v3029, %v3027
        %v3174 = vpack.c.b16 %v3030, %v3028
        %v3175 = vpack.c.b16 %v3033, %v3031
        %v3176 = vpack.c.b16 %v3034, %v3032
        %v3177 = vpack.c.b16 %v3037, %v3035
        %v3178 = vpack.c.b16 %v3038, %v3036
        %v3179 = vpack.c.b16 %v3041, %v3039
        %v3180 = vpack.c.b16 %v3042, %v3040
        %v3181 = vpack.c.b16 %v3045, %v3043
        %v3182 = vpack.c.b16 %v3046, %v3044
        %v3183 = vpack.c.b16 %v3049, %v3047
        %v3184 = vpack.c.b16 %v3050, %v3048
        %v3185 = vpack.c.b16 %v3053, %v3051
        %v3186 = vpack.c.b16 %v3054, %v3052
        %v3187 = vpack.c.b16 %v3057, %v3055
        %v3188 = vpack.c.b16 %v3058, %v3056
        %v3189 = vpack.c.b16 %v3061, %v3059
        %v3190 = vpack.c.b16 %v3062, %v3060
        %v3191 = vpack.c.b16 %v3065, %v3063
        %v3192 = vpack.c.b16 %v3066, %v3064
        %v3193 = vpack.c.b16 %v3069, %v3067
        %v3194 = vpack.c.b16 %v3070, %v3068
        %v3195 = vpack.c.b16 %v3073, %v3071
        %v3196 = vpack.c.b16 %v3074, %v3072
        %v3197 = vpack.c.b16 %v3077, %v3075
        %v3198 = vpack.c.b16 %v3078, %v3076
        %v3199 = vpack.c.b16 %v3081, %v3079
        %v3200 = vpack.c.b16 %v3082, %v3080
        %v3201 = vpack.c.b16 %v3085, %v3083
        %v3202 = vpack.c.b16 %v3086, %v3084
        %v3203 = vpack.c.b16 %v3089, %v3087
        %v3204 = vpack.c.b16 %v3090, %v3088
        %v3205 = vpack.c.b16 %v3093, %v3091
        %v3206 = vpack.c.b16 %v3094, %v3092
        %v3207 = vpack.c.b16 %v3097, %v3095
        %v3208 = vpack.c.b16 %v3098, %v3096
        %v3209 = vpack.c.b16 %v3101, %v3099
        %v3210 = vpack.c.b16 %v3102, %v3100
        %v3211 = vpack.c.b16 %v3105, %v3103
        %v3212 = vpack.c.b16 %v3106, %v3104
        %v3213 = vpack.c.b16 %v3109, %v3107
        %v3214 = vpack.c.b16 %v3110, %v3108
        %v3215 = vpack.c.b16 %v3113, %v3111
        %v3216 = vpack.c.b16 %v3114, %v3112
        %v3217 = vpack.c.b16 %v3117, %v3115
        %v3218 = vpack.c.b16 %v3118, %v3116
        %v3219 = vpack.c.b16 %v3121, %v3119
        %v3220 = vpack.c.b16 %v3122, %v3120
        %v3221 = vpack.c.b16 %v3125, %v3123
        %v3222 = vpack.c.b16 %v3126, %v3124
        %3319 = vmatpush.bf16.msra.mxu0 %v3141
        %3320 = vmatpush.bf16.msra.mxu0 %v3139
        %3321 = vmatpush.bf16.msra.mxu0 %v3137
        %3322 = vmatpush.bf16.msra.mxu0 %v3135
        %3323 = vmatpush.bf16.msra.mxu0 %v3133
        %3324 = vmatpush.bf16.msra.mxu0 %v3131
        %3325 = vmatpush.bf16.msra.mxu0 %v3129
        %3326 = vmatpush.bf16.msra.mxu0 %v3127
        %3327 = vmatmul.bf16.gmra.mxu0 %v2827
        %v3328 = vpop.f32.mrf.mxu0
        %v3329 = vadd.f32 %v2807, %v3328
        %v3330 = vpop.f32.mrf.mxu0
        %v3331 = vadd.f32 %v2807, %v3330
        %3332 = vdwg.mxu0
        %3333 = vmatpush.bf16.msra.mxu0 %v3157
        %3334 = vmatpush.bf16.msra.mxu0 %v3155
        %3335 = vmatpush.bf16.msra.mxu0 %v3153
        %3336 = vmatpush.bf16.msra.mxu0 %v3151
        %3337 = vmatpush.bf16.msra.mxu0 %v3149
        %3338 = vmatpush.bf16.msra.mxu0 %v3147
        %3339 = vmatpush.bf16.msra.mxu0 %v3145
        %3340 = vmatpush.bf16.msra.mxu0 %v3143
        %3341 = vmatmul.bf16.gmra.mxu0 %v2828
        %v3342 = vpop.f32.mrf.mxu0
        %v3343 = vadd.f32 %v3329, %v3342
        %v3344 = vpop.f32.mrf.mxu0
        %v3345 = vadd.f32 %v3331, %v3344
        %3346 = vdwg.mxu0
        %3347 = vmatpush.bf16.msra.mxu0 %v3173
        %3348 = vmatpush.bf16.msra.mxu0 %v3171
        %3349 = vmatpush.bf16.msra.mxu0 %v3169
        %3350 = vmatpush.bf16.msra.mxu0 %v3167
        %3351 = vmatpush.bf16.msra.mxu0 %v3165
        %3352 = vmatpush.bf16.msra.mxu0 %v3163
        %3353 = vmatpush.bf16.msra.mxu0 %v3161
        %3354 = vmatpush.bf16.msra.mxu0 %v3159
        %3355 = vmatmul.bf16.gmra.mxu0 %v2829
        %v3356 = vpop.f32.mrf.mxu0
        %v3357 = vadd.f32 %v3343, %v3356
        %v3358 = vpop.f32.mrf.mxu0
        %v3359 = vadd.f32 %v3345, %v3358
        %3360 = vdwg.mxu0
        %3361 = vmatpush.bf16.msra.mxu0 %v3189
        %3362 = vmatpush.bf16.msra.mxu0 %v3187
        %3363 = vmatpush.bf16.msra.mxu0 %v3185
        %3364 = vmatpush.bf16.msra.mxu0 %v3183
        %3365 = vmatpush.bf16.msra.mxu0 %v3181
        %3366 = vmatpush.bf16.msra.mxu0 %v3179
        %3367 = vmatpush.bf16.msra.mxu0 %v3177
        %3368 = vmatpush.bf16.msra.mxu0 %v3175
        %3369 = vmatmul.bf16.gmra.mxu0 %v2830
        %v3370 = vpop.f32.mrf.mxu0
        %v3371 = vadd.f32 %v3357, %v3370
        %v3372 = vpop.f32.mrf.mxu0
        %v3373 = vadd.f32 %v3359, %v3372
        %3374 = vdwg.mxu0
        %3375 = vmatpush.bf16.msra.mxu0 %v3205
        %3376 = vmatpush.bf16.msra.mxu0 %v3203
        %3377 = vmatpush.bf16.msra.mxu0 %v3201
        %3378 = vmatpush.bf16.msra.mxu0 %v3199
        %3379 = vmatpush.bf16.msra.mxu0 %v3197
        %3380 = vmatpush.bf16.msra.mxu0 %v3195
        %3381 = vmatpush.bf16.msra.mxu0 %v3193
        %3382 = vmatpush.bf16.msra.mxu0 %v3191
        %3383 = vmatmul.bf16.gmra.mxu0 %v2831
        %v3384 = vpop.f32.mrf.mxu0
        %v3385 = vadd.f32 %v3371, %v3384
        %v3386 = vpop.f32.mrf.mxu0
        %v3387 = vadd.f32 %v3373, %v3386
        %3388 = vdwg.mxu0
        %3389 = vmatpush.bf16.msra.mxu0 %v3221
        %3390 = vmatpush.bf16.msra.mxu0 %v3219
        %3391 = vmatpush.bf16.msra.mxu0 %v3217
        %3392 = vmatpush.bf16.msra.mxu0 %v3215
        %3393 = vmatpush.bf16.msra.mxu0 %v3213
        %3394 = vmatpush.bf16.msra.mxu0 %v3211
        %3395 = vmatpush.bf16.msra.mxu0 %v3209
        %3396 = vmatpush.bf16.msra.mxu0 %v3207
        %3397 = vmatmul.bf16.gmra.mxu0 %v2832
        %v3398 = vpop.f32.mrf.mxu0
        %v3399 = vadd.f32 %v3385, %v3398
        %v3400 = vpop.f32.mrf.mxu0
        %v3401 = vadd.f32 %v3387, %v3400
        %3402 = vdwg.mxu0
        %3403 = vmatpush.bf16.msra.mxu0 %v3142
        %3404 = vmatpush.bf16.msra.mxu0 %v3140
        %3405 = vmatpush.bf16.msra.mxu0 %v3138
        %3406 = vmatpush.bf16.msra.mxu0 %v3136
        %3407 = vmatpush.bf16.msra.mxu0 %v3134
        %3408 = vmatpush.bf16.msra.mxu0 %v3132
        %3409 = vmatpush.bf16.msra.mxu0 %v3130
        %3410 = vmatpush.bf16.msra.mxu0 %v3128
        %3411 = vmatmul.bf16.gmra.mxu0 %v2827
        %v3412 = vpop.f32.mrf.mxu0
        %v3413 = vadd.f32 %v2808, %v3412
        %v3414 = vpop.f32.mrf.mxu0
        %v3415 = vadd.f32 %v2808, %v3414
        %3416 = vdwg.mxu0
        %3417 = vmatpush.bf16.msra.mxu0 %v3158
        %3418 = vmatpush.bf16.msra.mxu0 %v3156
        %3419 = vmatpush.bf16.msra.mxu0 %v3154
        %3420 = vmatpush.bf16.msra.mxu0 %v3152
        %3421 = vmatpush.bf16.msra.mxu0 %v3150
        %3422 = vmatpush.bf16.msra.mxu0 %v3148
        %3423 = vmatpush.bf16.msra.mxu0 %v3146
        %3424 = vmatpush.bf16.msra.mxu0 %v3144
        %3425 = vmatmul.bf16.gmra.mxu0 %v2828
        %v3426 = vpop.f32.mrf.mxu0
        %v3427 = vadd.f32 %v3413, %v3426
        %v3428 = vpop.f32.mrf.mxu0
        %v3429 = vadd.f32 %v3415, %v3428
        %3430 = vdwg.mxu0
        %3431 = vmatpush.bf16.msra.mxu0 %v3174
        %3432 = vmatpush.bf16.msra.mxu0 %v3172
        %3433 = vmatpush.bf16.msra.mxu0 %v3170
        %3434 = vmatpush.bf16.msra.mxu0 %v3168
        %3435 = vmatpush.bf16.msra.mxu0 %v3166
        %3436 = vmatpush.bf16.msra.mxu0 %v3164
        %3437 = vmatpush.bf16.msra.mxu0 %v3162
        %3438 = vmatpush.bf16.msra.mxu0 %v3160
        %3439 = vmatmul.bf16.gmra.mxu0 %v2829
        %v3440 = vpop.f32.mrf.mxu0
        %v3441 = vadd.f32 %v3427, %v3440
        %v3442 = vpop.f32.mrf.mxu0
        %v3443 = vadd.f32 %v3429, %v3442
        %3444 = vdwg.mxu0
        %3445 = vmatpush.bf16.msra.mxu0 %v3190
        %3446 = vmatpush.bf16.msra.mxu0 %v3188
        %3447 = vmatpush.bf16.msra.mxu0 %v3186
        %3448 = vmatpush.bf16.msra.mxu0 %v3184
        %3449 = vmatpush.bf16.msra.mxu0 %v3182
        %3450 = vmatpush.bf16.msra.mxu0 %v3180
        %3451 = vmatpush.bf16.msra.mxu0 %v3178
        %3452 = vmatpush.bf16.msra.mxu0 %v3176
        %3453 = vmatmul.bf16.gmra.mxu0 %v2830
        %v3454 = vpop.f32.mrf.mxu0
        %v3455 = vadd.f32 %v3441, %v3454
        %v3456 = vpop.f32.mrf.mxu0
        %v3457 = vadd.f32 %v3443, %v3456
        %3458 = vdwg.mxu0
        %3459 = vmatpush.bf16.msra.mxu0 %v3206
        %3460 = vmatpush.bf16.msra.mxu0 %v3204
        %3461 = vmatpush.bf16.msra.mxu0 %v3202
        %3462 = vmatpush.bf16.msra.mxu0 %v3200
        %3463 = vmatpush.bf16.msra.mxu0 %v3198
        %3464 = vmatpush.bf16.msra.mxu0 %v3196
        %3465 = vmatpush.bf16.msra.mxu0 %v3194
        %3466 = vmatpush.bf16.msra.mxu0 %v3192
        %3467 = vmatmul.bf16.gmra.mxu0 %v2831
        %v3468 = vpop.f32.mrf.mxu0
        %v3469 = vadd.f32 %v3455, %v3468
        %v3470 = vpop.f32.mrf.mxu0
        %v3471 = vadd.f32 %v3457, %v3470
        %3472 = vdwg.mxu0
        %3473 = vmatpush.bf16.msra.mxu0 %v3222
        %3474 = vmatpush.bf16.msra.mxu0 %v3220
        %3475 = vmatpush.bf16.msra.mxu0 %v3218
        %3476 = vmatpush.bf16.msra.mxu0 %v3216
        %3477 = vmatpush.bf16.msra.mxu0 %v3214
        %3478 = vmatpush.bf16.msra.mxu0 %v3212
        %3479 = vmatpush.bf16.msra.mxu0 %v3210
        %3480 = vmatpush.bf16.msra.mxu0 %v3208
        %3481 = vmatmul.bf16.gmra.mxu0 %v2832
        %v3482 = vpop.f32.mrf.mxu0
        %v3483 = vadd.f32 %v3469, %v3482
        %v3484 = vpop.f32.mrf.mxu0
        %v3485 = vadd.f32 %v3471, %v3484
        %3486 = vdwg.mxu0
        %v3487 = vmax.f32 %v3399, 0.0
        %v3488 = vmax.f32 %v3483, 0.0
        %v3489 = vmax.f32 %v3401, 0.0
        %v3490 = vmax.f32 %v3485, 0.0
        %v3491 = vld [vmem:[%s516] sm:$0x3]
        %v3492 = vpack.c.bf16 %v2699, %v2699
        %v3493 = vpack.c.bf16 %v2700, %v2700
        %v3494 = vpack.c.bf16 %v3489, %v3487
        %v3495 = vpack.c.bf16 %v3490, %v3488
        %3496 = vmatpush.bf16.xpose.msra.mxu0 0
        %3497 = vmatpush.bf16.xpose.msra.mxu0 0
        %3498 = vmatpush.bf16.xpose.msra.mxu0 0
        %3499 = vmatpush.bf16.xpose.msra.mxu0 0
        %3500 = vmatpush.bf16.xpose.msra.mxu0 0
        %3501 = vmatpush.bf16.xpose.msra.mxu0 0
        %3502 = vmatpush.bf16.xpose.msra.mxu0 0
        %3503 = vmatpush.bf16.xpose.msra.mxu0 %v3494
        %3504 = vmatmul.bf16.gmra.mxu0 %v3492
        %v3505 = vpop.f32.mrf.mxu0
        %v3506 = vadd.f32 0.0, %v3505
        %v3507 = vpop.f32.mrf.mxu0
        %3508 = vdwg.mxu0
        %3509 = vmatpush.bf16.xpose.msra.mxu0 0
        %3510 = vmatpush.bf16.xpose.msra.mxu0 0
        %3511 = vmatpush.bf16.xpose.msra.mxu0 0
        %3512 = vmatpush.bf16.xpose.msra.mxu0 0
        %3513 = vmatpush.bf16.xpose.msra.mxu0 0
        %3514 = vmatpush.bf16.xpose.msra.mxu0 0
        %3515 = vmatpush.bf16.xpose.msra.mxu0 0
        %3516 = vmatpush.bf16.xpose.msra.mxu0 %v3495
        %3517 = vmatmul.bf16.gmra.mxu0 %v3493
        %v3518 = vpop.f32.mrf.mxu0
        %v3519 = vadd.f32 %v3506, %v3518
        %v3520 = vpop.f32.mrf.mxu0
        %3521 = vdwg.mxu0
        %v3522 = vadd.f32 %v3491, %v3519
        %vm3523 = vcmask 123904
        %3524 = vst.msk [vmem:[%s516] sm:$0x3] %vm3523, %v3522
        %p3525 = scmp.lt.s32.totalorder %s25, 1
        %s3526 = scalar_select %p3525, %s25, 1
        %s3527 = smul.addr %s3526, 2
        %s3528 = scalar_lea.vmem %s8, %s3527
        // Predicated region
        $region81: #{_asp_score.1} parent=51 // pred_check
          %p3529 = pneg %p250
        $region82: #{_asp_score.1} parent=51 // pred_check_branch
          %3531 = sbr.rel (%p3529) target = $region84
        $region83: #{_asp_score.1} parent=51 // pred_region
          _
        $region84: #{_asp_score.1} parent=51 // pred_fallthru
          _
      $region52: #{_asp_score.1} parent=5 // pred_fallthru
        _
      %p3532 = scmp.le.s32.totalorder 2, %s16
      // Predicated region
      $region85: #{_asp_score.1} parent=5 // pred_check
        %p3533 = pneg %p3532
      $region86: #{_asp_score.1} parent=5 // pred_check_branch
        %3535 = sbr.rel (%p3533) target = $region88
      $region87: #{_asp_score.1} parent=5 // pred_region
        %s3536 = ssub.s32 %s16, 2
        // Predicated region
        $region89: #{_asp_score.1} parent=87 // pred_check
          %p3537 = pneg %p256
        $region90: #{_asp_score.1} parent=87 // pred_check_branch
          %3539 = sbr.rel (%p3537) target = $region92
        $region91: #{_asp_score.1} parent=87 // pred_region
          %p3540 = scmp.lt.s32.totalorder %s27, 1
          %s3541 = scalar_select %p3540, %s27, 1
          %s3542 = smul.addr %s3541, 2
          %s3543 = scalar_lea.vmem %s8, %s3542
        $region92: #{_asp_score.1} parent=87 // pred_fallthru
          _
      $region88: #{_asp_score.1} parent=5 // pred_fallthru
        _
    $region6: #{_asp_score.1} parent=1 // loop_footer
      %s20 = sadd.s32 1, %s16
    $region7: #{_asp_score.1} parent=1 // loop_footer_branch
      %15 = sbr.rel target = $region3
    $region8: #{_asp_score.1} parent=1 // loop_exit
      _
    %3544 = vsyncpa [#allocation6], 1
    %s3545 = scalar_lea.sflag [#allocation6], 1
    %3546 = vsyncpa %s3545, 1
    %3547 = vsyncpa [#allocation8], 1

</llo_original>
